<compile_context>
chip_gen: v5e
topology: v5e:2x2
jax: 0.10.0
libtpu: 0.0.40
codegen_flags: <defaults>
</compile_context>

<pallas_src>
import math
import numpy as np
import jax
import jax.numpy as jnp
from jax import lax
from jax.experimental import pallas as pl
from jax.experimental.pallas import tpu as pltpu


# ------------------------------------------------------------------ helpers

def bilinear_kernel_1d(f: int):
    """1D factor of fill_up_weights' (separable) bilinear ConvTranspose kernel, len 2f."""
    c = (2 * f - 1 - f % 2) / (2.0 * f)
    return [float(1.0 - abs(i / f - c)) for i in range(2 * f)]


def bilinear_kernel_np(f: int) -> np.ndarray:
    """fill_up_weights: 2f x 2f bilinear kernel (used only by the pure-JAX reference)."""
    K = 2 * f
    c = (2 * f - 1 - f % 2) / (2.0 * f)
    w = np.zeros((K, K), np.float32)
    for i in range(K):
        for j in range(K):
            w[i, j] = (1 - abs(i / f - c)) * (1 - abs(j / f - c))
    return w


def _fold_bn(w, conv_b, gamma, beta, mean, var, eps):
    """Fold DCNv2 mask (0.5) * eval-BN scale into the conv weights and the conv bias /
    BN shift into a per-channel add: y = relu(conv(x, w_folded) + shift).
    Weights are returned as (9, Cin, Cout) bf16 so the kernel indexes one (Cin, Cout)
    tap at a time (9 accumulating MXU dots, no im2col slab)."""
    s = gamma / jnp.sqrt(var + eps)
    ci, co = w.shape[2], w.shape[3]
    w_folded = (w * (0.5 * s)).reshape(9, ci, co).astype(jnp.bfloat16)
    shift = (conv_b * s + beta - mean * s).reshape(1, co).astype(jnp.float32)
    return w_folded, shift


# Row-tile targets.  Tiles are min(target, H) with a pl.cdiv grid, so the tile size does
# not depend on H having a convenient divisor; a partial last tile is handled by the
# in-kernel row masks (out-of-image rows zeroed; Pallas drops out-of-bounds output rows).
# For production resolutions raise these so T*W >= 512 (MXU M amortization) while the
# double-buffered blocks still fit the per-generation VMEM budget; roughly halve the
# v5e/v6e choice on v7x (64 MiB VMEM per TensorCore).
PROJ_TILE_ROWS = 16
NODE_TILE_OUT_ROWS = 32


def _vmem_limit_bytes():
    """Scoped-VMEM budget: ~70% of physical per-TensorCore VMEM (v5e/v6e: 128 MiB ->
    ~90 MiB, v7x: 64 MiB -> ~45 MiB), capped at 100 MiB."""
    cap = 128 * 1024 * 1024
    try:
        cap = int(pltpu.get_tpu_info().vmem_capacity_bytes)
    except Exception:
        pass
    return int(min(cap * 0.70, 100 * 1024 * 1024))


# ------------------------------------------------------------------ in-kernel pieces

def _conv3x3_bn_relu(xwin, w_ref, shift_ref):
    """3x3 'same' conv over a row-haloed bf16 window `xwin` (T+2, W, C) whose
    out-of-image rows are already zeroed, computed as 9 accumulating MXU dots
    (bf16 operands, f32 accumulation) -- the (T*W, 9*Cin) im2col slab is never built.
    The two column-shifted views are built with a zero-column concatenate (one
    window-sized copy each; an equivalent alternative is pltpu.roll on the sublane axis
    + an edge-column mask, which moves the shift onto the XLU slot).  The row (dy) taps
    are free leading-axis slices of the flattened views.  Folded bias/BN shift and ReLU
    are applied at the end.  Returns (T, W, Co) float32."""
    tp2, W, C = xwin.shape
    T = tp2 - 2
    Co = shift_ref.shape[1]
    zcol = jnp.zeros((tp2, 1, C), xwin.dtype)
    views = [
        jnp.concatenate([zcol, xwin[:, :W - 1, :]], axis=1),   # dx = 0: column x-1
        xwin,                                                  # dx = 1: column x
        jnp.concatenate([xwin[:, 1:, :], zcol], axis=1),       # dx = 2: column x+1
    ]
    # Layout-preserving flatten (W is kept a multiple of the bf16 sublane packing).
    views = [v.reshape(tp2 * W, C) for v in views]
    acc = None
    for dy in range(3):
        for dx in range(3):
            lhs = views[dx][dy * W:(dy + T) * W]               # rows shifted by dy (free slice)
            part = jnp.dot(lhs, w_ref[3 * dy + dx], preferred_element_type=jnp.float32)
            acc = part if acc is None else acc + part
    y = jnp.maximum(acc + shift_ref[...], 0.0)
    return y.reshape(T, W, Co)


def _make_proj_kernel(T, W, H, f, wx):
    """proj_i fused with the column half of the bilinear upsample (phase-decomposed)."""
    def kernel(xt_ref, xb_ref, xbt_ref, w_ref, shift_ref, o_ref):
        t = pl.program_id(1)
        bf = jnp.bfloat16
        # (T+2, W, Ci) bf16 row window; rows outside [0, H) are zeroed in one pass
        # (conv zero padding + neutralizes clamped halo blocks / partial-tile rows).
        xwin = jnp.concatenate([xt_ref[0].astype(bf), xb_ref[0].astype(bf),
                                xbt_ref[0].astype(bf)], axis=0)
        ridx = t * T - 1 + lax.broadcasted_iota(jnp.int32, (T + 2, 1, 1), 0)
        xwin = jnp.where((ridx >= 0) & (ridx < H), xwin, 0.0)
        y = _conv3x3_bn_relu(xwin, w_ref, shift_ref).astype(bf)  # (T, W, Co) bf16
        # Column half of ConvTranspose2d(2f, stride=f, pad=f//2): each output column is a
        # 2-tap combination of adjacent proj columns (bf16 taps).  Emit the f phases
        # blocked along the channel axis; a free row-major reshape interleaves them
        # outside the kernel, keeping the store lane-dense (f*Co lanes).
        Co = y.shape[-1]
        zc = jnp.zeros((T, 1, Co), bf)
        right = jnp.concatenate([y, zc], axis=1)               # proj col g   (g = 0..W)
        left = jnp.concatenate([zc, y], axis=1)                # proj col g-1
        o_ref[0] = jnp.concatenate(
            [wx[r] * right + wx[r + f] * left for r in range(f)], axis=-1
        ).astype(o_ref.dtype)
    return kernel


def _make_node_kernel(T_in, f, c0, W_out, H_in, H_out, wy):
    """Row half of the upsample + residual add + node_i conv/BN/ReLU, fully fused."""
    T_out = T_in * f

    def kernel(ut_ref, ub_ref, ubt_ref, rt_ref, rb_ref, rbt_ref, w_ref, shift_ref, o_ref):
        t = pl.program_id(1)
        bf = jnp.bfloat16
        # Column-upsampled proj window with one coarse halo row each side; coarse rows
        # outside [0, H_in) contribute zero to the transposed conv (also covers clamped
        # halos and partial-tile rows).
        pc = jnp.concatenate([ut_ref[0].astype(bf), ub_ref[0].astype(bf),
                              ubt_ref[0].astype(bf)], axis=0)
        pc = pc[:, c0:c0 + W_out, :]                           # (T_in+2, W_out, C)
        cidx = t * T_in - 1 + lax.broadcasted_iota(jnp.int32, (T_in + 2, 1, 1), 0)
        pc = jnp.where((cidx >= 0) & (cidx < H_in), pc, 0.0)
        C = pc.shape[-1]
        # Row half of the upsample: 2 bf16 taps per output row; interleave is a pure
        # leading-dim reshape (no sublane relayout).
        cur = pc[1:T_in + 2]                                   # coarse row q
        prv = pc[0:T_in + 1]                                   # coarse row q-1
        up = jnp.concatenate(
            [(wy[r] * cur + wy[r + f] * prv)[:, None] for r in range(f)], axis=1
        ).reshape((T_in + 1) * f, W_out, C)
        up = up[f // 2 - 1: f // 2 - 1 + T_out + 2]            # fine rows [t*T_out-1, +T_out+1)
        # Residual add (node input = upsample + layers[i-1]) with its own 1-row halos,
        # then a single row mask = conv zero padding (also neutralizes clamped halos /
        # partial-tile rows).  All bf16; accumulation happens in f32 on the MXU.
        res = jnp.concatenate([rt_ref[0].astype(bf), rb_ref[0].astype(bf),
                               rbt_ref[0].astype(bf)], axis=0)
        ridx = t * T_out - 1 + lax.broadcasted_iota(jnp.int32, (T_out + 2, 1, 1), 0)
        v = jnp.where((ridx >= 0) & (ridx < H_out), up + res, 0.0)
        o_ref[0] = _conv3x3_bn_relu(v, w_ref, shift_ref).astype(o_ref.dtype)
    return kernel


# ------------------------------------------------------------------ wrappers

def proj_col_upsample(x, w, conv_b, gamma, beta, mean, var, f, *, eps=1e-5,
                      tile_rows=PROJ_TILE_ROWS):
    """proj_i (DCNv2 zero-offset/0.5-mask -> eval BN -> ReLU) fused with the column half
    of up_i.  Returns the column-phase interleaved tensor (N, H, (W+1)*f, Co) bfloat16
    via a free reshape of the kernel's (N, H, W+1, f*Co) output."""
    N, H, W, Ci = x.shape
    Co = w.shape[-1]
    assert f >= 2 and f % 2 == 0, "up factor must be even and >= 2"
    wf, shift = _fold_bn(w, conv_b, gamma, beta, mean, var, eps)
    T = min(tile_rows, H)
    nt = pl.cdiv(H, T)
    wx = bilinear_kernel_1d(f)
    # NOTE: the constant weight/shift operands could be single-buffered
    # (pipeline_mode=pl.Buffered(1)) to save a little VMEM headroom.
    out = pl.pallas_call(
        _make_proj_kernel(T, W, H, f, wx),
        out_shape=jax.ShapeDtypeStruct((N, H, W + 1, f * Co), jnp.bfloat16),
        grid=(N, nt),
        in_specs=[
            pl.BlockSpec((1, 1, W, Ci), lambda n, t: (n, jnp.maximum(t * T - 1, 0), 0, 0)),
            pl.BlockSpec((1, T, W, Ci), lambda n, t: (n, t, 0, 0)),
            pl.BlockSpec((1, 1, W, Ci), lambda n, t: (n, jnp.minimum(t * T + T, H - 1), 0, 0)),
            pl.BlockSpec((9, Ci, Co), lambda n, t: (0, 0, 0)),
            pl.BlockSpec((1, Co), lambda n, t: (0, 0)),
        ],
        out_specs=pl.BlockSpec((1, T, W + 1, f * Co), lambda n, t: (n, t, 0, 0)),
        compiler_params=pltpu.CompilerParams(
            dimension_semantics=("parallel", "parallel"),
            vmem_limit_bytes=_vmem_limit_bytes()),
    )(x, x, x, wf, shift)
    # Interleave the f column phases: pure row-major reshape, no data movement.
    return out.reshape(N, H, (W + 1) * f, Co)


def node_fused(ucols, prev, w, conv_b, gamma, beta, mean, var, f, *, eps=1e-5,
               tile_out_rows=NODE_TILE_OUT_ROWS):
    """node_i fused with the row half of up_i and the residual add.  Output is bf16 so
    the inter-stage residual / next-stage inputs stay half-width in HBM."""
    N, H_in, Wu, C = ucols.shape
    H_out, W_out = prev.shape[1], prev.shape[2]
    Co = w.shape[-1]
    assert f >= 2 and f % 2 == 0
    assert H_out == H_in * f and Wu == W_out + f
    assert prev.shape == (N, H_out, W_out, C), "residual must already have o channels"
    wf, shift = _fold_bn(w, conv_b, gamma, beta, mean, var, eps)
    T_in = min(max(tile_out_rows // f, 1), H_in)
    T_out = T_in * f
    nt = pl.cdiv(H_out, T_out)
    wy = bilinear_kernel_1d(f)
    c0 = f // 2
    return pl.pallas_call(
        _make_node_kernel(T_in, f, c0, W_out, H_in, H_out, wy),
        out_shape=jax.ShapeDtypeStruct((N, H_out, W_out, Co), jnp.bfloat16),
        grid=(N, nt),
        in_specs=[
            pl.BlockSpec((1, 1, Wu, C), lambda n, t: (n, jnp.maximum(t * T_in - 1, 0), 0, 0)),
            pl.BlockSpec((1, T_in, Wu, C), lambda n, t: (n, t, 0, 0)),
            pl.BlockSpec((1, 1, Wu, C),
                         lambda n, t: (n, jnp.minimum(t * T_in + T_in, H_in - 1), 0, 0)),
            pl.BlockSpec((1, 1, W_out, C), lambda n, t: (n, jnp.maximum(t * T_out - 1, 0), 0, 0)),
            pl.BlockSpec((1, T_out, W_out, C), lambda n, t: (n, t, 0, 0)),
            pl.BlockSpec((1, 1, W_out, C),
                         lambda n, t: (n, jnp.minimum(t * T_out + T_out, H_out - 1), 0, 0)),
            pl.BlockSpec((9, C, Co), lambda n, t: (0, 0, 0)),
            pl.BlockSpec((1, Co), lambda n, t: (0, 0)),
        ],
        out_specs=pl.BlockSpec((1, T_out, W_out, Co), lambda n, t: (n, t, 0, 0)),
        compiler_params=pltpu.CompilerParams(
            dimension_semantics=("parallel", "parallel"),
            vmem_limit_bytes=_vmem_limit_bytes()),
    )(ucols, ucols, ucols, prev, prev, prev, wf, shift)


# ------------------------------------------------------------------ IDAUp module

def init_ida_up_params(key, o, channels, up_f):
    """Deterministic synthetic init matching the __init__ shapes of IDAUp."""
    params = {}
    for i in range(1, len(channels)):
        c = channels[i]
        f = int(up_f[i])
        key, k1, k2, k3, k4, k5, k6 = jax.random.split(key, 7)
        params[i] = dict(
            f=f,
            proj_w=jax.random.normal(k1, (3, 3, c, o), jnp.float32) / math.sqrt(9 * c),
            proj_b=0.1 * jax.random.normal(k2, (o,), jnp.float32),
            proj_gamma=1.0 + 0.1 * jax.random.normal(k3, (o,), jnp.float32),
            proj_beta=0.1 * jax.random.normal(k4, (o,), jnp.float32),
            proj_mean=jnp.zeros((o,), jnp.float32),
            proj_var=jnp.ones((o,), jnp.float32),
            node_w=jax.random.normal(k5, (3, 3, o, o), jnp.float32) / math.sqrt(9 * o),
            node_b=0.1 * jax.random.normal(k6, (o,), jnp.float32),
            node_gamma=jnp.ones((o,), jnp.float32),
            node_beta=jnp.zeros((o,), jnp.float32),
            node_mean=jnp.zeros((o,), jnp.float32),
            node_var=jnp.ones((o,), jnp.float32),
        )
    return params


def ida_up_forward(params, layers, startp, endp):
    layers = list(layers)
    for i in range(startp + 1, endp):
        p = params[i - startp]
        f = p['f']
        # Inter-stage tensors live in bf16 (halves HBM traffic); MXU accumulation stays
        # f32 in-kernel.  Later stages' residuals (node outputs) are already bf16.
        x = layers[i].astype(jnp.bfloat16)
        prev = layers[i - 1].astype(jnp.bfloat16)
        ucols = proj_col_upsample(x, p['proj_w'], p['proj_b'], p['proj_gamma'],
                                  p['proj_beta'], p['proj_mean'], p['proj_var'], f)
        layers[i] = node_fused(ucols, prev, p['node_w'], p['node_b'],
                               p['node_gamma'], p['node_beta'], p['node_mean'],
                               p['node_var'], f)
    return layers


# ------------------------------------------------------------------ pure-JAX reference

def _ref_dcn_bn_relu(x, w, b, gamma, beta, mean, var, x_extra=None, eps=1e-5):
    if x_extra is not None:
        x = x + x_extra
    y = jax.lax.conv_general_dilated(x, w, (1, 1), ((1, 1), (1, 1)),
                                     dimension_numbers=('NHWC', 'HWIO', 'NHWC'))
    y = 0.5 * y + b
    y = (y - mean) / jnp.sqrt(var + eps) * gamma + beta
    return jnp.maximum(y, 0.0)


def _ref_upsample(x, f):
    C = x.shape[-1]
    K = 2 * f
    wk = jnp.asarray(bilinear_kernel_np(f))[::-1, ::-1]
    w = jnp.tile(wk[:, :, None, None], (1, 1, 1, C))
    p = K - 1 - f // 2
    return jax.lax.conv_general_dilated(x, w, (1, 1), ((p, p), (p, p)),
                                        lhs_dilation=(f, f),
                                        dimension_numbers=('NHWC', 'HWIO', 'NHWC'),
                                        feature_group_count=C)


def _ref_ida_up_forward(params, layers, startp, endp):
    layers = list(layers)
    for i in range(startp + 1, endp):
        j = i - startp
        p = params[j]
        proj = _ref_dcn_bn_relu(layers[i], p['proj_w'], p['proj_b'], p['proj_gamma'],
                                p['proj_beta'], p['proj_mean'], p['proj_var'])
        layers[i] = _ref_upsample(proj, p['f'])
        layers[i] = _ref_dcn_bn_relu(layers[i], p['node_w'], p['node_b'], p['node_gamma'],
                                     p['node_beta'], p['node_mean'], p['node_var'],
                                     x_extra=layers[i - 1])
    return layers


if __name__ == "__main__":
    key = jax.random.PRNGKey(0)
    # Real IDAUp head configuration from DLA-34 (o=64), small spatial sizes.  H0=64 keeps
    # every kernel-window width a multiple of the bf16 sublane packing (16) and gives
    # each pallas_call a multi-tile grid (boundary + interior halos exercised).
    o = 64
    channels = [64, 128, 256]      # channels[0] == o: layers[0] feeds the residual add
    up_f = [1, 2, 4]
    N, H0 = 2, 64

    key, kp, k0, k1, k2 = jax.random.split(key, 5)
    params = init_ida_up_params(kp, o, channels, up_f)
    layers = [
        jax.random.normal(k0, (N, H0, H0, channels[0]), jnp.float32),
        jax.random.normal(k1, (N, H0 // 2, H0 // 2, channels[1]), jnp.float32),
        jax.random.normal(k2, (N, H0 // 4, H0 // 4, channels[2]), jnp.float32),
    ]

    out_layers = ida_up_forward(params, layers, 0, len(layers))
    out_layers = jax.block_until_ready(out_layers)

    ref_layers = _ref_ida_up_forward(params, layers, 0, len(layers))
    for got, want in zip(out_layers[1:], ref_layers[1:]):
        # Tolerance accounts for the bf16 pipeline (bf16 MXU operands, bf16 bilinear
        # taps / residual add and bf16 inter-stage storage; accumulation stays f32).
        np.testing.assert_allclose(np.asarray(got).astype(np.float32), np.asarray(want),
                                   rtol=5e-2, atol=5e-2)

    print("KERNEL_OK")
</pallas_src>

<mosaic_0001>
module attributes {stable_mosaic.version = 11 : i64} {
  func.func @kernel(%arg0: i32, %arg1: i32, %arg2: memref<1x1x32x128xbf16, #tpu.memory_space<vmem>>, %arg3: memref<1x16x32x128xbf16, #tpu.memory_space<vmem>>, %arg4: memref<1x1x32x128xbf16, #tpu.memory_space<vmem>>, %arg5: memref<9x128x64xbf16, #tpu.memory_space<vmem>>, %arg6: memref<1x64xf32, #tpu.memory_space<vmem>>, %arg7: memref<1x16x33x128xbf16, #tpu.memory_space<vmem>>) attributes {dimension_semantics = [#tpu.dimension_semantics<parallel>, #tpu.dimension_semantics<parallel>], iteration_bounds = array<i64: 2, 2>, scalar_prefetch = 0 : i64, scratch_operands = 0 : i64, tpu.core_type = #tpu.core_type<tc>, window_params = [{transform_indices = @transform_0, window_bounds = array<i64: 1, 1, 32, 128>}, {transform_indices = @transform_1, window_bounds = array<i64: 1, 16, 32, 128>}, {transform_indices = @transform_2, window_bounds = array<i64: 1, 1, 32, 128>}, {pipeline_mode = #tpu.pipeline_mode<synchronous>, transform_indices = @transform_3, window_bounds = array<i64: 9, 128, 64>}, {pipeline_mode = #tpu.pipeline_mode<synchronous>, transform_indices = @transform_4, window_bounds = array<i64: 1, 64>}, {transform_indices = @transform_5, window_bounds = array<i64: 1, 16, 33, 128>}]} {
    %c0 = arith.constant 0 : index
    %c0_0 = arith.constant 0 : index
    %c0_1 = arith.constant 0 : index
    %c0_2 = arith.constant 0 : index
    %0 = vector.load %arg2[%c0, %c0_0, %c0_1, %c0_2] : memref<1x1x32x128xbf16, #tpu.memory_space<vmem>>, vector<1x1x32x128xbf16>
    %1 = vector.shape_cast %0 : vector<1x1x32x128xbf16> to vector<1x32x128xbf16>
    %c0_3 = arith.constant 0 : index
    %c0_4 = arith.constant 0 : index
    %c0_5 = arith.constant 0 : index
    %c0_6 = arith.constant 0 : index
    %2 = vector.load %arg3[%c0_3, %c0_4, %c0_5, %c0_6] : memref<1x16x32x128xbf16, #tpu.memory_space<vmem>>, vector<1x16x32x128xbf16>
    %3 = vector.shape_cast %2 : vector<1x16x32x128xbf16> to vector<16x32x128xbf16>
    %c0_7 = arith.constant 0 : index
    %c0_8 = arith.constant 0 : index
    %c0_9 = arith.constant 0 : index
    %c0_10 = arith.constant 0 : index
    %4 = vector.load %arg4[%c0_7, %c0_8, %c0_9, %c0_10] : memref<1x1x32x128xbf16, #tpu.memory_space<vmem>>, vector<1x1x32x128xbf16>
    %5 = vector.shape_cast %4 : vector<1x1x32x128xbf16> to vector<1x32x128xbf16>
    %6 = tpu.concatenate %1, %3, %5 in 0 : vector<1x32x128xbf16>, vector<16x32x128xbf16>, vector<1x32x128xbf16> -> vector<18x32x128xbf16>
    %c16_i32 = arith.constant 16 : i32
    %7 = arith.muli %arg1, %c16_i32 : i32
    %c1_i32 = arith.constant 1 : i32
    %8 = arith.subi %7, %c1_i32 : i32
    %9 = tpu.iota {dimensions = array<i32: 0>} : vector<18x1x1xi32>
    %10 = vector.broadcast %8 : i32 to vector<18x1x1xi32>
    %11 = arith.addi %10, %9 : vector<18x1x1xi32>
    %c0_i32 = arith.constant 0 : i32
    %12 = vector.broadcast %c0_i32 : i32 to vector<18x1x1xi32>
    %13 = arith.cmpi sge, %11, %12 : vector<18x1x1xi32>
    %c32_i32 = arith.constant 32 : i32
    %14 = vector.broadcast %c32_i32 : i32 to vector<18x1x1xi32>
    %15 = arith.cmpi slt, %11, %14 : vector<18x1x1xi32>
    %16 = arith.andi %13, %15 : vector<18x1x1xi1>
    %cst = arith.constant 0.000000e+00 : f32
    %17 = arith.truncf %cst : f32 to bf16
    %18 = vector.shape_cast %16 : vector<18x1x1xi1> to vector<18x1x1xi1>
    %19 = vector.broadcast %18 : vector<18x1x1xi1> to vector<18x32x128xi1>
    %20 = vector.broadcast %17 : bf16 to vector<18x32x128xbf16>
    %21 = arith.select %19, %6, %20 : vector<18x32x128xi1>, vector<18x32x128xbf16>
    %cst_11 = arith.constant 0.000000e+00 : bf16
    %22 = vector.broadcast %cst_11 : bf16 to vector<18x1x128xbf16>
    %23 = vector.extract_strided_slice %21 {offsets = [0, 0, 0], sizes = [18, 31, 128], strides = [1, 1, 1]} : vector<18x32x128xbf16> to vector<18x31x128xbf16>
    %24 = tpu.concatenate %22, %23 in 1 : vector<18x1x128xbf16>, vector<18x31x128xbf16> -> vector<18x32x128xbf16>
    %25 = vector.extract_strided_slice %21 {offsets = [0, 1, 0], sizes = [18, 31, 128], strides = [1, 1, 1]} : vector<18x32x128xbf16> to vector<18x31x128xbf16>
    %26 = tpu.concatenate %25, %22 in 1 : vector<18x31x128xbf16>, vector<18x1x128xbf16> -> vector<18x32x128xbf16>
    %27 = vector.shape_cast %24 : vector<18x32x128xbf16> to vector<576x128xbf16>
    %28 = vector.shape_cast %21 : vector<18x32x128xbf16> to vector<576x128xbf16>
    %29 = vector.shape_cast %26 : vector<18x32x128xbf16> to vector<576x128xbf16>
    %30 = vector.extract_strided_slice %27 {offsets = [0, 0], sizes = [512, 128], strides = [1, 1]} : vector<576x128xbf16> to vector<512x128xbf16>
    %c0_12 = arith.constant 0 : index
    %c0_13 = arith.constant 0 : index
    %c0_14 = arith.constant 0 : index
    %31 = vector.load %arg5[%c0_12, %c0_13, %c0_14] : memref<9x128x64xbf16, #tpu.memory_space<vmem>>, vector<1x128x64xbf16>
    %32 = vector.shape_cast %31 : vector<1x128x64xbf16> to vector<128x64xbf16>
    %cst_15 = arith.constant dense<0.000000e+00> : vector<512x64xf32>
    %33 = tpu.matmul %30, %32, %cst_15 {dimension_numbers = #tpu.dot_dimension_numbers<[1], [0], [0], [1], [0, 0, 1, 1], [], []>} : vector<512x128xbf16>, vector<128x64xbf16>, vector<512x64xf32> -> vector<512x64xf32>
    %34 = vector.extract_strided_slice %28 {offsets = [0, 0], sizes = [512, 128], strides = [1, 1]} : vector<576x128xbf16> to vector<512x128xbf16>
    %c1 = arith.constant 1 : index
    %c0_16 = arith.constant 0 : index
    %c0_17 = arith.constant 0 : index
    %35 = vector.load %arg5[%c1, %c0_16, %c0_17] : memref<9x128x64xbf16, #tpu.memory_space<vmem>>, vector<1x128x64xbf16>
    %36 = vector.shape_cast %35 : vector<1x128x64xbf16> to vector<128x64xbf16>
    %cst_18 = arith.constant dense<0.000000e+00> : vector<512x64xf32>
    %37 = tpu.matmul %34, %36, %cst_18 {dimension_numbers = #tpu.dot_dimension_numbers<[1], [0], [0], [1], [0, 0, 1, 1], [], []>} : vector<512x128xbf16>, vector<128x64xbf16>, vector<512x64xf32> -> vector<512x64xf32>
    %38 = arith.addf %33, %37 : vector<512x64xf32>
    %39 = vector.extract_strided_slice %29 {offsets = [0, 0], sizes = [512, 128], strides = [1, 1]} : vector<576x128xbf16> to vector<512x128xbf16>
    %c2 = arith.constant 2 : index
    %c0_19 = arith.constant 0 : index
    %c0_20 = arith.constant 0 : index
    %40 = vector.load %arg5[%c2, %c0_19, %c0_20] : memref<9x128x64xbf16, #tpu.memory_space<vmem>>, vector<1x128x64xbf16>
    %41 = vector.shape_cast %40 : vector<1x128x64xbf16> to vector<128x64xbf16>
    %cst_21 = arith.constant dense<0.000000e+00> : vector<512x64xf32>
    %42 = tpu.matmul %39, %41, %cst_21 {dimension_numbers = #tpu.dot_dimension_numbers<[1], [0], [0], [1], [0, 0, 1, 1], [], []>} : vector<512x128xbf16>, vector<128x64xbf16>, vector<512x64xf32> -> vector<512x64xf32>
    %43 = arith.addf %38, %42 : vector<512x64xf32>
    %44 = vector.extract_strided_slice %27 {offsets = [32, 0], sizes = [512, 128], strides = [1, 1]} : vector<576x128xbf16> to vector<512x128xbf16>
    %c3 = arith.constant 3 : index
    %c0_22 = arith.constant 0 : index
    %c0_23 = arith.constant 0 : index
    %45 = vector.load %arg5[%c3, %c0_22, %c0_23] : memref<9x128x64xbf16, #tpu.memory_space<vmem>>, vector<1x128x64xbf16>
    %46 = vector.shape_cast %45 : vector<1x128x64xbf16> to vector<128x64xbf16>
    %cst_24 = arith.constant dense<0.000000e+00> : vector<512x64xf32>
    %47 = tpu.matmul %44, %46, %cst_24 {dimension_numbers = #tpu.dot_dimension_numbers<[1], [0], [0], [1], [0, 0, 1, 1], [], []>} : vector<512x128xbf16>, vector<128x64xbf16>, vector<512x64xf32> -> vector<512x64xf32>
    %48 = arith.addf %43, %47 : vector<512x64xf32>
    %49 = vector.extract_strided_slice %28 {offsets = [32, 0], sizes = [512, 128], strides = [1, 1]} : vector<576x128xbf16> to vector<512x128xbf16>
    %c4 = arith.constant 4 : index
    %c0_25 = arith.constant 0 : index
    %c0_26 = arith.constant 0 : index
    %50 = vector.load %arg5[%c4, %c0_25, %c0_26] : memref<9x128x64xbf16, #tpu.memory_space<vmem>>, vector<1x128x64xbf16>
    %51 = vector.shape_cast %50 : vector<1x128x64xbf16> to vector<128x64xbf16>
    %cst_27 = arith.constant dense<0.000000e+00> : vector<512x64xf32>
    %52 = tpu.matmul %49, %51, %cst_27 {dimension_numbers = #tpu.dot_dimension_numbers<[1], [0], [0], [1], [0, 0, 1, 1], [], []>} : vector<512x128xbf16>, vector<128x64xbf16>, vector<512x64xf32> -> vector<512x64xf32>
    %53 = arith.addf %48, %52 : vector<512x64xf32>
    %54 = vector.extract_strided_slice %29 {offsets = [32, 0], sizes = [512, 128], strides = [1, 1]} : vector<576x128xbf16> to vector<512x128xbf16>
    %c5 = arith.constant 5 : index
    %c0_28 = arith.constant 0 : index
    %c0_29 = arith.constant 0 : index
    %55 = vector.load %arg5[%c5, %c0_28, %c0_29] : memref<9x128x64xbf16, #tpu.memory_space<vmem>>, vector<1x128x64xbf16>
    %56 = vector.shape_cast %55 : vector<1x128x64xbf16> to vector<128x64xbf16>
    %cst_30 = arith.constant dense<0.000000e+00> : vector<512x64xf32>
    %57 = tpu.matmul %54, %56, %cst_30 {dimension_numbers = #tpu.dot_dimension_numbers<[1], [0], [0], [1], [0, 0, 1, 1], [], []>} : vector<512x128xbf16>, vector<128x64xbf16>, vector<512x64xf32> -> vector<512x64xf32>
    %58 = arith.addf %53, %57 : vector<512x64xf32>
    %59 = vector.extract_strided_slice %27 {offsets = [64, 0], sizes = [512, 128], strides = [1, 1]} : vector<576x128xbf16> to vector<512x128xbf16>
    %c6 = arith.constant 6 : index
    %c0_31 = arith.constant 0 : index
    %c0_32 = arith.constant 0 : index
    %60 = vector.load %arg5[%c6, %c0_31, %c0_32] : memref<9x128x64xbf16, #tpu.memory_space<vmem>>, vector<1x128x64xbf16>
    %61 = vector.shape_cast %60 : vector<1x128x64xbf16> to vector<128x64xbf16>
    %cst_33 = arith.constant dense<0.000000e+00> : vector<512x64xf32>
    %62 = tpu.matmul %59, %61, %cst_33 {dimension_numbers = #tpu.dot_dimension_numbers<[1], [0], [0], [1], [0, 0, 1, 1], [], []>} : vector<512x128xbf16>, vector<128x64xbf16>, vector<512x64xf32> -> vector<512x64xf32>
    %63 = arith.addf %58, %62 : vector<512x64xf32>
    %64 = vector.extract_strided_slice %28 {offsets = [64, 0], sizes = [512, 128], strides = [1, 1]} : vector<576x128xbf16> to vector<512x128xbf16>
    %c7 = arith.constant 7 : index
    %c0_34 = arith.constant 0 : index
    %c0_35 = arith.constant 0 : index
    %65 = vector.load %arg5[%c7, %c0_34, %c0_35] : memref<9x128x64xbf16, #tpu.memory_space<vmem>>, vector<1x128x64xbf16>
    %66 = vector.shape_cast %65 : vector<1x128x64xbf16> to vector<128x64xbf16>
    %cst_36 = arith.constant dense<0.000000e+00> : vector<512x64xf32>
    %67 = tpu.matmul %64, %66, %cst_36 {dimension_numbers = #tpu.dot_dimension_numbers<[1], [0], [0], [1], [0, 0, 1, 1], [], []>} : vector<512x128xbf16>, vector<128x64xbf16>, vector<512x64xf32> -> vector<512x64xf32>
    %68 = arith.addf %63, %67 : vector<512x64xf32>
    %69 = vector.extract_strided_slice %29 {offsets = [64, 0], sizes = [512, 128], strides = [1, 1]} : vector<576x128xbf16> to vector<512x128xbf16>
    %c8 = arith.constant 8 : index
    %c0_37 = arith.constant 0 : index
    %c0_38 = arith.constant 0 : index
    %70 = vector.load %arg5[%c8, %c0_37, %c0_38] : memref<9x128x64xbf16, #tpu.memory_space<vmem>>, vector<1x128x64xbf16>
    %71 = vector.shape_cast %70 : vector<1x128x64xbf16> to vector<128x64xbf16>
    %cst_39 = arith.constant dense<0.000000e+00> : vector<512x64xf32>
    %72 = tpu.matmul %69, %71, %cst_39 {dimension_numbers = #tpu.dot_dimension_numbers<[1], [0], [0], [1], [0, 0, 1, 1], [], []>} : vector<512x128xbf16>, vector<128x64xbf16>, vector<512x64xf32> -> vector<512x64xf32>
    %73 = arith.addf %68, %72 : vector<512x64xf32>
    %c0_40 = arith.constant 0 : index
    %c0_41 = arith.constant 0 : index
    %74 = vector.load %arg6[%c0_40, %c0_41] : memref<1x64xf32, #tpu.memory_space<vmem>>, vector<1x64xf32>
    %75 = vector.broadcast %74 : vector<1x64xf32> to vector<512x64xf32>
    %76 = arith.addf %73, %75 : vector<512x64xf32>
    %cst_42 = arith.constant 0.000000e+00 : f32
    %77 = vector.broadcast %cst_42 : f32 to vector<512x64xf32>
    %78 = arith.maximumf %76, %77 : vector<512x64xf32>
    %79 = vector.shape_cast %78 : vector<512x64xf32> to vector<16x32x64xf32>
    %80 = arith.truncf %79 : vector<16x32x64xf32> to vector<16x32x64xbf16>
    %cst_43 = arith.constant 0.000000e+00 : bf16
    %81 = vector.broadcast %cst_43 : bf16 to vector<16x1x64xbf16>
    %82 = tpu.concatenate %80, %81 in 1 : vector<16x32x64xbf16>, vector<16x1x64xbf16> -> vector<16x33x64xbf16>
    %83 = tpu.concatenate %81, %80 in 1 : vector<16x1x64xbf16>, vector<16x32x64xbf16> -> vector<16x33x64xbf16>
    %cst_44 = arith.constant 2.500000e-01 : bf16
    %84 = vector.broadcast %cst_44 : bf16 to vector<16x33x64xbf16>
    %85 = arith.mulf %84, %82 : vector<16x33x64xbf16>
    %cst_45 = arith.constant 7.500000e-01 : bf16
    %86 = vector.broadcast %cst_45 : bf16 to vector<16x33x64xbf16>
    %87 = arith.mulf %86, %83 : vector<16x33x64xbf16>
    %88 = arith.addf %85, %87 : vector<16x33x64xbf16>
    %cst_46 = arith.constant 7.500000e-01 : bf16
    %89 = vector.broadcast %cst_46 : bf16 to vector<16x33x64xbf16>
    %90 = arith.mulf %89, %82 : vector<16x33x64xbf16>
    %cst_47 = arith.constant 2.500000e-01 : bf16
    %91 = vector.broadcast %cst_47 : bf16 to vector<16x33x64xbf16>
    %92 = arith.mulf %91, %83 : vector<16x33x64xbf16>
    %93 = arith.addf %90, %92 : vector<16x33x64xbf16>
    %94 = tpu.concatenate %88, %93 in 2 : vector<16x33x64xbf16>, vector<16x33x64xbf16> -> vector<16x33x128xbf16>
    %c0_48 = arith.constant 0 : index
    %c0_49 = arith.constant 0 : index
    %c0_50 = arith.constant 0 : index
    %c0_51 = arith.constant 0 : index
    %95 = vector.load %arg7[%c0_48, %c0_49, %c0_50, %c0_51] : memref<1x16x33x128xbf16, #tpu.memory_space<vmem>>, vector<1x16x33x128xbf16>
    %96 = vector.shape_cast %95 : vector<1x16x33x128xbf16> to vector<16x33x128xbf16>
    %97 = vector.shape_cast %94 : vector<16x33x128xbf16> to vector<1x16x33x128xbf16>
    tpu.vector_store %arg7[%c0_48, %c0_49, %c0_50, %c0_51], %97 {strides = array<i32>} : memref<1x16x33x128xbf16, #tpu.memory_space<vmem>>, vector<1x16x33x128xbf16>,
    return
  }
  func.func @transform_0(%arg0: i32, %arg1: i32) -> (i32, i32, i32, i32) {
    %c16_i32 = arith.constant 16 : i32
    %0 = arith.muli %arg1, %c16_i32 : i32
    %c1_i32 = arith.constant 1 : i32
    %1 = arith.subi %0, %c1_i32 : i32
    %c0_i32 = arith.constant 0 : i32
    %2 = arith.maxsi %1, %c0_i32 : i32
    %c0_i32_0 = arith.constant 0 : i32
    %c0_i32_1 = arith.constant 0 : i32
    %c0_i32_2 = arith.constant 0 : i32
    return %arg0, %2, %c0_i32_0, %c0_i32_1 : i32, i32, i32, i32
  }
  func.func @transform_1(%arg0: i32, %arg1: i32) -> (i32, i32, i32, i32) {
    %c0_i32 = arith.constant 0 : i32
    %c0_i32_0 = arith.constant 0 : i32
    %c0_i32_1 = arith.constant 0 : i32
    return %arg0, %arg1, %c0_i32, %c0_i32_0 : i32, i32, i32, i32
  }
  func.func @transform_2(%arg0: i32, %arg1: i32) -> (i32, i32, i32, i32) {
    %c16_i32 = arith.constant 16 : i32
    %0 = arith.muli %arg1, %c16_i32 : i32
    %c16_i32_0 = arith.constant 16 : i32
    %1 = arith.addi %0, %c16_i32_0 : i32
    %c31_i32 = arith.constant 31 : i32
    %2 = arith.minsi %1, %c31_i32 : i32
    %c0_i32 = arith.constant 0 : i32
    %c0_i32_1 = arith.constant 0 : i32
    %c0_i32_2 = arith.constant 0 : i32
    return %arg0, %2, %c0_i32, %c0_i32_1 : i32, i32, i32, i32
  }
  func.func @transform_3(%arg0: i32, %arg1: i32) -> (i32, i32, i32) {
    %c0_i32 = arith.constant 0 : i32
    %c0_i32_0 = arith.constant 0 : i32
    %c0_i32_1 = arith.constant 0 : i32
    %c0_i32_2 = arith.constant 0 : i32
    return %c0_i32, %c0_i32_0, %c0_i32_1 : i32, i32, i32
  }
  func.func @transform_4(%arg0: i32, %arg1: i32) -> (i32, i32) {
    %c0_i32 = arith.constant 0 : i32
    %c0_i32_0 = arith.constant 0 : i32
    %c0_i32_1 = arith.constant 0 : i32
    return %c0_i32, %c0_i32_0 : i32, i32
  }
  func.func @transform_5(%arg0: i32, %arg1: i32) -> (i32, i32, i32, i32) {
    %c0_i32 = arith.constant 0 : i32
    %c0_i32_0 = arith.constant 0 : i32
    %c0_i32_1 = arith.constant 0 : i32
    return %arg0, %arg1, %c0_i32, %c0_i32_0 : i32, i32, i32, i32
  }
}

</mosaic_0001>

<llo_original>
// kernel: tpu_custom_call.1
$region0: #{tpu_custom_call.1}
  #allocation0 [shape = 'u32[]', space=smem, size = 0x4, offset = 0x4, fixed_abs, tag = 'smem constant byte address 0x4 - core index']
  #allocation1 [shape = 'u32[72,128]{1,0:T(1,128)}', space=vmem, size = 0x9000, scoped, tag = 'internal scratch']
  %s0 = inlined_call_operand.hbm [shape: bf16[2,32,32,128], index: 0, kind: input, shape index: {}]
  %s1 = inlined_call_operand.hbm [shape: bf16[2,32,32,128], index: 1, kind: input, shape index: {}]
  %s2 = inlined_call_operand.hbm [shape: bf16[2,32,32,128], index: 2, kind: input, shape index: {}]
  %s3 = inlined_call_operand.vmem [shape: bf16[9,128,64], index: 3, kind: input, shape index: {}]
  %s4 = inlined_call_operand.vmem [shape: f32[1,64], index: 4, kind: input, shape index: {}]
  %s5 = inlined_call_operand.vmem [shape: bf16[2,32,33,128], index: 5, kind: output, shape index: {}]
  %s6 = sld [smem:[#allocation0]]
  $region65: #{tpu_custom_call.1} parent=0
    _
  %s8 = ssub.s32 1, %s6
  %s9 = scalar_select 0, %s8, %s6
  $region1: #{tpu_custom_call.1} parent=0
    #allocation2 [shape = 'u8[16384]{0}', space=vmem, size = 0x4000, scoped, tag = 'input window, operand 0']
    #allocation3 [shape = 's32[2]{0}', space=sflag, size = 0x8, scoped, tag = 'scoped memory for tpu_custom_call.1']
    #allocation4 [shape = 'u8[262144]{0}', space=vmem, size = 0x40000, scoped, tag = 'input window, operand 1']
    #allocation5 [shape = 's32[2]{0}', space=sflag, size = 0x8, scoped, tag = 'scoped memory for tpu_custom_call.1']
    #allocation6 [shape = 'u8[16384]{0}', space=vmem, size = 0x4000, scoped, tag = 'input window, operand 2']
    %10 = vsyncpa [#allocation3], 0
    %s11 = scalar_lea.sflag [#allocation3], 1
    %12 = vsyncpa %s11, 0
    %13 = vsyncpa [#allocation5], 0
    %s14 = scalar_lea.sflag [#allocation5], 1
    %15 = vsyncpa %s14, 0
    loop: start=0, step=1, limit=6
    $region2: #{tpu_custom_call.1} parent=1 // loop_pre_header
      _
    $region3: #{tpu_custom_call.1} parent=1 // loop_header
      %s17 = sphi 0, %s21
      %p18 = scmp.ge.s32.totalorder %s17, 6
      %s24 = sphi 0, %s36
      %s25 = sphi 0, %s32
      %s26 = sphi 0, %s24
      %s27 = sphi 0, %s25
      %s28 = sphi 0, %s26
      %s29 = sphi 0, %s27
      %s49 = sphi 0, %s51
      %s52 = sphi 0, %s49
      %s53 = sphi 0, %s52
      %s69 = sphi 0, %s53
      %s77 = sphi 0, %s79
      %s80 = sphi 0, %s77
      %s81 = sphi 0, %s80
      %s97 = sphi 0, %s81
      %s113 = sphi 0, %s115
      %s116 = sphi 0, %s113
      %s117 = sphi 0, %s116
      %s133 = sphi 0, %s117
      %s137 = sphi 0, %s137
      %s139 = sphi 0, %s137
      %s140 = sphi 0, %s139
      %s154 = sphi 0, %s140
      %s158 = sphi 0, %s158
      %s160 = sphi 0, %s158
      %s161 = sphi 0, %s160
      %s175 = sphi 0, %s161
      %s183 = sphi 0, %s185
      %s186 = sphi 0, %s183
      %s187 = sphi 0, %s186
      %s203 = sphi 0, %s187
    $region4: #{tpu_custom_call.1} parent=1 // loop_header_branch
      %20 = sbr.rel (%p18) target = $region8
    $region5: #{tpu_custom_call.1} parent=1 // loop_body
      %s22 = ssub.s32 %s17, 1
      %s23 = ssub.s32 %s17, 2
      %s30 = sadd.s32 1, %s25
      %p31 = scmp.ge.s32.totalorder %s30, 2
      %s32 = scalar_select %p31, 0, %s30
      %s33 = sadd.s32 1, %s24
      %s34 = scalar_select %p31, %s33, %s24
      %p35 = scmp.ge.s32.totalorder %s34, 2
      %s36 = scalar_select %p35, 0, %s34
      %s37 = smul.u32 %s25, 16
      %s38 = ssub.s32 %s37, 1
      %p39 = scmp.gt.s32.totalorder %s38, 0
      %s40 = scalar_select %p39, %s38, 0
      %s41 = smul.u32 %s32, 16
      %s42 = ssub.s32 %s41, 1
      %p43 = scmp.gt.s32.totalorder %s42, 0
      %s44 = scalar_select %p43, %s42, 0
      %s45 = ssub.s32 %s24, %s36
      %s46 = ssub.s32 %s40, %s44
      %s47 = sor.u32 %s45, %s46
      %p48 = scmp.eq.s32.totalorder %s47, 0
      %s50 = sadd.s32 %s49, 1
      %s51 = scalar_select %p48, %s49, %s50
      %p54 = pneg %p48
      %p55 = scmp.eq.s32.totalorder %s17, 3
      %p56 = por %p54, %p55
      %p57 = scmp.ne.s32.totalorder %s49, %s52
      %p58 = scmp.eq.s32.totalorder %s17, 0
      %p59 = por %p57, %p58
      %p60 = scmp.ne.s32.totalorder %s49, %s52
      %p61 = scmp.eq.s32.totalorder %s22, 3
      %p62 = por %p60, %p61
      %p63 = scmp.ne.s32.totalorder %s52, %s53
      %p64 = scmp.eq.s32.totalorder %s22, 0
      %p65 = por %p63, %p64
      %p66 = scmp.ne.s32.totalorder %s52, %s53
      %p67 = scmp.eq.s32.totalorder %s23, 3
      %p68 = por %p66, %p67
      %p70 = scmp.ne.s32.totalorder %s53, %s69
      %p71 = scmp.eq.s32.totalorder %s23, 0
      %p72 = por %p70, %p71
      %s73 = ssub.s32 %s24, %s36
      %s74 = ssub.s32 %s25, %s32
      %s75 = sor.u32 %s73, %s74
      %p76 = scmp.eq.s32.totalorder %s75, 0
      %s78 = sadd.s32 %s77, 1
      %s79 = scalar_select %p76, %s77, %s78
      %p82 = pneg %p76
      %p83 = scmp.eq.s32.totalorder %s17, 3
      %p84 = por %p82, %p83
      %p85 = scmp.ne.s32.totalorder %s77, %s80
      %p86 = scmp.eq.s32.totalorder %s17, 0
      %p87 = por %p85, %p86
      %p88 = scmp.ne.s32.totalorder %s77, %s80
      %p89 = scmp.eq.s32.totalorder %s22, 3
      %p90 = por %p88, %p89
      %p91 = scmp.ne.s32.totalorder %s80, %s81
      %p92 = scmp.eq.s32.totalorder %s22, 0
      %p93 = por %p91, %p92
      %p94 = scmp.ne.s32.totalorder %s80, %s81
      %p95 = scmp.eq.s32.totalorder %s23, 3
      %p96 = por %p94, %p95
      %p98 = scmp.ne.s32.totalorder %s81, %s97
      %p99 = scmp.eq.s32.totalorder %s23, 0
      %p100 = por %p98, %p99
      %s101 = smul.u32 %s25, 16
      %s102 = sadd.s32 %s101, 16
      %p103 = scmp.lt.s32.totalorder %s102, 31
      %s104 = scalar_select %p103, %s102, 31
      %s105 = smul.u32 %s32, 16
      %s106 = sadd.s32 %s105, 16
      %p107 = scmp.lt.s32.totalorder %s106, 31
      %s108 = scalar_select %p107, %s106, 31
      %s109 = ssub.s32 %s24, %s36
      %s110 = ssub.s32 %s104, %s108
      %s111 = sor.u32 %s109, %s110
      %p112 = scmp.eq.s32.totalorder %s111, 0
      %s114 = sadd.s32 %s113, 1
      %s115 = scalar_select %p112, %s113, %s114
      %p118 = pneg %p112
      %p119 = scmp.eq.s32.totalorder %s17, 3
      %p120 = por %p118, %p119
      %p121 = scmp.ne.s32.totalorder %s113, %s116
      %p122 = scmp.eq.s32.totalorder %s17, 0
      %p123 = por %p121, %p122
      %p124 = scmp.ne.s32.totalorder %s113, %s116
      %p125 = scmp.eq.s32.totalorder %s22, 3
      %p126 = por %p124, %p125
      %p127 = scmp.ne.s32.totalorder %s116, %s117
      %p128 = scmp.eq.s32.totalorder %s22, 0
      %p129 = por %p127, %p128
      %p130 = scmp.ne.s32.totalorder %s116, %s117
      %p131 = scmp.eq.s32.totalorder %s23, 3
      %p132 = por %p130, %p131
      %p134 = scmp.ne.s32.totalorder %s117, %s133
      %p135 = scmp.eq.s32.totalorder %s23, 0
      %p136 = por %p134, %p135
      %s138 = sadd.s32 %s137, 1
      %p141 = scmp.eq.s32.totalorder %s17, 3
      %p142 = scmp.ne.s32.totalorder %s137, %s139
      %p143 = scmp.eq.s32.totalorder %s17, 0
      %p144 = por %p142, %p143
      %p145 = scmp.ne.s32.totalorder %s137, %s139
      %p146 = scmp.eq.s32.totalorder %s22, 3
      %p147 = por %p145, %p146
      %p148 = scmp.ne.s32.totalorder %s139, %s140
      %p149 = scmp.eq.s32.totalorder %s22, 0
      %p150 = por %p148, %p149
      %p151 = scmp.ne.s32.totalorder %s139, %s140
      %p152 = scmp.eq.s32.totalorder %s23, 3
      %p153 = por %p151, %p152
      %p155 = scmp.ne.s32.totalorder %s140, %s154
      %p156 = scmp.eq.s32.totalorder %s23, 0
      %p157 = por %p155, %p156
      %s159 = sadd.s32 %s158, 1
      %p162 = scmp.eq.s32.totalorder %s17, 3
      %p163 = scmp.ne.s32.totalorder %s158, %s160
      %p164 = scmp.eq.s32.totalorder %s17, 0
      %p165 = por %p163, %p164
      %p166 = scmp.ne.s32.totalorder %s158, %s160
      %p167 = scmp.eq.s32.totalorder %s22, 3
      %p168 = por %p166, %p167
      %p169 = scmp.ne.s32.totalorder %s160, %s161
      %p170 = scmp.eq.s32.totalorder %s22, 0
      %p171 = por %p169, %p170
      %p172 = scmp.ne.s32.totalorder %s160, %s161
      %p173 = scmp.eq.s32.totalorder %s23, 3
      %p174 = por %p172, %p173
      %p176 = scmp.ne.s32.totalorder %s161, %s175
      %p177 = scmp.eq.s32.totalorder %s23, 0
      %p178 = por %p176, %p177
      %s179 = ssub.s32 %s24, %s36
      %s180 = ssub.s32 %s25, %s32
      %s181 = sor.u32 %s179, %s180
      %p182 = scmp.eq.s32.totalorder %s181, 0
      %s184 = sadd.s32 %s183, 1
      %s185 = scalar_select %p182, %s183, %s184
      %p188 = pneg %p182
      %p189 = scmp.eq.s32.totalorder %s17, 3
      %p190 = por %p188, %p189
      %p191 = scmp.ne.s32.totalorder %s183, %s186
      %p192 = scmp.eq.s32.totalorder %s17, 0
      %p193 = por %p191, %p192
      %p194 = scmp.ne.s32.totalorder %s183, %s186
      %p195 = scmp.eq.s32.totalorder %s22, 3
      %p196 = por %p194, %p195
      %p197 = scmp.ne.s32.totalorder %s186, %s187
      %p198 = scmp.eq.s32.totalorder %s22, 0
      %p199 = por %p197, %p198
      %p200 = scmp.ne.s32.totalorder %s186, %s187
      %p201 = scmp.eq.s32.totalorder %s23, 3
      %p202 = por %p200, %p201
      %p204 = scmp.ne.s32.totalorder %s187, %s203
      %p205 = scmp.eq.s32.totalorder %s23, 0
      %p206 = por %p204, %p205
      %p207 = scmp.le.s32.totalorder 1, %s17
      %p208 = scmp.lt.s32.totalorder %s17, 5
      %p209 = pnand %p207, %p208
      %p210 = pneg %p209
      // Predicated region
      $region9: #{tpu_custom_call.1} parent=5 // pred_check
        _
      $region10: #{tpu_custom_call.1} parent=5 // pred_check_branch
        %212 = sbr.rel (%p209) target = $region12
      $region11: #{tpu_custom_call.1} parent=5 // pred_region
        %s213 = ssub.s32 %s17, 1
        // Predicated region
        $region13: #{tpu_custom_call.1} parent=11 // pred_check
          %p214 = pneg %p150
        $region14: #{tpu_custom_call.1} parent=11 // pred_check_branch
          %216 = sbr.rel (%p214) target = $region16
        $region15: #{tpu_custom_call.1} parent=11 // pred_region
          _
        $region16: #{tpu_custom_call.1} parent=11 // pred_fallthru
          _
        // Predicated region
        $region17: #{tpu_custom_call.1} parent=11 // pred_check
          %p217 = pneg %p171
        $region18: #{tpu_custom_call.1} parent=11 // pred_check_branch
          %219 = sbr.rel (%p217) target = $region20
        $region19: #{tpu_custom_call.1} parent=11 // pred_region
          _
        $region20: #{tpu_custom_call.1} parent=11 // pred_fallthru
          _
      $region12: #{tpu_custom_call.1} parent=5 // pred_fallthru
        _
      %p220 = scmp.lt.s32.totalorder %s17, 4
      // Predicated region
      $region21: #{tpu_custom_call.1} parent=5 // pred_check
        %p221 = pneg %p220
      $region22: #{tpu_custom_call.1} parent=5 // pred_check_branch
        %223 = sbr.rel (%p221) target = $region24
      $region23: #{tpu_custom_call.1} parent=5 // pred_region
        // Predicated region
        $region25: #{tpu_custom_call.1} parent=23 // pred_check
          %p224 = pneg %p59
        $region26: #{tpu_custom_call.1} parent=23 // pred_check_branch
          %226 = sbr.rel (%p224) target = $region28
        $region27: #{tpu_custom_call.1} parent=23 // pred_region
          %s227 = sand.u32 %s49, 1
          %s228 = scalar_lea.sflag [#allocation3], %s227
          %s229 = sand.u32 %s49, 1
          %s230 = smul.addr %s229, 16
          %s231 = scalar_lea.vmem [#allocation2], %s230
          %s232 = smul.u32 %s25, 16
          %s233 = ssub.s32 %s232, 1
          %p234 = scmp.gt.s32.totalorder %s233, 0
          %s235 = scalar_select %p234, %s233, 0
          %237 = vsyncadd %s228, 0
          %s238 = smul.addr %s235, 4
          %s239 = smul.addr %s24, 128
          %s240 = sadd.s32 %s238, %s239
          %s241 = smul.addr %s240, 4
          %s242 = scalar_lea.hbm %s0, %s241
          %s243 = sshll.u32 %s242, 4
          %s244 = int_to_ptr.hbm [resolvable:$true] %s243
          %s245 = sshll.u32 %s231, 4
          %s246 = int_to_ptr.vmem [resolvable:$true] %s245
          %251 = dma.hbm_to_vmem [thread:$0]  %s244, 256, %s246, %s228, 64, 64, 4
        $region28: #{tpu_custom_call.1} parent=23 // pred_fallthru
          _
        // Predicated region
        $region29: #{tpu_custom_call.1} parent=23 // pred_check
          %p252 = pneg %p87
        $region30: #{tpu_custom_call.1} parent=23 // pred_check_branch
          %254 = sbr.rel (%p252) target = $region32
        $region31: #{tpu_custom_call.1} parent=23 // pred_region
          %s255 = sand.u32 %s17, 1
          %s256 = scalar_lea.sflag [#allocation5], %s255
          %s257 = sand.u32 %s77, 1
          %s258 = smul.addr %s257, 256
          %s259 = scalar_lea.vmem [#allocation4], %s258
          %s260 = smul.u32 16, %s25
          %262 = vsyncadd %s256, 0
          %s263 = smul.addr %s260, 4
          %s264 = smul.addr %s24, 128
          %s265 = sadd.s32 %s263, %s264
          %s266 = smul.addr %s265, 4
          %s267 = scalar_lea.hbm %s1, %s266
          %s268 = sshll.u32 %s267, 4
          %s269 = int_to_ptr.hbm [resolvable:$true] %s268
          %s270 = sshll.u32 %s259, 4
          %s271 = int_to_ptr.vmem [resolvable:$true] %s270
          %276 = dma.hbm_to_vmem [thread:$0]  %s269, 4096, %s271, %s256, 64, 64, 4
        $region32: #{tpu_custom_call.1} parent=23 // pred_fallthru
          _
        // Predicated region
        $region33: #{tpu_custom_call.1} parent=23 // pred_check
          %p277 = pneg %p123
        $region34: #{tpu_custom_call.1} parent=23 // pred_check_branch
          %279 = sbr.rel (%p277) target = $region36
        $region35: #{tpu_custom_call.1} parent=23 // pred_region
          %s280 = sand.u32 %s17, 1
          %s281 = scalar_lea.sflag [#allocation5], %s280
          %s282 = sand.u32 %s113, 1
          %s283 = smul.addr %s282, 16
          %s284 = scalar_lea.vmem [#allocation6], %s283
          %s285 = smul.u32 %s25, 16
          %s286 = sadd.s32 %s285, 16
          %p287 = scmp.lt.s32.totalorder %s286, 31
          %s288 = scalar_select %p287, %s286, 31
          %290 = vsyncadd %s281, 0
          %s291 = smul.addr %s288, 4
          %s292 = smul.addr %s24, 128
          %s293 = sadd.s32 %s291, %s292
          %s294 = smul.addr %s293, 4
          %s295 = scalar_lea.hbm %s2, %s294
          %s296 = sshll.u32 %s295, 4
          %s297 = int_to_ptr.hbm [resolvable:$true] %s296
          %s298 = sshll.u32 %s284, 4
          %s299 = int_to_ptr.vmem [resolvable:$true] %s298
          %304 = dma.hbm_to_vmem [thread:$0]  %s297, 256, %s299, %s281, 64, 64, 4
        $region36: #{tpu_custom_call.1} parent=23 // pred_fallthru
          _
      $region24: #{tpu_custom_call.1} parent=5 // pred_fallthru
        _
      %p305 = scmp.le.s32.totalorder 1, %s17
      %p306 = scmp.lt.s32.totalorder %s17, 5
      %p307 = pnand %p305, %p306
      %p308 = pneg %p307
      // Predicated region
      $region37: #{tpu_custom_call.1} parent=5 // pred_check
        _
      $region38: #{tpu_custom_call.1} parent=5 // pred_check_branch
        %310 = sbr.rel (%p307) target = $region40
      $region39: #{tpu_custom_call.1} parent=5 // pred_region
        %s311 = ssub.s32 %s17, 1
        %s312 = sand.u32 %s52, 1
        %s313 = scalar_lea.sflag [#allocation3], %s312
        %s314 = sand.u32 %s52, 1
        %s315 = smul.addr %s314, 16
        %s316 = scalar_lea.vmem [#allocation2], %s315
        // Predicated region
        $region41: #{tpu_custom_call.1} parent=39 // pred_check
          %p317 = pneg %p65
        $region42: #{tpu_custom_call.1} parent=39 // pred_check_branch
          %319 = sbr.rel (%p317) target = $region44
        $region43: #{tpu_custom_call.1} parent=39 // pred_region
          %321 = dma.done %s313, 256
        $region44: #{tpu_custom_call.1} parent=39 // pred_fallthru
          _
        %s322 = sand.u32 %s22, 1
        %s323 = scalar_lea.sflag [#allocation5], %s322
        %s324 = sand.u32 %s80, 1
        %s325 = smul.addr %s324, 256
        %s326 = scalar_lea.vmem [#allocation4], %s325
        // Predicated region
        $region45: #{tpu_custom_call.1} parent=39 // pred_check
          %p327 = pneg %p93
        $region46: #{tpu_custom_call.1} parent=39 // pred_check_branch
          %329 = sbr.rel (%p327) target = $region48
        $region47: #{tpu_custom_call.1} parent=39 // pred_region
          %331 = dma.done %s323, 4096
        $region48: #{tpu_custom_call.1} parent=39 // pred_fallthru
          _
        %s332 = sand.u32 %s22, 1
        %s333 = scalar_lea.sflag [#allocation5], %s332
        %s334 = sand.u32 %s116, 1
        %s335 = smul.addr %s334, 16
        %s336 = scalar_lea.vmem [#allocation6], %s335
        // Predicated region
        $region49: #{tpu_custom_call.1} parent=39 // pred_check
          %p337 = pneg %p129
        $region50: #{tpu_custom_call.1} parent=39 // pred_check_branch
          %339 = sbr.rel (%p337) target = $region52
        $region51: #{tpu_custom_call.1} parent=39 // pred_region
          %341 = dma.done %s333, 256
        $region52: #{tpu_custom_call.1} parent=39 // pred_fallthru
          _
        %s342 = sand.u32 %s52, 1
        %s343 = scalar_lea.sflag [#allocation3], %s342
        %s344 = sand.u32 %s52, 1
        %s345 = smul.addr %s344, 16
        %s346 = scalar_lea.vmem [#allocation2], %s345
        %p347 = pneg %p65
        %p348 = pneg %p62
        %s349 = sand.u32 %s22, 1
        %s350 = scalar_lea.sflag [#allocation5], %s349
        %s351 = sand.u32 %s80, 1
        %s352 = smul.addr %s351, 256
        %s353 = scalar_lea.vmem [#allocation4], %s352
        %p354 = pneg %p93
        %p355 = pneg %p90
        %s356 = sand.u32 %s22, 1
        %s357 = scalar_lea.sflag [#allocation5], %s356
        %s358 = sand.u32 %s116, 1
        %s359 = smul.addr %s358, 16
        %s360 = scalar_lea.vmem [#allocation6], %s359
        %p361 = pneg %p129
        %p362 = pneg %p126
        %p363 = pneg %p150
        %p364 = pneg %p147
        %p365 = pneg %p171
        %p366 = pneg %p168
        %p367 = pneg %p199
        %p368 = pneg %p196
        %s369 = smul.u32 16, %s27
        %p370 = scmp.lt.s32.totalorder %s26, 1
        %s371 = scalar_select %p370, %s26, 1
        %p372 = scmp.lt.s32.totalorder %s369, 31
        %s373 = scalar_select %p372, %s369, 31
        %s374 = smul.addr %s373, 5
        %s375 = smul.addr %s371, 160
        %s376 = sadd.s32 %s374, %s375
        %s377 = smul.addr %s376, 4
        %s378 = scalar_lea.vmem %s5, %s377
        %s379 = smul.u32 %s27, 16
        %s380 = ssub.s32 %s379, 1
        %p381 = scmp.gt.s32.totalorder %s380, 0
        %s382 = scalar_select %p381, %s380, 0
        %s383 = smul.u32 16, %s27
        %s384 = smul.u32 %s27, 16
        %s385 = sadd.s32 %s384, 16
        %p386 = scmp.lt.s32.totalorder %s385, 31
        %s387 = scalar_select %p386, %s385, 31
        %s388 = smul.u32 16, %s27
        %p389 = scmp.lt.s32.totalorder %s26, 1
        %s390 = scalar_select %p389, %s26, 1
        %p391 = scmp.lt.s32.totalorder %s388, 31
        %s392 = scalar_select %p391, %s388, 31
        %s393 = smul.addr %s392, 5
        %s394 = smul.addr %s390, 160
        %s395 = sadd.s32 %s393, %s394
        %s396 = smul.addr %s395, 4
        %s397 = scalar_lea.vmem %s5, %s396
        %s398 = smul.u32 16, %s27
        %v400 = vld [vmem:[%s316] sm:$0xf]
        %v401 = vld [vmem:[%s316 + $0x4] sm:$0xf]
        %v402 = vld [vmem:[%s316 + $0x8] sm:$0xf]
        %v403 = vld [vmem:[%s316 + $0xc] sm:$0xf]
        %v404 = vld [vmem:[%s326] sm:$0xf]
        %v405 = vld [vmem:[%s326 + $0x4] sm:$0xf]
        %v406 = vld [vmem:[%s326 + $0x8] sm:$0xf]
        %v407 = vld [vmem:[%s326 + $0xc] sm:$0xf]
        %v408 = vld [vmem:[%s326 + $0x10] sm:$0xf]
        %v409 = vld [vmem:[%s326 + $0x14] sm:$0xf]
        %v410 = vld [vmem:[%s326 + $0x18] sm:$0xf]
        %v411 = vld [vmem:[%s326 + $0x1c] sm:$0xf]
        %v412 = vld [vmem:[%s326 + $0x20] sm:$0xf]
        %v413 = vld [vmem:[%s326 + $0x24] sm:$0xf]
        %v414 = vld [vmem:[%s326 + $0x28] sm:$0xf]
        %v415 = vld [vmem:[%s326 + $0x2c] sm:$0xf]
        %v416 = vld [vmem:[%s326 + $0x30] sm:$0xf]
        %v417 = vld [vmem:[%s326 + $0x34] sm:$0xf]
        %v418 = vld [vmem:[%s326 + $0x38] sm:$0xf]
        %v419 = vld [vmem:[%s326 + $0x3c] sm:$0xf]
        %v420 = vld [vmem:[%s326 + $0x40] sm:$0xf]
        %v421 = vld [vmem:[%s326 + $0x44] sm:$0xf]
        %v422 = vld [vmem:[%s326 + $0x48] sm:$0xf]
        %v423 = vld [vmem:[%s326 + $0x4c] sm:$0xf]
        %v424 = vld [vmem:[%s326 + $0x50] sm:$0xf]
        %v425 = vld [vmem:[%s326 + $0x54] sm:$0xf]
        %v426 = vld [vmem:[%s326 + $0x58] sm:$0xf]
        %v427 = vld [vmem:[%s326 + $0x5c] sm:$0xf]
        %v428 = vld [vmem:[%s326 + $0x60] sm:$0xf]
        %v429 = vld [vmem:[%s326 + $0x64] sm:$0xf]
        %v430 = vld [vmem:[%s326 + $0x68] sm:$0xf]
        %v431 = vld [vmem:[%s326 + $0x6c] sm:$0xf]
        %v432 = vld [vmem:[%s326 + $0x70] sm:$0xf]
        %v433 = vld [vmem:[%s326 + $0x74] sm:$0xf]
        %v434 = vld [vmem:[%s326 + $0x78] sm:$0xf]
        %v435 = vld [vmem:[%s326 + $0x7c] sm:$0xf]
        %v436 = vld [vmem:[%s326 + $0x80] sm:$0xf]
        %v437 = vld [vmem:[%s326 + $0x84] sm:$0xf]
        %v438 = vld [vmem:[%s326 + $0x88] sm:$0xf]
        %v439 = vld [vmem:[%s326 + $0x8c] sm:$0xf]
        %v440 = vld [vmem:[%s326 + $0x90] sm:$0xf]
        %v441 = vld [vmem:[%s326 + $0x94] sm:$0xf]
        %v442 = vld [vmem:[%s326 + $0x98] sm:$0xf]
        %v443 = vld [vmem:[%s326 + $0x9c] sm:$0xf]
        %v444 = vld [vmem:[%s326 + $0xa0] sm:$0xf]
        %v445 = vld [vmem:[%s326 + $0xa4] sm:$0xf]
        %v446 = vld [vmem:[%s326 + $0xa8] sm:$0xf]
        %v447 = vld [vmem:[%s326 + $0xac] sm:$0xf]
        %v448 = vld [vmem:[%s326 + $0xb0] sm:$0xf]
        %v449 = vld [vmem:[%s326 + $0xb4] sm:$0xf]
        %v450 = vld [vmem:[%s326 + $0xb8] sm:$0xf]
        %v451 = vld [vmem:[%s326 + $0xbc] sm:$0xf]
        %v452 = vld [vmem:[%s326 + $0xc0] sm:$0xf]
        %v453 = vld [vmem:[%s326 + $0xc4] sm:$0xf]
        %v454 = vld [vmem:[%s326 + $0xc8] sm:$0xf]
        %v455 = vld [vmem:[%s326 + $0xcc] sm:$0xf]
        %v456 = vld [vmem:[%s326 + $0xd0] sm:$0xf]
        %v457 = vld [vmem:[%s326 + $0xd4] sm:$0xf]
        %v458 = vld [vmem:[%s326 + $0xd8] sm:$0xf]
        %v459 = vld [vmem:[%s326 + $0xdc] sm:$0xf]
        %v460 = vld [vmem:[%s326 + $0xe0] sm:$0xf]
        %v461 = vld [vmem:[%s326 + $0xe4] sm:$0xf]
        %v462 = vld [vmem:[%s326 + $0xe8] sm:$0xf]
        %v463 = vld [vmem:[%s326 + $0xec] sm:$0xf]
        %v464 = vld [vmem:[%s326 + $0xf0] sm:$0xf]
        %v465 = vld [vmem:[%s326 + $0xf4] sm:$0xf]
        %v466 = vld [vmem:[%s326 + $0xf8] sm:$0xf]
        %v467 = vld [vmem:[%s326 + $0xfc] sm:$0xf]
        %v468 = vld [vmem:[%s336] sm:$0xf]
        %v469 = vld [vmem:[%s336 + $0x4] sm:$0xf]
        %v470 = vld [vmem:[%s336 + $0x8] sm:$0xf]
        %v471 = vld [vmem:[%s336 + $0xc] sm:$0xf]
        %s472 = smul.u32 %s27, 16
        %s473 = ssub.s32 %s472, 1
        %v474 = vstv %s473
        %v475 = vadd.s32 %v474, 1
        %v476 = vadd.s32 %v474, 2
        %v477 = vadd.s32 %v474, 3
        %v478 = vadd.s32 %v474, 4
        %v479 = vadd.s32 %v474, 5
        %v480 = vadd.s32 %v474, 6
        %v481 = vadd.s32 %v474, 7
        %v482 = vadd.s32 %v474, 8
        %v483 = vadd.s32 %v474, 9
        %v484 = vadd.s32 %v474, 10
        %v485 = vadd.s32 %v474, 11
        %v486 = vadd.s32 %v474, 12
        %v487 = vadd.s32 %v474, 13
        %v488 = vadd.s32 %v474, 14
        %v489 = vadd.s32 %v474, 15
        %v490 = vadd.s32 %v474, 16
        %v491 = vadd.s32 %v474, 17
        %vm492 = vcmp.ge.s32.totalorder %v474, 0
        %vm493 = vcmp.ge.s32.totalorder %v475, 0
        %vm494 = vcmp.ge.s32.totalorder %v476, 0
        %vm495 = vcmp.ge.s32.totalorder %v477, 0
        %vm496 = vcmp.ge.s32.totalorder %v478, 0
        %vm497 = vcmp.ge.s32.totalorder %v479, 0
        %vm498 = vcmp.ge.s32.totalorder %v480, 0
        %vm499 = vcmp.ge.s32.totalorder %v481, 0
        %vm500 = vcmp.ge.s32.totalorder %v482, 0
        %vm501 = vcmp.ge.s32.totalorder %v483, 0
        %vm502 = vcmp.ge.s32.totalorder %v484, 0
        %vm503 = vcmp.ge.s32.totalorder %v485, 0
        %vm504 = vcmp.ge.s32.totalorder %v486, 0
        %vm505 = vcmp.ge.s32.totalorder %v487, 0
        %vm506 = vcmp.ge.s32.totalorder %v488, 0
        %vm507 = vcmp.ge.s32.totalorder %v489, 0
        %vm508 = vcmp.ge.s32.totalorder %v490, 0
        %vm509 = vcmp.ge.s32.totalorder %v491, 0
        %vm510 = vcmp.lt.s32.totalorder %v474, 32
        %vm511 = vcmp.lt.s32.totalorder %v475, 32
        %vm512 = vcmp.lt.s32.totalorder %v476, 32
        %vm513 = vcmp.lt.s32.totalorder %v477, 32
        %vm514 = vcmp.lt.s32.totalorder %v478, 32
        %vm515 = vcmp.lt.s32.totalorder %v479, 32
        %vm516 = vcmp.lt.s32.totalorder %v480, 32
        %vm517 = vcmp.lt.s32.totalorder %v481, 32
        %vm518 = vcmp.lt.s32.totalorder %v482, 32
        %vm519 = vcmp.lt.s32.totalorder %v483, 32
        %vm520 = vcmp.lt.s32.totalorder %v484, 32
        %vm521 = vcmp.lt.s32.totalorder %v485, 32
        %vm522 = vcmp.lt.s32.totalorder %v486, 32
        %vm523 = vcmp.lt.s32.totalorder %v487, 32
        %vm524 = vcmp.lt.s32.totalorder %v488, 32
        %vm525 = vcmp.lt.s32.totalorder %v489, 32
        %vm526 = vcmp.lt.s32.totalorder %v490, 32
        %vm527 = vcmp.lt.s32.totalorder %v491, 32
        %vm528 = vmand %vm492, %vm510
        %vm529 = vmand %vm493, %vm511
        %vm530 = vmand %vm494, %vm512
        %vm531 = vmand %vm495, %vm513
        %vm532 = vmand %vm496, %vm514
        %vm533 = vmand %vm497, %vm515
        %vm534 = vmand %vm498, %vm516
        %vm535 = vmand %vm499, %vm517
        %vm536 = vmand %vm500, %vm518
        %vm537 = vmand %vm501, %vm519
        %vm538 = vmand %vm502, %vm520
        %vm539 = vmand %vm503, %vm521
        %vm540 = vmand %vm504, %vm522
        %vm541 = vmand %vm505, %vm523
        %vm542 = vmand %vm506, %vm524
        %vm543 = vmand %vm507, %vm525
        %vm544 = vmand %vm508, %vm526
        %vm545 = vmand %vm509, %vm527
        %v546 = vsel %vm528, 1, 0
        %v547 = vsel %vm529, 1, 0
        %v548 = vsel %vm530, 1, 0
        %v549 = vsel %vm531, 1, 0
        %v550 = vsel %vm532, 1, 0
        %v551 = vsel %vm533, 1, 0
        %v552 = vsel %vm534, 1, 0
        %v553 = vsel %vm535, 1, 0
        %v554 = vsel %vm536, 1, 0
        %v555 = vsel %vm537, 1, 0
        %v556 = vsel %vm538, 1, 0
        %v557 = vsel %vm539, 1, 0
        %v558 = vsel %vm540, 1, 0
        %v559 = vsel %vm541, 1, 0
        %v560 = vsel %vm542, 1, 0
        %v561 = vsel %vm543, 1, 0
        %v562 = vsel %vm544, 1, 0
        %v563 = vsel %vm545, 1, 0
        %vm564 = vcmp.eq.s32.totalorder %v546, 1
        %vm565 = vcmp.eq.s32.totalorder %v547, 1
        %vm566 = vcmp.eq.s32.totalorder %v548, 1
        %vm567 = vcmp.eq.s32.totalorder %v549, 1
        %vm568 = vcmp.eq.s32.totalorder %v550, 1
        %vm569 = vcmp.eq.s32.totalorder %v551, 1
        %vm570 = vcmp.eq.s32.totalorder %v552, 1
        %vm571 = vcmp.eq.s32.totalorder %v553, 1
        %vm572 = vcmp.eq.s32.totalorder %v554, 1
        %vm573 = vcmp.eq.s32.totalorder %v555, 1
        %vm574 = vcmp.eq.s32.totalorder %v556, 1
        %vm575 = vcmp.eq.s32.totalorder %v557, 1
        %vm576 = vcmp.eq.s32.totalorder %v558, 1
        %vm577 = vcmp.eq.s32.totalorder %v559, 1
        %vm578 = vcmp.eq.s32.totalorder %v560, 1
        %vm579 = vcmp.eq.s32.totalorder %v561, 1
        %vm580 = vcmp.eq.s32.totalorder %v562, 1
        %vm581 = vcmp.eq.s32.totalorder %v563, 1
        %v582 = vsel %vm564, %v400, 0
        %v583 = vsel %vm564, %v401, 0
        %v584 = vsel %vm564, %v402, 0
        %v585 = vsel %vm564, %v403, 0
        %v586 = vsel %vm565, %v404, 0
        %v587 = vsel %vm565, %v405, 0
        %v588 = vsel %vm565, %v406, 0
        %v589 = vsel %vm565, %v407, 0
        %v590 = vsel %vm566, %v408, 0
        %v591 = vsel %vm566, %v409, 0
        %v592 = vsel %vm566, %v410, 0
        %v593 = vsel %vm566, %v411, 0
        %v594 = vsel %vm567, %v412, 0
        %v595 = vsel %vm567, %v413, 0
        %v596 = vsel %vm567, %v414, 0
        %v597 = vsel %vm567, %v415, 0
        %v598 = vsel %vm568, %v416, 0
        %v599 = vsel %vm568, %v417, 0
        %v600 = vsel %vm568, %v418, 0
        %v601 = vsel %vm568, %v419, 0
        %v602 = vsel %vm569, %v420, 0
        %v603 = vsel %vm569, %v421, 0
        %v604 = vsel %vm569, %v422, 0
        %v605 = vsel %vm569, %v423, 0
        %v606 = vsel %vm570, %v424, 0
        %v607 = vsel %vm570, %v425, 0
        %v608 = vsel %vm570, %v426, 0
        %v609 = vsel %vm570, %v427, 0
        %v610 = vsel %vm571, %v428, 0
        %v611 = vsel %vm571, %v429, 0
        %v612 = vsel %vm571, %v430, 0
        %v613 = vsel %vm571, %v431, 0
        %v614 = vsel %vm572, %v432, 0
        %v615 = vsel %vm572, %v433, 0
        %v616 = vsel %vm572, %v434, 0
        %v617 = vsel %vm572, %v435, 0
        %v618 = vsel %vm573, %v436, 0
        %v619 = vsel %vm573, %v437, 0
        %v620 = vsel %vm573, %v438, 0
        %v621 = vsel %vm573, %v439, 0
        %v622 = vsel %vm574, %v440, 0
        %v623 = vsel %vm574, %v441, 0
        %v624 = vsel %vm574, %v442, 0
        %v625 = vsel %vm574, %v443, 0
        %v626 = vsel %vm575, %v444, 0
        %v627 = vsel %vm575, %v445, 0
        %v628 = vsel %vm575, %v446, 0
        %v629 = vsel %vm575, %v447, 0
        %v630 = vsel %vm576, %v448, 0
        %v631 = vsel %vm576, %v449, 0
        %v632 = vsel %vm576, %v450, 0
        %v633 = vsel %vm576, %v451, 0
        %v634 = vsel %vm577, %v452, 0
        %v635 = vsel %vm577, %v453, 0
        %v636 = vsel %vm577, %v454, 0
        %v637 = vsel %vm577, %v455, 0
        %v638 = vsel %vm578, %v456, 0
        %v639 = vsel %vm578, %v457, 0
        %v640 = vsel %vm578, %v458, 0
        %v641 = vsel %vm578, %v459, 0
        %v642 = vsel %vm579, %v460, 0
        %v643 = vsel %vm579, %v461, 0
        %v644 = vsel %vm579, %v462, 0
        %v645 = vsel %vm579, %v463, 0
        %v646 = vsel %vm580, %v464, 0
        %v647 = vsel %vm580, %v465, 0
        %v648 = vsel %vm580, %v466, 0
        %v649 = vsel %vm580, %v467, 0
        %v650 = vsel %vm581, %v468, 0
        %v651 = vsel %vm581, %v469, 0
        %v652 = vsel %vm581, %v470, 0
        %v653 = vsel %vm581, %v471, 0
        %v726 = vunpack.c.l.b16 %v582
        %v727 = vunpack.c.l.b16 %v583
        %v728 = vunpack.c.l.b16 %v584
        %v729 = vunpack.c.l.b16 %v585
        %v730 = vunpack.c.l.b16 %v586
        %v731 = vunpack.c.l.b16 %v587
        %v732 = vunpack.c.l.b16 %v588
        %v733 = vunpack.c.l.b16 %v589
        %v734 = vunpack.c.l.b16 %v590
        %v735 = vunpack.c.l.b16 %v591
        %v736 = vunpack.c.l.b16 %v592
        %v737 = vunpack.c.l.b16 %v593
        %v738 = vunpack.c.l.b16 %v594
        %v739 = vunpack.c.l.b16 %v595
        %v740 = vunpack.c.l.b16 %v596
        %v741 = vunpack.c.l.b16 %v597
        %v742 = vunpack.c.l.b16 %v598
        %v743 = vunpack.c.l.b16 %v599
        %v744 = vunpack.c.l.b16 %v600
        %v745 = vunpack.c.l.b16 %v601
        %v746 = vunpack.c.l.b16 %v602
        %v747 = vunpack.c.l.b16 %v603
        %v748 = vunpack.c.l.b16 %v604
        %v749 = vunpack.c.l.b16 %v605
        %v750 = vunpack.c.l.b16 %v606
        %v751 = vunpack.c.l.b16 %v607
        %v752 = vunpack.c.l.b16 %v608
        %v753 = vunpack.c.l.b16 %v609
        %v754 = vunpack.c.l.b16 %v610
        %v755 = vunpack.c.l.b16 %v611
        %v756 = vunpack.c.l.b16 %v612
        %v757 = vunpack.c.l.b16 %v613
        %v758 = vunpack.c.l.b16 %v614
        %v759 = vunpack.c.l.b16 %v615
        %v760 = vunpack.c.l.b16 %v616
        %v761 = vunpack.c.l.b16 %v617
        %v762 = vunpack.c.l.b16 %v618
        %v763 = vunpack.c.l.b16 %v619
        %v764 = vunpack.c.l.b16 %v620
        %v765 = vunpack.c.l.b16 %v621
        %v766 = vunpack.c.l.b16 %v622
        %v767 = vunpack.c.l.b16 %v623
        %v768 = vunpack.c.l.b16 %v624
        %v769 = vunpack.c.l.b16 %v625
        %v770 = vunpack.c.l.b16 %v626
        %v771 = vunpack.c.l.b16 %v627
        %v772 = vunpack.c.l.b16 %v628
        %v773 = vunpack.c.l.b16 %v629
        %v774 = vunpack.c.l.b16 %v630
        %v775 = vunpack.c.l.b16 %v631
        %v776 = vunpack.c.l.b16 %v632
        %v777 = vunpack.c.l.b16 %v633
        %v778 = vunpack.c.l.b16 %v634
        %v779 = vunpack.c.l.b16 %v635
        %v780 = vunpack.c.l.b16 %v636
        %v781 = vunpack.c.l.b16 %v637
        %v782 = vunpack.c.l.b16 %v638
        %v783 = vunpack.c.l.b16 %v639
        %v784 = vunpack.c.l.b16 %v640
        %v785 = vunpack.c.l.b16 %v641
        %v786 = vunpack.c.l.b16 %v642
        %v787 = vunpack.c.l.b16 %v643
        %v788 = vunpack.c.l.b16 %v644
        %v789 = vunpack.c.l.b16 %v645
        %v790 = vunpack.c.l.b16 %v646
        %v791 = vunpack.c.l.b16 %v647
        %v792 = vunpack.c.l.b16 %v648
        %v793 = vunpack.c.l.b16 %v649
        %v794 = vunpack.c.l.b16 %v650
        %v795 = vunpack.c.l.b16 %v651
        %v796 = vunpack.c.l.b16 %v652
        %v797 = vunpack.c.l.b16 %v653
        %v798 = vpack.c.b16 %v727, %v726
        %v799 = vpack.c.b16 %v729, %v728
        %v800 = vpack.c.b16 %v731, %v730
        %v801 = vpack.c.b16 %v733, %v732
        %v802 = vpack.c.b16 %v735, %v734
        %v803 = vpack.c.b16 %v737, %v736
        %v804 = vpack.c.b16 %v739, %v738
        %v805 = vpack.c.b16 %v741, %v740
        %v806 = vpack.c.b16 %v743, %v742
        %v807 = vpack.c.b16 %v745, %v744
        %v808 = vpack.c.b16 %v747, %v746
        %v809 = vpack.c.b16 %v749, %v748
        %v810 = vpack.c.b16 %v751, %v750
        %v811 = vpack.c.b16 %v753, %v752
        %v812 = vpack.c.b16 %v755, %v754
        %v813 = vpack.c.b16 %v757, %v756
        %v814 = vpack.c.b16 %v759, %v758
        %v815 = vpack.c.b16 %v761, %v760
        %v816 = vpack.c.b16 %v763, %v762
        %v817 = vpack.c.b16 %v765, %v764
        %v818 = vpack.c.b16 %v767, %v766
        %v819 = vpack.c.b16 %v769, %v768
        %v820 = vpack.c.b16 %v771, %v770
        %v821 = vpack.c.b16 %v773, %v772
        %v822 = vpack.c.b16 %v775, %v774
        %v823 = vpack.c.b16 %v777, %v776
        %v824 = vpack.c.b16 %v779, %v778
        %v825 = vpack.c.b16 %v781, %v780
        %v826 = vpack.c.b16 %v783, %v782
        %v827 = vpack.c.b16 %v785, %v784
        %v828 = vpack.c.b16 %v787, %v786
        %v829 = vpack.c.b16 %v789, %v788
        %v830 = vpack.c.b16 %v791, %v790
        %v831 = vpack.c.b16 %v793, %v792
        %v832 = vpack.c.b16 %v795, %v794
        %v833 = vpack.c.b16 %v797, %v796
        %vm834 = vsmask.f32 256
        %v836 = vshrl.u32 %v798, 16
        %v838 = vrot.slane %v836, 7
        %v839 = vshll.u32 %v798, 16
        %v841 = vor.u32 %v838, %v839
        %v843 = vshrl.u32 %v799, 16
        %v845 = vrot.slane %v843, 7
        %v846 = vshll.u32 %v799, 16
        %v848 = vor.u32 %v845, %v846
        %v849 = vsel %vm834, %v838, %v848
        %v851 = vshrl.u32 %v800, 16
        %v853 = vrot.slane %v851, 7
        %v854 = vshll.u32 %v800, 16
        %v856 = vor.u32 %v853, %v854
        %v858 = vshrl.u32 %v801, 16
        %v860 = vrot.slane %v858, 7
        %v861 = vshll.u32 %v801, 16
        %v863 = vor.u32 %v860, %v861
        %v864 = vsel %vm834, %v853, %v863
        %v866 = vshrl.u32 %v802, 16
        %v868 = vrot.slane %v866, 7
        %v869 = vshll.u32 %v802, 16
        %v871 = vor.u32 %v868, %v869
        %v873 = vshrl.u32 %v803, 16
        %v875 = vrot.slane %v873, 7
        %v876 = vshll.u32 %v803, 16
        %v878 = vor.u32 %v875, %v876
        %v879 = vsel %vm834, %v868, %v878
        %v881 = vshrl.u32 %v804, 16
        %v883 = vrot.slane %v881, 7
        %v884 = vshll.u32 %v804, 16
        %v886 = vor.u32 %v883, %v884
        %v888 = vshrl.u32 %v805, 16
        %v890 = vrot.slane %v888, 7
        %v891 = vshll.u32 %v805, 16
        %v893 = vor.u32 %v890, %v891
        %v894 = vsel %vm834, %v883, %v893
        %v896 = vshrl.u32 %v806, 16
        %v898 = vrot.slane %v896, 7
        %v899 = vshll.u32 %v806, 16
        %v901 = vor.u32 %v898, %v899
        %v903 = vshrl.u32 %v807, 16
        %v905 = vrot.slane %v903, 7
        %v906 = vshll.u32 %v807, 16
        %v908 = vor.u32 %v905, %v906
        %v909 = vsel %vm834, %v898, %v908
        %v911 = vshrl.u32 %v808, 16
        %v913 = vrot.slane %v911, 7
        %v914 = vshll.u32 %v808, 16
        %v916 = vor.u32 %v913, %v914
        %v918 = vshrl.u32 %v809, 16
        %v920 = vrot.slane %v918, 7
        %v921 = vshll.u32 %v809, 16
        %v923 = vor.u32 %v920, %v921
        %v924 = vsel %vm834, %v913, %v923
        %v926 = vshrl.u32 %v810, 16
        %v928 = vrot.slane %v926, 7
        %v929 = vshll.u32 %v810, 16
        %v931 = vor.u32 %v928, %v929
        %v933 = vshrl.u32 %v811, 16
        %v935 = vrot.slane %v933, 7
        %v936 = vshll.u32 %v811, 16
        %v938 = vor.u32 %v935, %v936
        %v939 = vsel %vm834, %v928, %v938
        %v941 = vshrl.u32 %v812, 16
        %v943 = vrot.slane %v941, 7
        %v944 = vshll.u32 %v812, 16
        %v946 = vor.u32 %v943, %v944
        %v948 = vshrl.u32 %v813, 16
        %v950 = vrot.slane %v948, 7
        %v951 = vshll.u32 %v813, 16
        %v953 = vor.u32 %v950, %v951
        %v954 = vsel %vm834, %v943, %v953
        %v956 = vshrl.u32 %v814, 16
        %v958 = vrot.slane %v956, 7
        %v959 = vshll.u32 %v814, 16
        %v961 = vor.u32 %v958, %v959
        %v963 = vshrl.u32 %v815, 16
        %v965 = vrot.slane %v963, 7
        %v966 = vshll.u32 %v815, 16
        %v968 = vor.u32 %v965, %v966
        %v969 = vsel %vm834, %v958, %v968
        %v971 = vshrl.u32 %v816, 16
        %v973 = vrot.slane %v971, 7
        %v974 = vshll.u32 %v816, 16
        %v976 = vor.u32 %v973, %v974
        %v978 = vshrl.u32 %v817, 16
        %v980 = vrot.slane %v978, 7
        %v981 = vshll.u32 %v817, 16
        %v983 = vor.u32 %v980, %v981
        %v984 = vsel %vm834, %v973, %v983
        %v986 = vshrl.u32 %v818, 16
        %v988 = vrot.slane %v986, 7
        %v989 = vshll.u32 %v818, 16
        %v991 = vor.u32 %v988, %v989
        %v993 = vshrl.u32 %v819, 16
        %v995 = vrot.slane %v993, 7
        %v996 = vshll.u32 %v819, 16
        %v998 = vor.u32 %v995, %v996
        %v999 = vsel %vm834, %v988, %v998
        %v1001 = vshrl.u32 %v820, 16
        %v1003 = vrot.slane %v1001, 7
        %v1004 = vshll.u32 %v820, 16
        %v1006 = vor.u32 %v1003, %v1004
        %v1008 = vshrl.u32 %v821, 16
        %v1010 = vrot.slane %v1008, 7
        %v1011 = vshll.u32 %v821, 16
        %v1013 = vor.u32 %v1010, %v1011
        %v1014 = vsel %vm834, %v1003, %v1013
        %v1016 = vshrl.u32 %v822, 16
        %v1018 = vrot.slane %v1016, 7
        %v1019 = vshll.u32 %v822, 16
        %v1021 = vor.u32 %v1018, %v1019
        %v1023 = vshrl.u32 %v823, 16
        %v1025 = vrot.slane %v1023, 7
        %v1026 = vshll.u32 %v823, 16
        %v1028 = vor.u32 %v1025, %v1026
        %v1029 = vsel %vm834, %v1018, %v1028
        %v1031 = vshrl.u32 %v824, 16
        %v1033 = vrot.slane %v1031, 7
        %v1034 = vshll.u32 %v824, 16
        %v1036 = vor.u32 %v1033, %v1034
        %v1038 = vshrl.u32 %v825, 16
        %v1040 = vrot.slane %v1038, 7
        %v1041 = vshll.u32 %v825, 16
        %v1043 = vor.u32 %v1040, %v1041
        %v1044 = vsel %vm834, %v1033, %v1043
        %v1046 = vshrl.u32 %v826, 16
        %v1048 = vrot.slane %v1046, 7
        %v1049 = vshll.u32 %v826, 16
        %v1051 = vor.u32 %v1048, %v1049
        %v1053 = vshrl.u32 %v827, 16
        %v1055 = vrot.slane %v1053, 7
        %v1056 = vshll.u32 %v827, 16
        %v1058 = vor.u32 %v1055, %v1056
        %v1059 = vsel %vm834, %v1048, %v1058
        %v1061 = vshrl.u32 %v828, 16
        %v1063 = vrot.slane %v1061, 7
        %v1064 = vshll.u32 %v828, 16
        %v1066 = vor.u32 %v1063, %v1064
        %v1068 = vshrl.u32 %v829, 16
        %v1070 = vrot.slane %v1068, 7
        %v1071 = vshll.u32 %v829, 16
        %v1073 = vor.u32 %v1070, %v1071
        %v1074 = vsel %vm834, %v1063, %v1073
        %v1076 = vshrl.u32 %v830, 16
        %v1078 = vrot.slane %v1076, 7
        %v1079 = vshll.u32 %v830, 16
        %v1081 = vor.u32 %v1078, %v1079
        %v1083 = vshrl.u32 %v831, 16
        %v1085 = vrot.slane %v1083, 7
        %v1086 = vshll.u32 %v831, 16
        %v1088 = vor.u32 %v1085, %v1086
        %v1089 = vsel %vm834, %v1078, %v1088
        %v1091 = vshrl.u32 %v832, 16
        %v1093 = vrot.slane %v1091, 7
        %v1094 = vshll.u32 %v832, 16
        %v1096 = vor.u32 %v1093, %v1094
        %v1098 = vshrl.u32 %v833, 16
        %v1100 = vrot.slane %v1098, 7
        %v1101 = vshll.u32 %v833, 16
        %v1103 = vor.u32 %v1100, %v1101
        %v1104 = vsel %vm834, %v1093, %v1103
        %vm1141 = vcmask 1040384
        %vm1142 = vmand %vm1141, %vm834
        %v1143 = vsel %vm1142, 0, %v841
        %v1144 = vsel %vm1142, 0, %v856
        %v1145 = vsel %vm1142, 0, %v871
        %v1146 = vsel %vm1142, 0, %v886
        %v1147 = vsel %vm1142, 0, %v901
        %v1148 = vsel %vm1142, 0, %v916
        %v1149 = vsel %vm1142, 0, %v931
        %v1150 = vsel %vm1142, 0, %v946
        %v1151 = vsel %vm1142, 0, %v961
        %v1152 = vsel %vm1142, 0, %v976
        %v1153 = vsel %vm1142, 0, %v991
        %v1154 = vsel %vm1142, 0, %v1006
        %v1155 = vsel %vm1142, 0, %v1021
        %v1156 = vsel %vm1142, 0, %v1036
        %v1157 = vsel %vm1142, 0, %v1051
        %v1158 = vsel %vm1142, 0, %v1066
        %v1159 = vsel %vm1142, 0, %v1081
        %v1160 = vsel %vm1142, 0, %v1096
        %vm1161 = vsmask.f32 7424
        %v1162 = vrot.slane %v839, 1
        %v1163 = vor.u32 %v836, %v1162
        %v1164 = vrot.slane %v846, 1
        %v1165 = vsel %vm1161, %v1163, %v1164
        %v1166 = vor.u32 %v843, %v1164
        %v1167 = vrot.slane %v854, 1
        %v1168 = vor.u32 %v851, %v1167
        %v1169 = vrot.slane %v861, 1
        %v1170 = vsel %vm1161, %v1168, %v1169
        %v1171 = vor.u32 %v858, %v1169
        %v1172 = vrot.slane %v869, 1
        %v1173 = vor.u32 %v866, %v1172
        %v1174 = vrot.slane %v876, 1
        %v1175 = vsel %vm1161, %v1173, %v1174
        %v1176 = vor.u32 %v873, %v1174
        %v1177 = vrot.slane %v884, 1
        %v1178 = vor.u32 %v881, %v1177
        %v1179 = vrot.slane %v891, 1
        %v1180 = vsel %vm1161, %v1178, %v1179
        %v1181 = vor.u32 %v888, %v1179
        %v1182 = vrot.slane %v899, 1
        %v1183 = vor.u32 %v896, %v1182
        %v1184 = vrot.slane %v906, 1
        %v1185 = vsel %vm1161, %v1183, %v1184
        %v1186 = vor.u32 %v903, %v1184
        %v1187 = vrot.slane %v914, 1
        %v1188 = vor.u32 %v911, %v1187
        %v1189 = vrot.slane %v921, 1
        %v1190 = vsel %vm1161, %v1188, %v1189
        %v1191 = vor.u32 %v918, %v1189
        %v1192 = vrot.slane %v929, 1
        %v1193 = vor.u32 %v926, %v1192
        %v1194 = vrot.slane %v936, 1
        %v1195 = vsel %vm1161, %v1193, %v1194
        %v1196 = vor.u32 %v933, %v1194
        %v1197 = vrot.slane %v944, 1
        %v1198 = vor.u32 %v941, %v1197
        %v1199 = vrot.slane %v951, 1
        %v1200 = vsel %vm1161, %v1198, %v1199
        %v1201 = vor.u32 %v948, %v1199
        %v1202 = vrot.slane %v959, 1
        %v1203 = vor.u32 %v956, %v1202
        %v1204 = vrot.slane %v966, 1
        %v1205 = vsel %vm1161, %v1203, %v1204
        %v1206 = vor.u32 %v963, %v1204
        %v1207 = vrot.slane %v974, 1
        %v1208 = vor.u32 %v971, %v1207
        %v1209 = vrot.slane %v981, 1
        %v1210 = vsel %vm1161, %v1208, %v1209
        %v1211 = vor.u32 %v978, %v1209
        %v1212 = vrot.slane %v989, 1
        %v1213 = vor.u32 %v986, %v1212
        %v1214 = vrot.slane %v996, 1
        %v1215 = vsel %vm1161, %v1213, %v1214
        %v1216 = vor.u32 %v993, %v1214
        %v1217 = vrot.slane %v1004, 1
        %v1218 = vor.u32 %v1001, %v1217
        %v1219 = vrot.slane %v1011, 1
        %v1220 = vsel %vm1161, %v1218, %v1219
        %v1221 = vor.u32 %v1008, %v1219
        %v1222 = vrot.slane %v1019, 1
        %v1223 = vor.u32 %v1016, %v1222
        %v1224 = vrot.slane %v1026, 1
        %v1225 = vsel %vm1161, %v1223, %v1224
        %v1226 = vor.u32 %v1023, %v1224
        %v1227 = vrot.slane %v1034, 1
        %v1228 = vor.u32 %v1031, %v1227
        %v1229 = vrot.slane %v1041, 1
        %v1230 = vsel %vm1161, %v1228, %v1229
        %v1231 = vor.u32 %v1038, %v1229
        %v1232 = vrot.slane %v1049, 1
        %v1233 = vor.u32 %v1046, %v1232
        %v1234 = vrot.slane %v1056, 1
        %v1235 = vsel %vm1161, %v1233, %v1234
        %v1236 = vor.u32 %v1053, %v1234
        %v1237 = vrot.slane %v1064, 1
        %v1238 = vor.u32 %v1061, %v1237
        %v1239 = vrot.slane %v1071, 1
        %v1240 = vsel %vm1161, %v1238, %v1239
        %v1241 = vor.u32 %v1068, %v1239
        %v1242 = vrot.slane %v1079, 1
        %v1243 = vor.u32 %v1076, %v1242
        %v1244 = vrot.slane %v1086, 1
        %v1245 = vsel %vm1161, %v1243, %v1244
        %v1246 = vor.u32 %v1083, %v1244
        %v1247 = vrot.slane %v1094, 1
        %v1248 = vor.u32 %v1091, %v1247
        %v1249 = vrot.slane %v1101, 1
        %v1250 = vsel %vm1161, %v1248, %v1249
        %v1251 = vor.u32 %v1098, %v1249
        %vm1288 = vcmask 1047552
        %vm1289 = vmand %vm1288, %vm1161
        %v1290 = vsel %vm1289, %v1166, 0
        %v1291 = vsel %vm1289, %v1171, 0
        %v1292 = vsel %vm1289, %v1176, 0
        %v1293 = vsel %vm1289, %v1181, 0
        %v1294 = vsel %vm1289, %v1186, 0
        %v1295 = vsel %vm1289, %v1191, 0
        %v1296 = vsel %vm1289, %v1196, 0
        %v1297 = vsel %vm1289, %v1201, 0
        %v1298 = vsel %vm1289, %v1206, 0
        %v1299 = vsel %vm1289, %v1211, 0
        %v1300 = vsel %vm1289, %v1216, 0
        %v1301 = vsel %vm1289, %v1221, 0
        %v1302 = vsel %vm1289, %v1226, 0
        %v1303 = vsel %vm1289, %v1231, 0
        %v1304 = vsel %vm1289, %v1236, 0
        %v1305 = vsel %vm1289, %v1241, 0
        %v1306 = vsel %vm1289, %v1246, 0
        %v1307 = vsel %vm1289, %v1251, 0
        %v1308 = vld [vmem:[%s3] sm:$0xf]
        %v1309 = vld [vmem:[%s3 + $0x4] sm:$0xf]
        %v1310 = vld [vmem:[%s3 + $0x8] sm:$0xf]
        %v1311 = vld [vmem:[%s3 + $0xc] sm:$0xf]
        %v1312 = vld [vmem:[%s3 + $0x10] sm:$0xf]
        %v1313 = vld [vmem:[%s3 + $0x14] sm:$0xf]
        %v1314 = vld [vmem:[%s3 + $0x18] sm:$0xf]
        %v1315 = vld [vmem:[%s3 + $0x1c] sm:$0xf]
        %v1316 = vld [vmem:[%s3 + $0x20] sm:$0xf]
        %v1317 = vld [vmem:[%s3 + $0x24] sm:$0xf]
        %v1318 = vld [vmem:[%s3 + $0x28] sm:$0xf]
        %v1319 = vld [vmem:[%s3 + $0x2c] sm:$0xf]
        %v1320 = vld [vmem:[%s3 + $0x30] sm:$0xf]
        %v1321 = vld [vmem:[%s3 + $0x34] sm:$0xf]
        %v1322 = vld [vmem:[%s3 + $0x38] sm:$0xf]
        %v1323 = vld [vmem:[%s3 + $0x3c] sm:$0xf]
        %s1324 = scalar_lea.vmem %s3, 64
        %v1325 = vld [vmem:[%s1324] sm:$0xf]
        %v1326 = vld [vmem:[%s1324 + $0x4] sm:$0xf]
        %v1327 = vld [vmem:[%s1324 + $0x8] sm:$0xf]
        %v1328 = vld [vmem:[%s1324 + $0xc] sm:$0xf]
        %v1329 = vld [vmem:[%s1324 + $0x10] sm:$0xf]
        %v1330 = vld [vmem:[%s1324 + $0x14] sm:$0xf]
        %v1331 = vld [vmem:[%s1324 + $0x18] sm:$0xf]
        %v1332 = vld [vmem:[%s1324 + $0x1c] sm:$0xf]
        %v1333 = vld [vmem:[%s1324 + $0x20] sm:$0xf]
        %v1334 = vld [vmem:[%s1324 + $0x24] sm:$0xf]
        %v1335 = vld [vmem:[%s1324 + $0x28] sm:$0xf]
        %v1336 = vld [vmem:[%s1324 + $0x2c] sm:$0xf]
        %v1337 = vld [vmem:[%s1324 + $0x30] sm:$0xf]
        %v1338 = vld [vmem:[%s1324 + $0x34] sm:$0xf]
        %v1339 = vld [vmem:[%s1324 + $0x38] sm:$0xf]
        %v1340 = vld [vmem:[%s1324 + $0x3c] sm:$0xf]
        %v1389 = vunpack.c.l.b16 %v1325
        %v1390 = vunpack.c.l.b16 %v1326
        %v1391 = vunpack.c.l.b16 %v1327
        %v1392 = vunpack.c.l.b16 %v1328
        %v1393 = vunpack.c.l.b16 %v1329
        %v1394 = vunpack.c.l.b16 %v1330
        %v1395 = vunpack.c.l.b16 %v1331
        %v1396 = vunpack.c.l.b16 %v1332
        %v1397 = vunpack.c.l.b16 %v1333
        %v1398 = vunpack.c.l.b16 %v1334
        %v1399 = vunpack.c.l.b16 %v1335
        %v1400 = vunpack.c.l.b16 %v1336
        %v1401 = vunpack.c.l.b16 %v1337
        %v1402 = vunpack.c.l.b16 %v1338
        %v1403 = vunpack.c.l.b16 %v1339
        %v1404 = vunpack.c.l.b16 %v1340
        %v1405 = vpack.c.b16 %v1390, %v1389
        %v1406 = vpack.c.b16 %v1392, %v1391
        %v1407 = vpack.c.b16 %v1394, %v1393
        %v1408 = vpack.c.b16 %v1396, %v1395
        %v1409 = vpack.c.b16 %v1398, %v1397
        %v1410 = vpack.c.b16 %v1400, %v1399
        %v1411 = vpack.c.b16 %v1402, %v1401
        %v1412 = vpack.c.b16 %v1404, %v1403
        %1421 = vmatpush.bf16.msra.mxu0 %v1412
        %1422 = vmatpush.bf16.msra.mxu0 %v1411
        %1423 = vmatpush.bf16.msra.mxu0 %v1410
        %1424 = vmatpush.bf16.msra.mxu0 %v1409
        %1425 = vmatpush.bf16.msra.mxu0 %v1408
        %1426 = vmatpush.bf16.msra.mxu0 %v1407
        %1427 = vmatpush.bf16.msra.mxu0 %v1406
        %1428 = vmatpush.bf16.msra.mxu0 %v1405
        %1429 = vmatmul.bf16.gmra.mxu0 %v798
        %v1430 = vpop.f32.mrf.mxu0
        %v1431 = vadd.f32 0.0, %v1430
        %v1432 = vpop.f32.mrf.mxu0
        %v1433 = vadd.f32 0.0, %v1432
        %1434 = vmatmul.bf16.gmra.mxu0 %v799
        %v1435 = vpop.f32.mrf.mxu0
        %v1436 = vadd.f32 0.0, %v1435
        %v1437 = vpop.f32.mrf.mxu0
        %v1438 = vadd.f32 0.0, %v1437
        %1439 = vmatmul.bf16.gmra.mxu0 %v800
        %v1440 = vpop.f32.mrf.mxu0
        %v1441 = vadd.f32 0.0, %v1440
        %v1442 = vpop.f32.mrf.mxu0
        %v1443 = vadd.f32 0.0, %v1442
        %1444 = vmatmul.bf16.gmra.mxu0 %v801
        %v1445 = vpop.f32.mrf.mxu0
        %v1446 = vadd.f32 0.0, %v1445
        %v1447 = vpop.f32.mrf.mxu0
        %v1448 = vadd.f32 0.0, %v1447
        %1449 = vmatmul.bf16.gmra.mxu0 %v802
        %v1450 = vpop.f32.mrf.mxu0
        %v1451 = vadd.f32 0.0, %v1450
        %v1452 = vpop.f32.mrf.mxu0
        %v1453 = vadd.f32 0.0, %v1452
        %1454 = vmatmul.bf16.gmra.mxu0 %v803
        %v1455 = vpop.f32.mrf.mxu0
        %v1456 = vadd.f32 0.0, %v1455
        %v1457 = vpop.f32.mrf.mxu0
        %v1458 = vadd.f32 0.0, %v1457
        %1459 = vmatmul.bf16.gmra.mxu0 %v804
        %v1460 = vpop.f32.mrf.mxu0
        %v1461 = vadd.f32 0.0, %v1460
        %v1462 = vpop.f32.mrf.mxu0
        %v1463 = vadd.f32 0.0, %v1462
        %1464 = vmatmul.bf16.gmra.mxu0 %v805
        %v1465 = vpop.f32.mrf.mxu0
        %v1466 = vadd.f32 0.0, %v1465
        %v1467 = vpop.f32.mrf.mxu0
        %v1468 = vadd.f32 0.0, %v1467
        %1469 = vmatmul.bf16.gmra.mxu0 %v806
        %v1470 = vpop.f32.mrf.mxu0
        %v1471 = vadd.f32 0.0, %v1470
        %v1472 = vpop.f32.mrf.mxu0
        %v1473 = vadd.f32 0.0, %v1472
        %1474 = vmatmul.bf16.gmra.mxu0 %v807
        %v1475 = vpop.f32.mrf.mxu0
        %v1476 = vadd.f32 0.0, %v1475
        %v1477 = vpop.f32.mrf.mxu0
        %v1478 = vadd.f32 0.0, %v1477
        %1479 = vmatmul.bf16.gmra.mxu0 %v808
        %v1480 = vpop.f32.mrf.mxu0
        %v1481 = vadd.f32 0.0, %v1480
        %v1482 = vpop.f32.mrf.mxu0
        %v1483 = vadd.f32 0.0, %v1482
        %1484 = vmatmul.bf16.gmra.mxu0 %v809
        %v1485 = vpop.f32.mrf.mxu0
        %v1486 = vadd.f32 0.0, %v1485
        %v1487 = vpop.f32.mrf.mxu0
        %v1488 = vadd.f32 0.0, %v1487
        %1489 = vmatmul.bf16.gmra.mxu0 %v810
        %v1490 = vpop.f32.mrf.mxu0
        %v1491 = vadd.f32 0.0, %v1490
        %v1492 = vpop.f32.mrf.mxu0
        %v1493 = vadd.f32 0.0, %v1492
        %1494 = vmatmul.bf16.gmra.mxu0 %v811
        %v1495 = vpop.f32.mrf.mxu0
        %v1496 = vadd.f32 0.0, %v1495
        %v1497 = vpop.f32.mrf.mxu0
        %v1498 = vadd.f32 0.0, %v1497
        %1499 = vmatmul.bf16.gmra.mxu0 %v812
        %v1500 = vpop.f32.mrf.mxu0
        %v1501 = vadd.f32 0.0, %v1500
        %v1502 = vpop.f32.mrf.mxu0
        %v1503 = vadd.f32 0.0, %v1502
        %1504 = vmatmul.bf16.gmra.mxu0 %v813
        %v1505 = vpop.f32.mrf.mxu0
        %v1506 = vadd.f32 0.0, %v1505
        %v1507 = vpop.f32.mrf.mxu0
        %v1508 = vadd.f32 0.0, %v1507
        %1509 = vmatmul.bf16.gmra.mxu0 %v814
        %v1510 = vpop.f32.mrf.mxu0
        %v1511 = vadd.f32 0.0, %v1510
        %v1512 = vpop.f32.mrf.mxu0
        %v1513 = vadd.f32 0.0, %v1512
        %1514 = vmatmul.bf16.gmra.mxu0 %v815
        %v1515 = vpop.f32.mrf.mxu0
        %v1516 = vadd.f32 0.0, %v1515
        %v1517 = vpop.f32.mrf.mxu0
        %v1518 = vadd.f32 0.0, %v1517
        %1519 = vmatmul.bf16.gmra.mxu0 %v816
        %v1520 = vpop.f32.mrf.mxu0
        %v1521 = vadd.f32 0.0, %v1520
        %v1522 = vpop.f32.mrf.mxu0
        %v1523 = vadd.f32 0.0, %v1522
        %1524 = vmatmul.bf16.gmra.mxu0 %v817
        %v1525 = vpop.f32.mrf.mxu0
        %v1526 = vadd.f32 0.0, %v1525
        %v1527 = vpop.f32.mrf.mxu0
        %v1528 = vadd.f32 0.0, %v1527
        %1529 = vmatmul.bf16.gmra.mxu0 %v818
        %v1530 = vpop.f32.mrf.mxu0
        %v1531 = vadd.f32 0.0, %v1530
        %v1532 = vpop.f32.mrf.mxu0
        %v1533 = vadd.f32 0.0, %v1532
        %1534 = vmatmul.bf16.gmra.mxu0 %v819
        %v1535 = vpop.f32.mrf.mxu0
        %v1536 = vadd.f32 0.0, %v1535
        %v1537 = vpop.f32.mrf.mxu0
        %v1538 = vadd.f32 0.0, %v1537
        %1539 = vmatmul.bf16.gmra.mxu0 %v820
        %v1540 = vpop.f32.mrf.mxu0
        %v1541 = vadd.f32 0.0, %v1540
        %v1542 = vpop.f32.mrf.mxu0
        %v1543 = vadd.f32 0.0, %v1542
        %1544 = vmatmul.bf16.gmra.mxu0 %v821
        %v1545 = vpop.f32.mrf.mxu0
        %v1546 = vadd.f32 0.0, %v1545
        %v1547 = vpop.f32.mrf.mxu0
        %v1548 = vadd.f32 0.0, %v1547
        %1549 = vmatmul.bf16.gmra.mxu0 %v822
        %v1550 = vpop.f32.mrf.mxu0
        %v1551 = vadd.f32 0.0, %v1550
        %v1552 = vpop.f32.mrf.mxu0
        %v1553 = vadd.f32 0.0, %v1552
        %1554 = vmatmul.bf16.gmra.mxu0 %v823
        %v1555 = vpop.f32.mrf.mxu0
        %v1556 = vadd.f32 0.0, %v1555
        %v1557 = vpop.f32.mrf.mxu0
        %v1558 = vadd.f32 0.0, %v1557
        %1559 = vmatmul.bf16.gmra.mxu0 %v824
        %v1560 = vpop.f32.mrf.mxu0
        %v1561 = vadd.f32 0.0, %v1560
        %v1562 = vpop.f32.mrf.mxu0
        %v1563 = vadd.f32 0.0, %v1562
        %1564 = vmatmul.bf16.gmra.mxu0 %v825
        %v1565 = vpop.f32.mrf.mxu0
        %v1566 = vadd.f32 0.0, %v1565
        %v1567 = vpop.f32.mrf.mxu0
        %v1568 = vadd.f32 0.0, %v1567
        %1569 = vmatmul.bf16.gmra.mxu0 %v826
        %v1570 = vpop.f32.mrf.mxu0
        %v1571 = vadd.f32 0.0, %v1570
        %v1572 = vpop.f32.mrf.mxu0
        %v1573 = vadd.f32 0.0, %v1572
        %1574 = vmatmul.bf16.gmra.mxu0 %v827
        %v1575 = vpop.f32.mrf.mxu0
        %v1576 = vadd.f32 0.0, %v1575
        %v1577 = vpop.f32.mrf.mxu0
        %v1578 = vadd.f32 0.0, %v1577
        %1579 = vmatmul.bf16.gmra.mxu0 %v828
        %v1580 = vpop.f32.mrf.mxu0
        %v1581 = vadd.f32 0.0, %v1580
        %v1582 = vpop.f32.mrf.mxu0
        %v1583 = vadd.f32 0.0, %v1582
        %1584 = vmatmul.bf16.gmra.mxu0 %v829
        %v1585 = vpop.f32.mrf.mxu0
        %v1586 = vadd.f32 0.0, %v1585
        %v1587 = vpop.f32.mrf.mxu0
        %v1588 = vadd.f32 0.0, %v1587
        %1589 = vdwg.mxu0
        %v1606 = vunpack.c.l.b16 %v1308
        %v1607 = vunpack.c.l.b16 %v1309
        %v1608 = vunpack.c.l.b16 %v1310
        %v1609 = vunpack.c.l.b16 %v1311
        %v1610 = vunpack.c.l.b16 %v1312
        %v1611 = vunpack.c.l.b16 %v1313
        %v1612 = vunpack.c.l.b16 %v1314
        %v1613 = vunpack.c.l.b16 %v1315
        %v1614 = vunpack.c.l.b16 %v1316
        %v1615 = vunpack.c.l.b16 %v1317
        %v1616 = vunpack.c.l.b16 %v1318
        %v1617 = vunpack.c.l.b16 %v1319
        %v1618 = vunpack.c.l.b16 %v1320
        %v1619 = vunpack.c.l.b16 %v1321
        %v1620 = vunpack.c.l.b16 %v1322
        %v1621 = vunpack.c.l.b16 %v1323
        %v1622 = vpack.c.b16 %v1607, %v1606
        %v1623 = vpack.c.b16 %v1609, %v1608
        %v1624 = vpack.c.b16 %v1611, %v1610
        %v1625 = vpack.c.b16 %v1613, %v1612
        %v1626 = vpack.c.b16 %v1615, %v1614
        %v1627 = vpack.c.b16 %v1617, %v1616
        %v1628 = vpack.c.b16 %v1619, %v1618
        %v1629 = vpack.c.b16 %v1621, %v1620
        %1638 = vmatpush.bf16.msra.mxu0 %v1629
        %1639 = vmatpush.bf16.msra.mxu0 %v1628
        %1640 = vmatpush.bf16.msra.mxu0 %v1627
        %1641 = vmatpush.bf16.msra.mxu0 %v1626
        %1642 = vmatpush.bf16.msra.mxu0 %v1625
        %1643 = vmatpush.bf16.msra.mxu0 %v1624
        %1644 = vmatpush.bf16.msra.mxu0 %v1623
        %1645 = vmatpush.bf16.msra.mxu0 %v1622
        %1646 = vmatmul.bf16.gmra.mxu0 %v1143
        %v1647 = vpop.f32.mrf.mxu0
        %v1648 = vadd.f32 %v1431, %v1647
        %v1649 = vpop.f32.mrf.mxu0
        %v1650 = vadd.f32 %v1433, %v1649
        %1651 = vmatmul.bf16.gmra.mxu0 %v849
        %v1652 = vpop.f32.mrf.mxu0
        %v1653 = vadd.f32 %v1436, %v1652
        %v1654 = vpop.f32.mrf.mxu0
        %v1655 = vadd.f32 %v1438, %v1654
        %1656 = vmatmul.bf16.gmra.mxu0 %v1144
        %v1657 = vpop.f32.mrf.mxu0
        %v1658 = vadd.f32 %v1441, %v1657
        %v1659 = vpop.f32.mrf.mxu0
        %v1660 = vadd.f32 %v1443, %v1659
        %1661 = vmatmul.bf16.gmra.mxu0 %v864
        %v1662 = vpop.f32.mrf.mxu0
        %v1663 = vadd.f32 %v1446, %v1662
        %v1664 = vpop.f32.mrf.mxu0
        %v1665 = vadd.f32 %v1448, %v1664
        %1666 = vmatmul.bf16.gmra.mxu0 %v1145
        %v1667 = vpop.f32.mrf.mxu0
        %v1668 = vadd.f32 %v1451, %v1667
        %v1669 = vpop.f32.mrf.mxu0
        %v1670 = vadd.f32 %v1453, %v1669
        %1671 = vmatmul.bf16.gmra.mxu0 %v879
        %v1672 = vpop.f32.mrf.mxu0
        %v1673 = vadd.f32 %v1456, %v1672
        %v1674 = vpop.f32.mrf.mxu0
        %v1675 = vadd.f32 %v1458, %v1674
        %1676 = vmatmul.bf16.gmra.mxu0 %v1146
        %v1677 = vpop.f32.mrf.mxu0
        %v1678 = vadd.f32 %v1461, %v1677
        %v1679 = vpop.f32.mrf.mxu0
        %v1680 = vadd.f32 %v1463, %v1679
        %1681 = vmatmul.bf16.gmra.mxu0 %v894
        %v1682 = vpop.f32.mrf.mxu0
        %v1683 = vadd.f32 %v1466, %v1682
        %v1684 = vpop.f32.mrf.mxu0
        %v1685 = vadd.f32 %v1468, %v1684
        %1686 = vmatmul.bf16.gmra.mxu0 %v1147
        %v1687 = vpop.f32.mrf.mxu0
        %v1688 = vadd.f32 %v1471, %v1687
        %v1689 = vpop.f32.mrf.mxu0
        %v1690 = vadd.f32 %v1473, %v1689
        %1691 = vmatmul.bf16.gmra.mxu0 %v909
        %v1692 = vpop.f32.mrf.mxu0
        %v1693 = vadd.f32 %v1476, %v1692
        %v1694 = vpop.f32.mrf.mxu0
        %v1695 = vadd.f32 %v1478, %v1694
        %1696 = vmatmul.bf16.gmra.mxu0 %v1148
        %v1697 = vpop.f32.mrf.mxu0
        %v1698 = vadd.f32 %v1481, %v1697
        %v1699 = vpop.f32.mrf.mxu0
        %v1700 = vadd.f32 %v1483, %v1699
        %1701 = vmatmul.bf16.gmra.mxu0 %v924
        %v1702 = vpop.f32.mrf.mxu0
        %v1703 = vadd.f32 %v1486, %v1702
        %v1704 = vpop.f32.mrf.mxu0
        %v1705 = vadd.f32 %v1488, %v1704
        %1706 = vmatmul.bf16.gmra.mxu0 %v1149
        %v1707 = vpop.f32.mrf.mxu0
        %v1708 = vadd.f32 %v1491, %v1707
        %v1709 = vpop.f32.mrf.mxu0
        %v1710 = vadd.f32 %v1493, %v1709
        %1711 = vmatmul.bf16.gmra.mxu0 %v939
        %v1712 = vpop.f32.mrf.mxu0
        %v1713 = vadd.f32 %v1496, %v1712
        %v1714 = vpop.f32.mrf.mxu0
        %v1715 = vadd.f32 %v1498, %v1714
        %1716 = vmatmul.bf16.gmra.mxu0 %v1150
        %v1717 = vpop.f32.mrf.mxu0
        %v1718 = vadd.f32 %v1501, %v1717
        %v1719 = vpop.f32.mrf.mxu0
        %v1720 = vadd.f32 %v1503, %v1719
        %1721 = vmatmul.bf16.gmra.mxu0 %v954
        %v1722 = vpop.f32.mrf.mxu0
        %v1723 = vadd.f32 %v1506, %v1722
        %v1724 = vpop.f32.mrf.mxu0
        %v1725 = vadd.f32 %v1508, %v1724
        %1726 = vmatmul.bf16.gmra.mxu0 %v1151
        %v1727 = vpop.f32.mrf.mxu0
        %v1728 = vadd.f32 %v1511, %v1727
        %v1729 = vpop.f32.mrf.mxu0
        %v1730 = vadd.f32 %v1513, %v1729
        %1731 = vmatmul.bf16.gmra.mxu0 %v969
        %v1732 = vpop.f32.mrf.mxu0
        %v1733 = vadd.f32 %v1516, %v1732
        %v1734 = vpop.f32.mrf.mxu0
        %v1735 = vadd.f32 %v1518, %v1734
        %1736 = vmatmul.bf16.gmra.mxu0 %v1152
        %v1737 = vpop.f32.mrf.mxu0
        %v1738 = vadd.f32 %v1521, %v1737
        %v1739 = vpop.f32.mrf.mxu0
        %v1740 = vadd.f32 %v1523, %v1739
        %1741 = vmatmul.bf16.gmra.mxu0 %v984
        %v1742 = vpop.f32.mrf.mxu0
        %v1743 = vadd.f32 %v1526, %v1742
        %v1744 = vpop.f32.mrf.mxu0
        %v1745 = vadd.f32 %v1528, %v1744
        %1746 = vmatmul.bf16.gmra.mxu0 %v1153
        %v1747 = vpop.f32.mrf.mxu0
        %v1748 = vadd.f32 %v1531, %v1747
        %v1749 = vpop.f32.mrf.mxu0
        %v1750 = vadd.f32 %v1533, %v1749
        %1751 = vmatmul.bf16.gmra.mxu0 %v999
        %v1752 = vpop.f32.mrf.mxu0
        %v1753 = vadd.f32 %v1536, %v1752
        %v1754 = vpop.f32.mrf.mxu0
        %v1755 = vadd.f32 %v1538, %v1754
        %1756 = vmatmul.bf16.gmra.mxu0 %v1154
        %v1757 = vpop.f32.mrf.mxu0
        %v1758 = vadd.f32 %v1541, %v1757
        %v1759 = vpop.f32.mrf.mxu0
        %v1760 = vadd.f32 %v1543, %v1759
        %1761 = vmatmul.bf16.gmra.mxu0 %v1014
        %v1762 = vpop.f32.mrf.mxu0
        %v1763 = vadd.f32 %v1546, %v1762
        %v1764 = vpop.f32.mrf.mxu0
        %v1765 = vadd.f32 %v1548, %v1764
        %1766 = vmatmul.bf16.gmra.mxu0 %v1155
        %v1767 = vpop.f32.mrf.mxu0
        %v1768 = vadd.f32 %v1551, %v1767
        %v1769 = vpop.f32.mrf.mxu0
        %v1770 = vadd.f32 %v1553, %v1769
        %1771 = vmatmul.bf16.gmra.mxu0 %v1029
        %v1772 = vpop.f32.mrf.mxu0
        %v1773 = vadd.f32 %v1556, %v1772
        %v1774 = vpop.f32.mrf.mxu0
        %v1775 = vadd.f32 %v1558, %v1774
        %1776 = vmatmul.bf16.gmra.mxu0 %v1156
        %v1777 = vpop.f32.mrf.mxu0
        %v1778 = vadd.f32 %v1561, %v1777
        %v1779 = vpop.f32.mrf.mxu0
        %v1780 = vadd.f32 %v1563, %v1779
        %1781 = vmatmul.bf16.gmra.mxu0 %v1044
        %v1782 = vpop.f32.mrf.mxu0
        %v1783 = vadd.f32 %v1566, %v1782
        %v1784 = vpop.f32.mrf.mxu0
        %v1785 = vadd.f32 %v1568, %v1784
        %1786 = vmatmul.bf16.gmra.mxu0 %v1157
        %v1787 = vpop.f32.mrf.mxu0
        %v1788 = vadd.f32 %v1571, %v1787
        %v1789 = vpop.f32.mrf.mxu0
        %v1790 = vadd.f32 %v1573, %v1789
        %1791 = vmatmul.bf16.gmra.mxu0 %v1059
        %v1792 = vpop.f32.mrf.mxu0
        %v1793 = vadd.f32 %v1576, %v1792
        %v1794 = vpop.f32.mrf.mxu0
        %v1795 = vadd.f32 %v1578, %v1794
        %1796 = vmatmul.bf16.gmra.mxu0 %v1158
        %v1797 = vpop.f32.mrf.mxu0
        %v1798 = vadd.f32 %v1581, %v1797
        %v1799 = vpop.f32.mrf.mxu0
        %v1800 = vadd.f32 %v1583, %v1799
        %1801 = vmatmul.bf16.gmra.mxu0 %v1074
        %v1802 = vpop.f32.mrf.mxu0
        %v1803 = vadd.f32 %v1586, %v1802
        %v1804 = vpop.f32.mrf.mxu0
        %v1805 = vadd.f32 %v1588, %v1804
        %1806 = vdwg.mxu0
        %s1807 = scalar_lea.vmem %s3, 128
        %v1808 = vld [vmem:[%s1807] sm:$0xf]
        %v1809 = vld [vmem:[%s1807 + $0x4] sm:$0xf]
        %v1810 = vld [vmem:[%s1807 + $0x8] sm:$0xf]
        %v1811 = vld [vmem:[%s1807 + $0xc] sm:$0xf]
        %v1812 = vld [vmem:[%s1807 + $0x10] sm:$0xf]
        %v1813 = vld [vmem:[%s1807 + $0x14] sm:$0xf]
        %v1814 = vld [vmem:[%s1807 + $0x18] sm:$0xf]
        %v1815 = vld [vmem:[%s1807 + $0x1c] sm:$0xf]
        %v1816 = vld [vmem:[%s1807 + $0x20] sm:$0xf]
        %v1817 = vld [vmem:[%s1807 + $0x24] sm:$0xf]
        %v1818 = vld [vmem:[%s1807 + $0x28] sm:$0xf]
        %v1819 = vld [vmem:[%s1807 + $0x2c] sm:$0xf]
        %v1820 = vld [vmem:[%s1807 + $0x30] sm:$0xf]
        %v1821 = vld [vmem:[%s1807 + $0x34] sm:$0xf]
        %v1822 = vld [vmem:[%s1807 + $0x38] sm:$0xf]
        %v1823 = vld [vmem:[%s1807 + $0x3c] sm:$0xf]
        %v1840 = vunpack.c.l.b16 %v1808
        %v1841 = vunpack.c.l.b16 %v1809
        %v1842 = vunpack.c.l.b16 %v1810
        %v1843 = vunpack.c.l.b16 %v1811
        %v1844 = vunpack.c.l.b16 %v1812
        %v1845 = vunpack.c.l.b16 %v1813
        %v1846 = vunpack.c.l.b16 %v1814
        %v1847 = vunpack.c.l.b16 %v1815
        %v1848 = vunpack.c.l.b16 %v1816
        %v1849 = vunpack.c.l.b16 %v1817
        %v1850 = vunpack.c.l.b16 %v1818
        %v1851 = vunpack.c.l.b16 %v1819
        %v1852 = vunpack.c.l.b16 %v1820
        %v1853 = vunpack.c.l.b16 %v1821
        %v1854 = vunpack.c.l.b16 %v1822
        %v1855 = vunpack.c.l.b16 %v1823
        %v1856 = vpack.c.b16 %v1841, %v1840
        %v1857 = vpack.c.b16 %v1843, %v1842
        %v1858 = vpack.c.b16 %v1845, %v1844
        %v1859 = vpack.c.b16 %v1847, %v1846
        %v1860 = vpack.c.b16 %v1849, %v1848
        %v1861 = vpack.c.b16 %v1851, %v1850
        %v1862 = vpack.c.b16 %v1853, %v1852
        %v1863 = vpack.c.b16 %v1855, %v1854
        %1872 = vmatpush.bf16.msra.mxu0 %v1863
        %1873 = vmatpush.bf16.msra.mxu0 %v1862
        %1874 = vmatpush.bf16.msra.mxu0 %v1861
        %1875 = vmatpush.bf16.msra.mxu0 %v1860
        %1876 = vmatpush.bf16.msra.mxu0 %v1859
        %1877 = vmatpush.bf16.msra.mxu0 %v1858
        %1878 = vmatpush.bf16.msra.mxu0 %v1857
        %1879 = vmatpush.bf16.msra.mxu0 %v1856
        %1880 = vmatmul.bf16.gmra.mxu0 %v1165
        %v1881 = vpop.f32.mrf.mxu0
        %v1882 = vadd.f32 0.0, %v1881
        %v1883 = vpop.f32.mrf.mxu0
        %v1884 = vadd.f32 0.0, %v1883
        %1885 = vmatmul.bf16.gmra.mxu0 %v1290
        %v1886 = vpop.f32.mrf.mxu0
        %v1887 = vadd.f32 0.0, %v1886
        %v1888 = vpop.f32.mrf.mxu0
        %v1889 = vadd.f32 0.0, %v1888
        %1890 = vmatmul.bf16.gmra.mxu0 %v1170
        %v1891 = vpop.f32.mrf.mxu0
        %v1892 = vadd.f32 0.0, %v1891
        %v1893 = vpop.f32.mrf.mxu0
        %v1894 = vadd.f32 0.0, %v1893
        %1895 = vmatmul.bf16.gmra.mxu0 %v1291
        %v1896 = vpop.f32.mrf.mxu0
        %v1897 = vadd.f32 0.0, %v1896
        %v1898 = vpop.f32.mrf.mxu0
        %v1899 = vadd.f32 0.0, %v1898
        %1900 = vmatmul.bf16.gmra.mxu0 %v1175
        %v1901 = vpop.f32.mrf.mxu0
        %v1902 = vadd.f32 0.0, %v1901
        %v1903 = vpop.f32.mrf.mxu0
        %v1904 = vadd.f32 0.0, %v1903
        %1905 = vmatmul.bf16.gmra.mxu0 %v1292
        %v1906 = vpop.f32.mrf.mxu0
        %v1907 = vadd.f32 0.0, %v1906
        %v1908 = vpop.f32.mrf.mxu0
        %v1909 = vadd.f32 0.0, %v1908
        %1910 = vmatmul.bf16.gmra.mxu0 %v1180
        %v1911 = vpop.f32.mrf.mxu0
        %v1912 = vadd.f32 0.0, %v1911
        %v1913 = vpop.f32.mrf.mxu0
        %v1914 = vadd.f32 0.0, %v1913
        %1915 = vmatmul.bf16.gmra.mxu0 %v1293
        %v1916 = vpop.f32.mrf.mxu0
        %v1917 = vadd.f32 0.0, %v1916
        %v1918 = vpop.f32.mrf.mxu0
        %v1919 = vadd.f32 0.0, %v1918
        %1920 = vmatmul.bf16.gmra.mxu0 %v1185
        %v1921 = vpop.f32.mrf.mxu0
        %v1922 = vadd.f32 0.0, %v1921
        %v1923 = vpop.f32.mrf.mxu0
        %v1924 = vadd.f32 0.0, %v1923
        %1925 = vmatmul.bf16.gmra.mxu0 %v1294
        %v1926 = vpop.f32.mrf.mxu0
        %v1927 = vadd.f32 0.0, %v1926
        %v1928 = vpop.f32.mrf.mxu0
        %v1929 = vadd.f32 0.0, %v1928
        %1930 = vmatmul.bf16.gmra.mxu0 %v1190
        %v1931 = vpop.f32.mrf.mxu0
        %v1932 = vadd.f32 0.0, %v1931
        %v1933 = vpop.f32.mrf.mxu0
        %v1934 = vadd.f32 0.0, %v1933
        %1935 = vmatmul.bf16.gmra.mxu0 %v1295
        %v1936 = vpop.f32.mrf.mxu0
        %v1937 = vadd.f32 0.0, %v1936
        %v1938 = vpop.f32.mrf.mxu0
        %v1939 = vadd.f32 0.0, %v1938
        %1940 = vmatmul.bf16.gmra.mxu0 %v1195
        %v1941 = vpop.f32.mrf.mxu0
        %v1942 = vadd.f32 0.0, %v1941
        %v1943 = vpop.f32.mrf.mxu0
        %v1944 = vadd.f32 0.0, %v1943
        %1945 = vmatmul.bf16.gmra.mxu0 %v1296
        %v1946 = vpop.f32.mrf.mxu0
        %v1947 = vadd.f32 0.0, %v1946
        %v1948 = vpop.f32.mrf.mxu0
        %v1949 = vadd.f32 0.0, %v1948
        %1950 = vmatmul.bf16.gmra.mxu0 %v1200
        %v1951 = vpop.f32.mrf.mxu0
        %v1952 = vadd.f32 0.0, %v1951
        %v1953 = vpop.f32.mrf.mxu0
        %v1954 = vadd.f32 0.0, %v1953
        %1955 = vmatmul.bf16.gmra.mxu0 %v1297
        %v1956 = vpop.f32.mrf.mxu0
        %v1957 = vadd.f32 0.0, %v1956
        %v1958 = vpop.f32.mrf.mxu0
        %v1959 = vadd.f32 0.0, %v1958
        %1960 = vmatmul.bf16.gmra.mxu0 %v1205
        %v1961 = vpop.f32.mrf.mxu0
        %v1962 = vadd.f32 0.0, %v1961
        %v1963 = vpop.f32.mrf.mxu0
        %v1964 = vadd.f32 0.0, %v1963
        %1965 = vmatmul.bf16.gmra.mxu0 %v1298
        %v1966 = vpop.f32.mrf.mxu0
        %v1967 = vadd.f32 0.0, %v1966
        %v1968 = vpop.f32.mrf.mxu0
        %v1969 = vadd.f32 0.0, %v1968
        %1970 = vmatmul.bf16.gmra.mxu0 %v1210
        %v1971 = vpop.f32.mrf.mxu0
        %v1972 = vadd.f32 0.0, %v1971
        %v1973 = vpop.f32.mrf.mxu0
        %v1974 = vadd.f32 0.0, %v1973
        %1975 = vmatmul.bf16.gmra.mxu0 %v1299
        %v1976 = vpop.f32.mrf.mxu0
        %v1977 = vadd.f32 0.0, %v1976
        %v1978 = vpop.f32.mrf.mxu0
        %v1979 = vadd.f32 0.0, %v1978
        %1980 = vmatmul.bf16.gmra.mxu0 %v1215
        %v1981 = vpop.f32.mrf.mxu0
        %v1982 = vadd.f32 0.0, %v1981
        %v1983 = vpop.f32.mrf.mxu0
        %v1984 = vadd.f32 0.0, %v1983
        %1985 = vmatmul.bf16.gmra.mxu0 %v1300
        %v1986 = vpop.f32.mrf.mxu0
        %v1987 = vadd.f32 0.0, %v1986
        %v1988 = vpop.f32.mrf.mxu0
        %v1989 = vadd.f32 0.0, %v1988
        %1990 = vmatmul.bf16.gmra.mxu0 %v1220
        %v1991 = vpop.f32.mrf.mxu0
        %v1992 = vadd.f32 0.0, %v1991
        %v1993 = vpop.f32.mrf.mxu0
        %v1994 = vadd.f32 0.0, %v1993
        %1995 = vmatmul.bf16.gmra.mxu0 %v1301
        %v1996 = vpop.f32.mrf.mxu0
        %v1997 = vadd.f32 0.0, %v1996
        %v1998 = vpop.f32.mrf.mxu0
        %v1999 = vadd.f32 0.0, %v1998
        %2000 = vmatmul.bf16.gmra.mxu0 %v1225
        %v2001 = vpop.f32.mrf.mxu0
        %v2002 = vadd.f32 0.0, %v2001
        %v2003 = vpop.f32.mrf.mxu0
        %v2004 = vadd.f32 0.0, %v2003
        %2005 = vmatmul.bf16.gmra.mxu0 %v1302
        %v2006 = vpop.f32.mrf.mxu0
        %v2007 = vadd.f32 0.0, %v2006
        %v2008 = vpop.f32.mrf.mxu0
        %v2009 = vadd.f32 0.0, %v2008
        %2010 = vmatmul.bf16.gmra.mxu0 %v1230
        %v2011 = vpop.f32.mrf.mxu0
        %v2012 = vadd.f32 0.0, %v2011
        %v2013 = vpop.f32.mrf.mxu0
        %v2014 = vadd.f32 0.0, %v2013
        %2015 = vmatmul.bf16.gmra.mxu0 %v1303
        %v2016 = vpop.f32.mrf.mxu0
        %v2017 = vadd.f32 0.0, %v2016
        %v2018 = vpop.f32.mrf.mxu0
        %v2019 = vadd.f32 0.0, %v2018
        %2020 = vmatmul.bf16.gmra.mxu0 %v1235
        %v2021 = vpop.f32.mrf.mxu0
        %v2022 = vadd.f32 0.0, %v2021
        %v2023 = vpop.f32.mrf.mxu0
        %v2024 = vadd.f32 0.0, %v2023
        %2025 = vmatmul.bf16.gmra.mxu0 %v1304
        %v2026 = vpop.f32.mrf.mxu0
        %v2027 = vadd.f32 0.0, %v2026
        %v2028 = vpop.f32.mrf.mxu0
        %v2029 = vadd.f32 0.0, %v2028
        %2030 = vmatmul.bf16.gmra.mxu0 %v1240
        %v2031 = vpop.f32.mrf.mxu0
        %v2032 = vadd.f32 0.0, %v2031
        %v2033 = vpop.f32.mrf.mxu0
        %v2034 = vadd.f32 0.0, %v2033
        %2035 = vmatmul.bf16.gmra.mxu0 %v1305
        %v2036 = vpop.f32.mrf.mxu0
        %v2037 = vadd.f32 0.0, %v2036
        %v2038 = vpop.f32.mrf.mxu0
        %v2039 = vadd.f32 0.0, %v2038
        %2040 = vdwg.mxu0
        %v2041 = vadd.f32 %v1648, %v1882
        %v2042 = vadd.f32 %v1650, %v1884
        %v2043 = vadd.f32 %v1653, %v1887
        %v2044 = vadd.f32 %v1655, %v1889
        %v2045 = vadd.f32 %v1658, %v1892
        %v2046 = vadd.f32 %v1660, %v1894
        %v2047 = vadd.f32 %v1663, %v1897
        %v2048 = vadd.f32 %v1665, %v1899
        %v2049 = vadd.f32 %v1668, %v1902
        %v2050 = vadd.f32 %v1670, %v1904
        %v2051 = vadd.f32 %v1673, %v1907
        %v2052 = vadd.f32 %v1675, %v1909
        %v2053 = vadd.f32 %v1678, %v1912
        %v2054 = vadd.f32 %v1680, %v1914
        %v2055 = vadd.f32 %v1683, %v1917
        %v2056 = vadd.f32 %v1685, %v1919
        %v2057 = vadd.f32 %v1688, %v1922
        %v2058 = vadd.f32 %v1690, %v1924
        %v2059 = vadd.f32 %v1693, %v1927
        %v2060 = vadd.f32 %v1695, %v1929
        %v2061 = vadd.f32 %v1698, %v1932
        %v2062 = vadd.f32 %v1700, %v1934
        %v2063 = vadd.f32 %v1703, %v1937
        %v2064 = vadd.f32 %v1705, %v1939
        %v2065 = vadd.f32 %v1708, %v1942
        %v2066 = vadd.f32 %v1710, %v1944
        %v2067 = vadd.f32 %v1713, %v1947
        %v2068 = vadd.f32 %v1715, %v1949
        %v2069 = vadd.f32 %v1718, %v1952
        %v2070 = vadd.f32 %v1720, %v1954
        %v2071 = vadd.f32 %v1723, %v1957
        %v2072 = vadd.f32 %v1725, %v1959
        %v2073 = vadd.f32 %v1728, %v1962
        %v2074 = vadd.f32 %v1730, %v1964
        %v2075 = vadd.f32 %v1733, %v1967
        %v2076 = vadd.f32 %v1735, %v1969
        %v2077 = vadd.f32 %v1738, %v1972
        %v2078 = vadd.f32 %v1740, %v1974
        %v2079 = vadd.f32 %v1743, %v1977
        %v2080 = vadd.f32 %v1745, %v1979
        %v2081 = vadd.f32 %v1748, %v1982
        %v2082 = vadd.f32 %v1750, %v1984
        %v2083 = vadd.f32 %v1753, %v1987
        %v2084 = vadd.f32 %v1755, %v1989
        %v2085 = vadd.f32 %v1758, %v1992
        %v2086 = vadd.f32 %v1760, %v1994
        %v2087 = vadd.f32 %v1763, %v1997
        %v2088 = vadd.f32 %v1765, %v1999
        %v2089 = vadd.f32 %v1768, %v2002
        %v2090 = vadd.f32 %v1770, %v2004
        %v2091 = vadd.f32 %v1773, %v2007
        %v2092 = vadd.f32 %v1775, %v2009
        %v2093 = vadd.f32 %v1778, %v2012
        %v2094 = vadd.f32 %v1780, %v2014
        %v2095 = vadd.f32 %v1783, %v2017
        %v2096 = vadd.f32 %v1785, %v2019
        %v2097 = vadd.f32 %v1788, %v2022
        %v2098 = vadd.f32 %v1790, %v2024
        %v2099 = vadd.f32 %v1793, %v2027
        %v2100 = vadd.f32 %v1795, %v2029
        %v2101 = vadd.f32 %v1798, %v2032
        %v2102 = vadd.f32 %v1800, %v2034
        %v2103 = vadd.f32 %v1803, %v2037
        %v2104 = vadd.f32 %v1805, %v2039
        %s2105 = scalar_lea.vmem %s3, 192
        %v2106 = vld [vmem:[%s2105] sm:$0xf]
        %v2107 = vld [vmem:[%s2105 + $0x4] sm:$0xf]
        %v2108 = vld [vmem:[%s2105 + $0x8] sm:$0xf]
        %v2109 = vld [vmem:[%s2105 + $0xc] sm:$0xf]
        %v2110 = vld [vmem:[%s2105 + $0x10] sm:$0xf]
        %v2111 = vld [vmem:[%s2105 + $0x14] sm:$0xf]
        %v2112 = vld [vmem:[%s2105 + $0x18] sm:$0xf]
        %v2113 = vld [vmem:[%s2105 + $0x1c] sm:$0xf]
        %v2114 = vld [vmem:[%s2105 + $0x20] sm:$0xf]
        %v2115 = vld [vmem:[%s2105 + $0x24] sm:$0xf]
        %v2116 = vld [vmem:[%s2105 + $0x28] sm:$0xf]
        %v2117 = vld [vmem:[%s2105 + $0x2c] sm:$0xf]
        %v2118 = vld [vmem:[%s2105 + $0x30] sm:$0xf]
        %v2119 = vld [vmem:[%s2105 + $0x34] sm:$0xf]
        %v2120 = vld [vmem:[%s2105 + $0x38] sm:$0xf]
        %v2121 = vld [vmem:[%s2105 + $0x3c] sm:$0xf]
        %v2138 = vunpack.c.l.b16 %v2106
        %v2139 = vunpack.c.l.b16 %v2107
        %v2140 = vunpack.c.l.b16 %v2108
        %v2141 = vunpack.c.l.b16 %v2109
        %v2142 = vunpack.c.l.b16 %v2110
        %v2143 = vunpack.c.l.b16 %v2111
        %v2144 = vunpack.c.l.b16 %v2112
        %v2145 = vunpack.c.l.b16 %v2113
        %v2146 = vunpack.c.l.b16 %v2114
        %v2147 = vunpack.c.l.b16 %v2115
        %v2148 = vunpack.c.l.b16 %v2116
        %v2149 = vunpack.c.l.b16 %v2117
        %v2150 = vunpack.c.l.b16 %v2118
        %v2151 = vunpack.c.l.b16 %v2119
        %v2152 = vunpack.c.l.b16 %v2120
        %v2153 = vunpack.c.l.b16 %v2121
        %v2154 = vpack.c.b16 %v2139, %v2138
        %v2155 = vpack.c.b16 %v2141, %v2140
        %v2156 = vpack.c.b16 %v2143, %v2142
        %v2157 = vpack.c.b16 %v2145, %v2144
        %v2158 = vpack.c.b16 %v2147, %v2146
        %v2159 = vpack.c.b16 %v2149, %v2148
        %v2160 = vpack.c.b16 %v2151, %v2150
        %v2161 = vpack.c.b16 %v2153, %v2152
        %2170 = vmatpush.bf16.msra.mxu0 %v2161
        %2171 = vmatpush.bf16.msra.mxu0 %v2160
        %2172 = vmatpush.bf16.msra.mxu0 %v2159
        %2173 = vmatpush.bf16.msra.mxu0 %v2158
        %2174 = vmatpush.bf16.msra.mxu0 %v2157
        %2175 = vmatpush.bf16.msra.mxu0 %v2156
        %2176 = vmatpush.bf16.msra.mxu0 %v2155
        %2177 = vmatpush.bf16.msra.mxu0 %v2154
        %2178 = vmatmul.bf16.gmra.mxu0 %v1144
        %v2179 = vpop.f32.mrf.mxu0
        %v2180 = vadd.f32 0.0, %v2179
        %v2181 = vpop.f32.mrf.mxu0
        %v2182 = vadd.f32 0.0, %v2181
        %2183 = vmatmul.bf16.gmra.mxu0 %v864
        %v2184 = vpop.f32.mrf.mxu0
        %v2185 = vadd.f32 0.0, %v2184
        %v2186 = vpop.f32.mrf.mxu0
        %v2187 = vadd.f32 0.0, %v2186
        %2188 = vmatmul.bf16.gmra.mxu0 %v1145
        %v2189 = vpop.f32.mrf.mxu0
        %v2190 = vadd.f32 0.0, %v2189
        %v2191 = vpop.f32.mrf.mxu0
        %v2192 = vadd.f32 0.0, %v2191
        %2193 = vmatmul.bf16.gmra.mxu0 %v879
        %v2194 = vpop.f32.mrf.mxu0
        %v2195 = vadd.f32 0.0, %v2194
        %v2196 = vpop.f32.mrf.mxu0
        %v2197 = vadd.f32 0.0, %v2196
        %2198 = vmatmul.bf16.gmra.mxu0 %v1146
        %v2199 = vpop.f32.mrf.mxu0
        %v2200 = vadd.f32 0.0, %v2199
        %v2201 = vpop.f32.mrf.mxu0
        %v2202 = vadd.f32 0.0, %v2201
        %2203 = vmatmul.bf16.gmra.mxu0 %v894
        %v2204 = vpop.f32.mrf.mxu0
        %v2205 = vadd.f32 0.0, %v2204
        %v2206 = vpop.f32.mrf.mxu0
        %v2207 = vadd.f32 0.0, %v2206
        %2208 = vmatmul.bf16.gmra.mxu0 %v1147
        %v2209 = vpop.f32.mrf.mxu0
        %v2210 = vadd.f32 0.0, %v2209
        %v2211 = vpop.f32.mrf.mxu0
        %v2212 = vadd.f32 0.0, %v2211
        %2213 = vmatmul.bf16.gmra.mxu0 %v909
        %v2214 = vpop.f32.mrf.mxu0
        %v2215 = vadd.f32 0.0, %v2214
        %v2216 = vpop.f32.mrf.mxu0
        %v2217 = vadd.f32 0.0, %v2216
        %2218 = vmatmul.bf16.gmra.mxu0 %v1148
        %v2219 = vpop.f32.mrf.mxu0
        %v2220 = vadd.f32 0.0, %v2219
        %v2221 = vpop.f32.mrf.mxu0
        %v2222 = vadd.f32 0.0, %v2221
        %2223 = vmatmul.bf16.gmra.mxu0 %v924
        %v2224 = vpop.f32.mrf.mxu0
        %v2225 = vadd.f32 0.0, %v2224
        %v2226 = vpop.f32.mrf.mxu0
        %v2227 = vadd.f32 0.0, %v2226
        %2228 = vmatmul.bf16.gmra.mxu0 %v1149
        %v2229 = vpop.f32.mrf.mxu0
        %v2230 = vadd.f32 0.0, %v2229
        %v2231 = vpop.f32.mrf.mxu0
        %v2232 = vadd.f32 0.0, %v2231
        %2233 = vmatmul.bf16.gmra.mxu0 %v939
        %v2234 = vpop.f32.mrf.mxu0
        %v2235 = vadd.f32 0.0, %v2234
        %v2236 = vpop.f32.mrf.mxu0
        %v2237 = vadd.f32 0.0, %v2236
        %2238 = vmatmul.bf16.gmra.mxu0 %v1150
        %v2239 = vpop.f32.mrf.mxu0
        %v2240 = vadd.f32 0.0, %v2239
        %v2241 = vpop.f32.mrf.mxu0
        %v2242 = vadd.f32 0.0, %v2241
        %2243 = vmatmul.bf16.gmra.mxu0 %v954
        %v2244 = vpop.f32.mrf.mxu0
        %v2245 = vadd.f32 0.0, %v2244
        %v2246 = vpop.f32.mrf.mxu0
        %v2247 = vadd.f32 0.0, %v2246
        %2248 = vmatmul.bf16.gmra.mxu0 %v1151
        %v2249 = vpop.f32.mrf.mxu0
        %v2250 = vadd.f32 0.0, %v2249
        %v2251 = vpop.f32.mrf.mxu0
        %v2252 = vadd.f32 0.0, %v2251
        %2253 = vmatmul.bf16.gmra.mxu0 %v969
        %v2254 = vpop.f32.mrf.mxu0
        %v2255 = vadd.f32 0.0, %v2254
        %v2256 = vpop.f32.mrf.mxu0
        %v2257 = vadd.f32 0.0, %v2256
        %2258 = vmatmul.bf16.gmra.mxu0 %v1152
        %v2259 = vpop.f32.mrf.mxu0
        %v2260 = vadd.f32 0.0, %v2259
        %v2261 = vpop.f32.mrf.mxu0
        %v2262 = vadd.f32 0.0, %v2261
        %2263 = vmatmul.bf16.gmra.mxu0 %v984
        %v2264 = vpop.f32.mrf.mxu0
        %v2265 = vadd.f32 0.0, %v2264
        %v2266 = vpop.f32.mrf.mxu0
        %v2267 = vadd.f32 0.0, %v2266
        %2268 = vmatmul.bf16.gmra.mxu0 %v1153
        %v2269 = vpop.f32.mrf.mxu0
        %v2270 = vadd.f32 0.0, %v2269
        %v2271 = vpop.f32.mrf.mxu0
        %v2272 = vadd.f32 0.0, %v2271
        %2273 = vmatmul.bf16.gmra.mxu0 %v999
        %v2274 = vpop.f32.mrf.mxu0
        %v2275 = vadd.f32 0.0, %v2274
        %v2276 = vpop.f32.mrf.mxu0
        %v2277 = vadd.f32 0.0, %v2276
        %2278 = vmatmul.bf16.gmra.mxu0 %v1154
        %v2279 = vpop.f32.mrf.mxu0
        %v2280 = vadd.f32 0.0, %v2279
        %v2281 = vpop.f32.mrf.mxu0
        %v2282 = vadd.f32 0.0, %v2281
        %2283 = vmatmul.bf16.gmra.mxu0 %v1014
        %v2284 = vpop.f32.mrf.mxu0
        %v2285 = vadd.f32 0.0, %v2284
        %v2286 = vpop.f32.mrf.mxu0
        %v2287 = vadd.f32 0.0, %v2286
        %2288 = vmatmul.bf16.gmra.mxu0 %v1155
        %v2289 = vpop.f32.mrf.mxu0
        %v2290 = vadd.f32 0.0, %v2289
        %v2291 = vpop.f32.mrf.mxu0
        %v2292 = vadd.f32 0.0, %v2291
        %2293 = vmatmul.bf16.gmra.mxu0 %v1029
        %v2294 = vpop.f32.mrf.mxu0
        %v2295 = vadd.f32 0.0, %v2294
        %v2296 = vpop.f32.mrf.mxu0
        %v2297 = vadd.f32 0.0, %v2296
        %2298 = vmatmul.bf16.gmra.mxu0 %v1156
        %v2299 = vpop.f32.mrf.mxu0
        %v2300 = vadd.f32 0.0, %v2299
        %v2301 = vpop.f32.mrf.mxu0
        %v2302 = vadd.f32 0.0, %v2301
        %2303 = vmatmul.bf16.gmra.mxu0 %v1044
        %v2304 = vpop.f32.mrf.mxu0
        %v2305 = vadd.f32 0.0, %v2304
        %v2306 = vpop.f32.mrf.mxu0
        %v2307 = vadd.f32 0.0, %v2306
        %2308 = vmatmul.bf16.gmra.mxu0 %v1157
        %v2309 = vpop.f32.mrf.mxu0
        %v2310 = vadd.f32 0.0, %v2309
        %v2311 = vpop.f32.mrf.mxu0
        %v2312 = vadd.f32 0.0, %v2311
        %2313 = vmatmul.bf16.gmra.mxu0 %v1059
        %v2314 = vpop.f32.mrf.mxu0
        %v2315 = vadd.f32 0.0, %v2314
        %v2316 = vpop.f32.mrf.mxu0
        %v2317 = vadd.f32 0.0, %v2316
        %2318 = vmatmul.bf16.gmra.mxu0 %v1158
        %v2319 = vpop.f32.mrf.mxu0
        %v2320 = vadd.f32 0.0, %v2319
        %v2321 = vpop.f32.mrf.mxu0
        %v2322 = vadd.f32 0.0, %v2321
        %2323 = vmatmul.bf16.gmra.mxu0 %v1074
        %v2324 = vpop.f32.mrf.mxu0
        %v2325 = vadd.f32 0.0, %v2324
        %v2326 = vpop.f32.mrf.mxu0
        %v2327 = vadd.f32 0.0, %v2326
        %2328 = vmatmul.bf16.gmra.mxu0 %v1159
        %v2329 = vpop.f32.mrf.mxu0
        %v2330 = vadd.f32 0.0, %v2329
        %v2331 = vpop.f32.mrf.mxu0
        %v2332 = vadd.f32 0.0, %v2331
        %2333 = vmatmul.bf16.gmra.mxu0 %v1089
        %v2334 = vpop.f32.mrf.mxu0
        %v2335 = vadd.f32 0.0, %v2334
        %v2336 = vpop.f32.mrf.mxu0
        %v2337 = vadd.f32 0.0, %v2336
        %2338 = vdwg.mxu0
        %v2339 = vadd.f32 %v2041, %v2180
        %v2340 = vadd.f32 %v2042, %v2182
        %v2341 = vadd.f32 %v2043, %v2185
        %v2342 = vadd.f32 %v2044, %v2187
        %v2343 = vadd.f32 %v2045, %v2190
        %v2344 = vadd.f32 %v2046, %v2192
        %v2345 = vadd.f32 %v2047, %v2195
        %v2346 = vadd.f32 %v2048, %v2197
        %v2347 = vadd.f32 %v2049, %v2200
        %v2348 = vadd.f32 %v2050, %v2202
        %v2349 = vadd.f32 %v2051, %v2205
        %v2350 = vadd.f32 %v2052, %v2207
        %v2351 = vadd.f32 %v2053, %v2210
        %v2352 = vadd.f32 %v2054, %v2212
        %v2353 = vadd.f32 %v2055, %v2215
        %v2354 = vadd.f32 %v2056, %v2217
        %v2355 = vadd.f32 %v2057, %v2220
        %v2356 = vadd.f32 %v2058, %v2222
        %v2357 = vadd.f32 %v2059, %v2225
        %v2358 = vadd.f32 %v2060, %v2227
        %v2359 = vadd.f32 %v2061, %v2230
        %v2360 = vadd.f32 %v2062, %v2232
        %v2361 = vadd.f32 %v2063, %v2235
        %v2362 = vadd.f32 %v2064, %v2237
        %v2363 = vadd.f32 %v2065, %v2240
        %v2364 = vadd.f32 %v2066, %v2242
        %v2365 = vadd.f32 %v2067, %v2245
        %v2366 = vadd.f32 %v2068, %v2247
        %v2367 = vadd.f32 %v2069, %v2250
        %v2368 = vadd.f32 %v2070, %v2252
        %v2369 = vadd.f32 %v2071, %v2255
        %v2370 = vadd.f32 %v2072, %v2257
        %v2371 = vadd.f32 %v2073, %v2260
        %v2372 = vadd.f32 %v2074, %v2262
        %v2373 = vadd.f32 %v2075, %v2265
        %v2374 = vadd.f32 %v2076, %v2267
        %v2375 = vadd.f32 %v2077, %v2270
        %v2376 = vadd.f32 %v2078, %v2272
        %v2377 = vadd.f32 %v2079, %v2275
        %v2378 = vadd.f32 %v2080, %v2277
        %v2379 = vadd.f32 %v2081, %v2280
        %v2380 = vadd.f32 %v2082, %v2282
        %v2381 = vadd.f32 %v2083, %v2285
        %v2382 = vadd.f32 %v2084, %v2287
        %v2383 = vadd.f32 %v2085, %v2290
        %v2384 = vadd.f32 %v2086, %v2292
        %v2385 = vadd.f32 %v2087, %v2295
        %v2386 = vadd.f32 %v2088, %v2297
        %v2387 = vadd.f32 %v2089, %v2300
        %v2388 = vadd.f32 %v2090, %v2302
        %v2389 = vadd.f32 %v2091, %v2305
        %v2390 = vadd.f32 %v2092, %v2307
        %v2391 = vadd.f32 %v2093, %v2310
        %v2392 = vadd.f32 %v2094, %v2312
        %v2393 = vadd.f32 %v2095, %v2315
        %v2394 = vadd.f32 %v2096, %v2317
        %v2395 = vadd.f32 %v2097, %v2320
        %v2396 = vadd.f32 %v2098, %v2322
        %v2397 = vadd.f32 %v2099, %v2325
        %v2398 = vadd.f32 %v2100, %v2327
        %v2399 = vadd.f32 %v2101, %v2330
        %v2400 = vadd.f32 %v2102, %v2332
        %v2401 = vadd.f32 %v2103, %v2335
        %v2402 = vadd.f32 %v2104, %v2337
        %s2403 = scalar_lea.vmem %s3, 256
        %v2404 = vld [vmem:[%s2403] sm:$0xf]
        %v2405 = vld [vmem:[%s2403 + $0x4] sm:$0xf]
        %v2406 = vld [vmem:[%s2403 + $0x8] sm:$0xf]
        %v2407 = vld [vmem:[%s2403 + $0xc] sm:$0xf]
        %v2408 = vld [vmem:[%s2403 + $0x10] sm:$0xf]
        %v2409 = vld [vmem:[%s2403 + $0x14] sm:$0xf]
        %v2410 = vld [vmem:[%s2403 + $0x18] sm:$0xf]
        %v2411 = vld [vmem:[%s2403 + $0x1c] sm:$0xf]
        %v2412 = vld [vmem:[%s2403 + $0x20] sm:$0xf]
        %v2413 = vld [vmem:[%s2403 + $0x24] sm:$0xf]
        %v2414 = vld [vmem:[%s2403 + $0x28] sm:$0xf]
        %v2415 = vld [vmem:[%s2403 + $0x2c] sm:$0xf]
        %v2416 = vld [vmem:[%s2403 + $0x30] sm:$0xf]
        %v2417 = vld [vmem:[%s2403 + $0x34] sm:$0xf]
        %v2418 = vld [vmem:[%s2403 + $0x38] sm:$0xf]
        %v2419 = vld [vmem:[%s2403 + $0x3c] sm:$0xf]
        %v2438 = vunpack.c.l.b16 %v2404
        %v2439 = vunpack.c.l.b16 %v2405
        %v2440 = vunpack.c.l.b16 %v2406
        %v2441 = vunpack.c.l.b16 %v2407
        %v2442 = vunpack.c.l.b16 %v2408
        %v2443 = vunpack.c.l.b16 %v2409
        %v2444 = vunpack.c.l.b16 %v2410
        %v2445 = vunpack.c.l.b16 %v2411
        %v2446 = vunpack.c.l.b16 %v2412
        %v2447 = vunpack.c.l.b16 %v2413
        %v2448 = vunpack.c.l.b16 %v2414
        %v2449 = vunpack.c.l.b16 %v2415
        %v2450 = vunpack.c.l.b16 %v2416
        %v2451 = vunpack.c.l.b16 %v2417
        %v2452 = vunpack.c.l.b16 %v2418
        %v2453 = vunpack.c.l.b16 %v2419
        %v2454 = vpack.c.b16 %v2439, %v2438
        %v2455 = vpack.c.b16 %v2441, %v2440
        %v2456 = vpack.c.b16 %v2443, %v2442
        %v2457 = vpack.c.b16 %v2445, %v2444
        %v2458 = vpack.c.b16 %v2447, %v2446
        %v2459 = vpack.c.b16 %v2449, %v2448
        %v2460 = vpack.c.b16 %v2451, %v2450
        %v2461 = vpack.c.b16 %v2453, %v2452
        %2470 = vmatpush.bf16.msra.mxu0 %v2461
        %2471 = vmatpush.bf16.msra.mxu0 %v2460
        %2472 = vmatpush.bf16.msra.mxu0 %v2459
        %2473 = vmatpush.bf16.msra.mxu0 %v2458
        %2474 = vmatpush.bf16.msra.mxu0 %v2457
        %2475 = vmatpush.bf16.msra.mxu0 %v2456
        %2476 = vmatpush.bf16.msra.mxu0 %v2455
        %2477 = vmatpush.bf16.msra.mxu0 %v2454
        %2478 = vmatmul.bf16.gmra.mxu0 %v800
        %v2479 = vpop.f32.mrf.mxu0
        %v2480 = vadd.f32 0.0, %v2479
        %v2481 = vpop.f32.mrf.mxu0
        %v2482 = vadd.f32 0.0, %v2481
        %2483 = vmatmul.bf16.gmra.mxu0 %v801
        %v2484 = vpop.f32.mrf.mxu0
        %v2485 = vadd.f32 0.0, %v2484
        %v2486 = vpop.f32.mrf.mxu0
        %v2487 = vadd.f32 0.0, %v2486
        %2488 = vmatmul.bf16.gmra.mxu0 %v802
        %v2489 = vpop.f32.mrf.mxu0
        %v2490 = vadd.f32 0.0, %v2489
        %v2491 = vpop.f32.mrf.mxu0
        %v2492 = vadd.f32 0.0, %v2491
        %2493 = vmatmul.bf16.gmra.mxu0 %v803
        %v2494 = vpop.f32.mrf.mxu0
        %v2495 = vadd.f32 0.0, %v2494
        %v2496 = vpop.f32.mrf.mxu0
        %v2497 = vadd.f32 0.0, %v2496
        %2498 = vmatmul.bf16.gmra.mxu0 %v804
        %v2499 = vpop.f32.mrf.mxu0
        %v2500 = vadd.f32 0.0, %v2499
        %v2501 = vpop.f32.mrf.mxu0
        %v2502 = vadd.f32 0.0, %v2501
        %2503 = vmatmul.bf16.gmra.mxu0 %v805
        %v2504 = vpop.f32.mrf.mxu0
        %v2505 = vadd.f32 0.0, %v2504
        %v2506 = vpop.f32.mrf.mxu0
        %v2507 = vadd.f32 0.0, %v2506
        %2508 = vmatmul.bf16.gmra.mxu0 %v806
        %v2509 = vpop.f32.mrf.mxu0
        %v2510 = vadd.f32 0.0, %v2509
        %v2511 = vpop.f32.mrf.mxu0
        %v2512 = vadd.f32 0.0, %v2511
        %2513 = vmatmul.bf16.gmra.mxu0 %v807
        %v2514 = vpop.f32.mrf.mxu0
        %v2515 = vadd.f32 0.0, %v2514
        %v2516 = vpop.f32.mrf.mxu0
        %v2517 = vadd.f32 0.0, %v2516
        %2518 = vmatmul.bf16.gmra.mxu0 %v808
        %v2519 = vpop.f32.mrf.mxu0
        %v2520 = vadd.f32 0.0, %v2519
        %v2521 = vpop.f32.mrf.mxu0
        %v2522 = vadd.f32 0.0, %v2521
        %2523 = vmatmul.bf16.gmra.mxu0 %v809
        %v2524 = vpop.f32.mrf.mxu0
        %v2525 = vadd.f32 0.0, %v2524
        %v2526 = vpop.f32.mrf.mxu0
        %v2527 = vadd.f32 0.0, %v2526
        %2528 = vmatmul.bf16.gmra.mxu0 %v810
        %v2529 = vpop.f32.mrf.mxu0
        %v2530 = vadd.f32 0.0, %v2529
        %v2531 = vpop.f32.mrf.mxu0
        %v2532 = vadd.f32 0.0, %v2531
        %2533 = vmatmul.bf16.gmra.mxu0 %v811
        %v2534 = vpop.f32.mrf.mxu0
        %v2535 = vadd.f32 0.0, %v2534
        %v2536 = vpop.f32.mrf.mxu0
        %v2537 = vadd.f32 0.0, %v2536
        %2538 = vmatmul.bf16.gmra.mxu0 %v812
        %v2539 = vpop.f32.mrf.mxu0
        %v2540 = vadd.f32 0.0, %v2539
        %v2541 = vpop.f32.mrf.mxu0
        %v2542 = vadd.f32 0.0, %v2541
        %2543 = vmatmul.bf16.gmra.mxu0 %v813
        %v2544 = vpop.f32.mrf.mxu0
        %v2545 = vadd.f32 0.0, %v2544
        %v2546 = vpop.f32.mrf.mxu0
        %v2547 = vadd.f32 0.0, %v2546
        %2548 = vmatmul.bf16.gmra.mxu0 %v814
        %v2549 = vpop.f32.mrf.mxu0
        %v2550 = vadd.f32 0.0, %v2549
        %v2551 = vpop.f32.mrf.mxu0
        %v2552 = vadd.f32 0.0, %v2551
        %2553 = vmatmul.bf16.gmra.mxu0 %v815
        %v2554 = vpop.f32.mrf.mxu0
        %v2555 = vadd.f32 0.0, %v2554
        %v2556 = vpop.f32.mrf.mxu0
        %v2557 = vadd.f32 0.0, %v2556
        %2558 = vmatmul.bf16.gmra.mxu0 %v816
        %v2559 = vpop.f32.mrf.mxu0
        %v2560 = vadd.f32 0.0, %v2559
        %v2561 = vpop.f32.mrf.mxu0
        %v2562 = vadd.f32 0.0, %v2561
        %2563 = vmatmul.bf16.gmra.mxu0 %v817
        %v2564 = vpop.f32.mrf.mxu0
        %v2565 = vadd.f32 0.0, %v2564
        %v2566 = vpop.f32.mrf.mxu0
        %v2567 = vadd.f32 0.0, %v2566
        %2568 = vmatmul.bf16.gmra.mxu0 %v818
        %v2569 = vpop.f32.mrf.mxu0
        %v2570 = vadd.f32 0.0, %v2569
        %v2571 = vpop.f32.mrf.mxu0
        %v2572 = vadd.f32 0.0, %v2571
        %2573 = vmatmul.bf16.gmra.mxu0 %v819
        %v2574 = vpop.f32.mrf.mxu0
        %v2575 = vadd.f32 0.0, %v2574
        %v2576 = vpop.f32.mrf.mxu0
        %v2577 = vadd.f32 0.0, %v2576
        %2578 = vmatmul.bf16.gmra.mxu0 %v820
        %v2579 = vpop.f32.mrf.mxu0
        %v2580 = vadd.f32 0.0, %v2579
        %v2581 = vpop.f32.mrf.mxu0
        %v2582 = vadd.f32 0.0, %v2581
        %2583 = vmatmul.bf16.gmra.mxu0 %v821
        %v2584 = vpop.f32.mrf.mxu0
        %v2585 = vadd.f32 0.0, %v2584
        %v2586 = vpop.f32.mrf.mxu0
        %v2587 = vadd.f32 0.0, %v2586
        %2588 = vmatmul.bf16.gmra.mxu0 %v822
        %v2589 = vpop.f32.mrf.mxu0
        %v2590 = vadd.f32 0.0, %v2589
        %v2591 = vpop.f32.mrf.mxu0
        %v2592 = vadd.f32 0.0, %v2591
        %2593 = vmatmul.bf16.gmra.mxu0 %v823
        %v2594 = vpop.f32.mrf.mxu0
        %v2595 = vadd.f32 0.0, %v2594
        %v2596 = vpop.f32.mrf.mxu0
        %v2597 = vadd.f32 0.0, %v2596
        %2598 = vmatmul.bf16.gmra.mxu0 %v824
        %v2599 = vpop.f32.mrf.mxu0
        %v2600 = vadd.f32 0.0, %v2599
        %v2601 = vpop.f32.mrf.mxu0
        %v2602 = vadd.f32 0.0, %v2601
        %2603 = vmatmul.bf16.gmra.mxu0 %v825
        %v2604 = vpop.f32.mrf.mxu0
        %v2605 = vadd.f32 0.0, %v2604
        %v2606 = vpop.f32.mrf.mxu0
        %v2607 = vadd.f32 0.0, %v2606
        %2608 = vmatmul.bf16.gmra.mxu0 %v826
        %v2609 = vpop.f32.mrf.mxu0
        %v2610 = vadd.f32 0.0, %v2609
        %v2611 = vpop.f32.mrf.mxu0
        %v2612 = vadd.f32 0.0, %v2611
        %2613 = vmatmul.bf16.gmra.mxu0 %v827
        %v2614 = vpop.f32.mrf.mxu0
        %v2615 = vadd.f32 0.0, %v2614
        %v2616 = vpop.f32.mrf.mxu0
        %v2617 = vadd.f32 0.0, %v2616
        %2618 = vmatmul.bf16.gmra.mxu0 %v828
        %v2619 = vpop.f32.mrf.mxu0
        %v2620 = vadd.f32 0.0, %v2619
        %v2621 = vpop.f32.mrf.mxu0
        %v2622 = vadd.f32 0.0, %v2621
        %2623 = vmatmul.bf16.gmra.mxu0 %v829
        %v2624 = vpop.f32.mrf.mxu0
        %v2625 = vadd.f32 0.0, %v2624
        %v2626 = vpop.f32.mrf.mxu0
        %v2627 = vadd.f32 0.0, %v2626
        %2628 = vmatmul.bf16.gmra.mxu0 %v830
        %v2629 = vpop.f32.mrf.mxu0
        %v2630 = vadd.f32 0.0, %v2629
        %v2631 = vpop.f32.mrf.mxu0
        %v2632 = vadd.f32 0.0, %v2631
        %2633 = vmatmul.bf16.gmra.mxu0 %v831
        %v2634 = vpop.f32.mrf.mxu0
        %v2635 = vadd.f32 0.0, %v2634
        %v2636 = vpop.f32.mrf.mxu0
        %v2637 = vadd.f32 0.0, %v2636
        %2638 = vdwg.mxu0
        %v2639 = vadd.f32 %v2339, %v2480
        %v2640 = vadd.f32 %v2340, %v2482
        %v2641 = vadd.f32 %v2341, %v2485
        %v2642 = vadd.f32 %v2342, %v2487
        %v2643 = vadd.f32 %v2343, %v2490
        %v2644 = vadd.f32 %v2344, %v2492
        %v2645 = vadd.f32 %v2345, %v2495
        %v2646 = vadd.f32 %v2346, %v2497
        %v2647 = vadd.f32 %v2347, %v2500
        %v2648 = vadd.f32 %v2348, %v2502
        %v2649 = vadd.f32 %v2349, %v2505
        %v2650 = vadd.f32 %v2350, %v2507
        %v2651 = vadd.f32 %v2351, %v2510
        %v2652 = vadd.f32 %v2352, %v2512
        %v2653 = vadd.f32 %v2353, %v2515
        %v2654 = vadd.f32 %v2354, %v2517
        %v2655 = vadd.f32 %v2355, %v2520
        %v2656 = vadd.f32 %v2356, %v2522
        %v2657 = vadd.f32 %v2357, %v2525
        %v2658 = vadd.f32 %v2358, %v2527
        %v2659 = vadd.f32 %v2359, %v2530
        %v2660 = vadd.f32 %v2360, %v2532
        %v2661 = vadd.f32 %v2361, %v2535
        %v2662 = vadd.f32 %v2362, %v2537
        %v2663 = vadd.f32 %v2363, %v2540
        %v2664 = vadd.f32 %v2364, %v2542
        %v2665 = vadd.f32 %v2365, %v2545
        %v2666 = vadd.f32 %v2366, %v2547
        %v2667 = vadd.f32 %v2367, %v2550
        %v2668 = vadd.f32 %v2368, %v2552
        %v2669 = vadd.f32 %v2369, %v2555
        %v2670 = vadd.f32 %v2370, %v2557
        %v2671 = vadd.f32 %v2371, %v2560
        %v2672 = vadd.f32 %v2372, %v2562
        %v2673 = vadd.f32 %v2373, %v2565
        %v2674 = vadd.f32 %v2374, %v2567
        %v2675 = vadd.f32 %v2375, %v2570
        %v2676 = vadd.f32 %v2376, %v2572
        %v2677 = vadd.f32 %v2377, %v2575
        %v2678 = vadd.f32 %v2378, %v2577
        %v2679 = vadd.f32 %v2379, %v2580
        %v2680 = vadd.f32 %v2380, %v2582
        %v2681 = vadd.f32 %v2381, %v2585
        %v2682 = vadd.f32 %v2382, %v2587
        %v2683 = vadd.f32 %v2383, %v2590
        %v2684 = vadd.f32 %v2384, %v2592
        %v2685 = vadd.f32 %v2385, %v2595
        %v2686 = vadd.f32 %v2386, %v2597
        %v2687 = vadd.f32 %v2387, %v2600
        %v2688 = vadd.f32 %v2388, %v2602
        %v2689 = vadd.f32 %v2389, %v2605
        %v2690 = vadd.f32 %v2390, %v2607
        %v2691 = vadd.f32 %v2391, %v2610
        %v2692 = vadd.f32 %v2392, %v2612
        %v2693 = vadd.f32 %v2393, %v2615
        %v2694 = vadd.f32 %v2394, %v2617
        %v2695 = vadd.f32 %v2395, %v2620
        %v2696 = vadd.f32 %v2396, %v2622
        %v2697 = vadd.f32 %v2397, %v2625
        %v2698 = vadd.f32 %v2398, %v2627
        %v2699 = vadd.f32 %v2399, %v2630
        %v2700 = vadd.f32 %v2400, %v2632
        %v2701 = vadd.f32 %v2401, %v2635
        %v2702 = vadd.f32 %v2402, %v2637
        %s2703 = scalar_lea.vmem %s3, 320
        %v2704 = vld [vmem:[%s2703] sm:$0xf]
        %v2705 = vld [vmem:[%s2703 + $0x4] sm:$0xf]
        %v2706 = vld [vmem:[%s2703 + $0x8] sm:$0xf]
        %v2707 = vld [vmem:[%s2703 + $0xc] sm:$0xf]
        %v2708 = vld [vmem:[%s2703 + $0x10] sm:$0xf]
        %v2709 = vld [vmem:[%s2703 + $0x14] sm:$0xf]
        %v2710 = vld [vmem:[%s2703 + $0x18] sm:$0xf]
        %v2711 = vld [vmem:[%s2703 + $0x1c] sm:$0xf]
        %v2712 = vld [vmem:[%s2703 + $0x20] sm:$0xf]
        %v2713 = vld [vmem:[%s2703 + $0x24] sm:$0xf]
        %v2714 = vld [vmem:[%s2703 + $0x28] sm:$0xf]
        %v2715 = vld [vmem:[%s2703 + $0x2c] sm:$0xf]
        %v2716 = vld [vmem:[%s2703 + $0x30] sm:$0xf]
        %v2717 = vld [vmem:[%s2703 + $0x34] sm:$0xf]
        %v2718 = vld [vmem:[%s2703 + $0x38] sm:$0xf]
        %v2719 = vld [vmem:[%s2703 + $0x3c] sm:$0xf]
        %v2736 = vunpack.c.l.b16 %v2704
        %v2737 = vunpack.c.l.b16 %v2705
        %v2738 = vunpack.c.l.b16 %v2706
        %v2739 = vunpack.c.l.b16 %v2707
        %v2740 = vunpack.c.l.b16 %v2708
        %v2741 = vunpack.c.l.b16 %v2709
        %v2742 = vunpack.c.l.b16 %v2710
        %v2743 = vunpack.c.l.b16 %v2711
        %v2744 = vunpack.c.l.b16 %v2712
        %v2745 = vunpack.c.l.b16 %v2713
        %v2746 = vunpack.c.l.b16 %v2714
        %v2747 = vunpack.c.l.b16 %v2715
        %v2748 = vunpack.c.l.b16 %v2716
        %v2749 = vunpack.c.l.b16 %v2717
        %v2750 = vunpack.c.l.b16 %v2718
        %v2751 = vunpack.c.l.b16 %v2719
        %v2752 = vpack.c.b16 %v2737, %v2736
        %v2753 = vpack.c.b16 %v2739, %v2738
        %v2754 = vpack.c.b16 %v2741, %v2740
        %v2755 = vpack.c.b16 %v2743, %v2742
        %v2756 = vpack.c.b16 %v2745, %v2744
        %v2757 = vpack.c.b16 %v2747, %v2746
        %v2758 = vpack.c.b16 %v2749, %v2748
        %v2759 = vpack.c.b16 %v2751, %v2750
        %2768 = vmatpush.bf16.msra.mxu0 %v2759
        %2769 = vmatpush.bf16.msra.mxu0 %v2758
        %2770 = vmatpush.bf16.msra.mxu0 %v2757
        %2771 = vmatpush.bf16.msra.mxu0 %v2756
        %2772 = vmatpush.bf16.msra.mxu0 %v2755
        %2773 = vmatpush.bf16.msra.mxu0 %v2754
        %2774 = vmatpush.bf16.msra.mxu0 %v2753
        %2775 = vmatpush.bf16.msra.mxu0 %v2752
        %2776 = vmatmul.bf16.gmra.mxu0 %v1170
        %v2777 = vpop.f32.mrf.mxu0
        %v2778 = vadd.f32 0.0, %v2777
        %v2779 = vpop.f32.mrf.mxu0
        %v2780 = vadd.f32 0.0, %v2779
        %2781 = vmatmul.bf16.gmra.mxu0 %v1291
        %v2782 = vpop.f32.mrf.mxu0
        %v2783 = vadd.f32 0.0, %v2782
        %v2784 = vpop.f32.mrf.mxu0
        %v2785 = vadd.f32 0.0, %v2784
        %2786 = vmatmul.bf16.gmra.mxu0 %v1175
        %v2787 = vpop.f32.mrf.mxu0
        %v2788 = vadd.f32 0.0, %v2787
        %v2789 = vpop.f32.mrf.mxu0
        %v2790 = vadd.f32 0.0, %v2789
        %2791 = vmatmul.bf16.gmra.mxu0 %v1292
        %v2792 = vpop.f32.mrf.mxu0
        %v2793 = vadd.f32 0.0, %v2792
        %v2794 = vpop.f32.mrf.mxu0
        %v2795 = vadd.f32 0.0, %v2794
        %2796 = vmatmul.bf16.gmra.mxu0 %v1180
        %v2797 = vpop.f32.mrf.mxu0
        %v2798 = vadd.f32 0.0, %v2797
        %v2799 = vpop.f32.mrf.mxu0
        %v2800 = vadd.f32 0.0, %v2799
        %2801 = vmatmul.bf16.gmra.mxu0 %v1293
        %v2802 = vpop.f32.mrf.mxu0
        %v2803 = vadd.f32 0.0, %v2802
        %v2804 = vpop.f32.mrf.mxu0
        %v2805 = vadd.f32 0.0, %v2804
        %2806 = vmatmul.bf16.gmra.mxu0 %v1185
        %v2807 = vpop.f32.mrf.mxu0
        %v2808 = vadd.f32 0.0, %v2807
        %v2809 = vpop.f32.mrf.mxu0
        %v2810 = vadd.f32 0.0, %v2809
        %2811 = vmatmul.bf16.gmra.mxu0 %v1294
        %v2812 = vpop.f32.mrf.mxu0
        %v2813 = vadd.f32 0.0, %v2812
        %v2814 = vpop.f32.mrf.mxu0
        %v2815 = vadd.f32 0.0, %v2814
        %2816 = vmatmul.bf16.gmra.mxu0 %v1190
        %v2817 = vpop.f32.mrf.mxu0
        %v2818 = vadd.f32 0.0, %v2817
        %v2819 = vpop.f32.mrf.mxu0
        %v2820 = vadd.f32 0.0, %v2819
        %2821 = vmatmul.bf16.gmra.mxu0 %v1295
        %v2822 = vpop.f32.mrf.mxu0
        %v2823 = vadd.f32 0.0, %v2822
        %v2824 = vpop.f32.mrf.mxu0
        %v2825 = vadd.f32 0.0, %v2824
        %2826 = vmatmul.bf16.gmra.mxu0 %v1195
        %v2827 = vpop.f32.mrf.mxu0
        %v2828 = vadd.f32 0.0, %v2827
        %v2829 = vpop.f32.mrf.mxu0
        %v2830 = vadd.f32 0.0, %v2829
        %2831 = vmatmul.bf16.gmra.mxu0 %v1296
        %v2832 = vpop.f32.mrf.mxu0
        %v2833 = vadd.f32 0.0, %v2832
        %v2834 = vpop.f32.mrf.mxu0
        %v2835 = vadd.f32 0.0, %v2834
        %2836 = vmatmul.bf16.gmra.mxu0 %v1200
        %v2837 = vpop.f32.mrf.mxu0
        %v2838 = vadd.f32 0.0, %v2837
        %v2839 = vpop.f32.mrf.mxu0
        %v2840 = vadd.f32 0.0, %v2839
        %2841 = vmatmul.bf16.gmra.mxu0 %v1297
        %v2842 = vpop.f32.mrf.mxu0
        %v2843 = vadd.f32 0.0, %v2842
        %v2844 = vpop.f32.mrf.mxu0
        %v2845 = vadd.f32 0.0, %v2844
        %2846 = vmatmul.bf16.gmra.mxu0 %v1205
        %v2847 = vpop.f32.mrf.mxu0
        %v2848 = vadd.f32 0.0, %v2847
        %v2849 = vpop.f32.mrf.mxu0
        %v2850 = vadd.f32 0.0, %v2849
        %2851 = vmatmul.bf16.gmra.mxu0 %v1298
        %v2852 = vpop.f32.mrf.mxu0
        %v2853 = vadd.f32 0.0, %v2852
        %v2854 = vpop.f32.mrf.mxu0
        %v2855 = vadd.f32 0.0, %v2854
        %2856 = vmatmul.bf16.gmra.mxu0 %v1210
        %v2857 = vpop.f32.mrf.mxu0
        %v2858 = vadd.f32 0.0, %v2857
        %v2859 = vpop.f32.mrf.mxu0
        %v2860 = vadd.f32 0.0, %v2859
        %2861 = vmatmul.bf16.gmra.mxu0 %v1299
        %v2862 = vpop.f32.mrf.mxu0
        %v2863 = vadd.f32 0.0, %v2862
        %v2864 = vpop.f32.mrf.mxu0
        %v2865 = vadd.f32 0.0, %v2864
        %2866 = vmatmul.bf16.gmra.mxu0 %v1215
        %v2867 = vpop.f32.mrf.mxu0
        %v2868 = vadd.f32 0.0, %v2867
        %v2869 = vpop.f32.mrf.mxu0
        %v2870 = vadd.f32 0.0, %v2869
        %2871 = vmatmul.bf16.gmra.mxu0 %v1300
        %v2872 = vpop.f32.mrf.mxu0
        %v2873 = vadd.f32 0.0, %v2872
        %v2874 = vpop.f32.mrf.mxu0
        %v2875 = vadd.f32 0.0, %v2874
        %2876 = vmatmul.bf16.gmra.mxu0 %v1220
        %v2877 = vpop.f32.mrf.mxu0
        %v2878 = vadd.f32 0.0, %v2877
        %v2879 = vpop.f32.mrf.mxu0
        %v2880 = vadd.f32 0.0, %v2879
        %2881 = vmatmul.bf16.gmra.mxu0 %v1301
        %v2882 = vpop.f32.mrf.mxu0
        %v2883 = vadd.f32 0.0, %v2882
        %v2884 = vpop.f32.mrf.mxu0
        %v2885 = vadd.f32 0.0, %v2884
        %2886 = vmatmul.bf16.gmra.mxu0 %v1225
        %v2887 = vpop.f32.mrf.mxu0
        %v2888 = vadd.f32 0.0, %v2887
        %v2889 = vpop.f32.mrf.mxu0
        %v2890 = vadd.f32 0.0, %v2889
        %2891 = vmatmul.bf16.gmra.mxu0 %v1302
        %v2892 = vpop.f32.mrf.mxu0
        %v2893 = vadd.f32 0.0, %v2892
        %v2894 = vpop.f32.mrf.mxu0
        %v2895 = vadd.f32 0.0, %v2894
        %2896 = vmatmul.bf16.gmra.mxu0 %v1230
        %v2897 = vpop.f32.mrf.mxu0
        %v2898 = vadd.f32 0.0, %v2897
        %v2899 = vpop.f32.mrf.mxu0
        %v2900 = vadd.f32 0.0, %v2899
        %2901 = vmatmul.bf16.gmra.mxu0 %v1303
        %v2902 = vpop.f32.mrf.mxu0
        %v2903 = vadd.f32 0.0, %v2902
        %v2904 = vpop.f32.mrf.mxu0
        %v2905 = vadd.f32 0.0, %v2904
        %2906 = vmatmul.bf16.gmra.mxu0 %v1235
        %v2907 = vpop.f32.mrf.mxu0
        %v2908 = vadd.f32 0.0, %v2907
        %v2909 = vpop.f32.mrf.mxu0
        %v2910 = vadd.f32 0.0, %v2909
        %2911 = vmatmul.bf16.gmra.mxu0 %v1304
        %v2912 = vpop.f32.mrf.mxu0
        %v2913 = vadd.f32 0.0, %v2912
        %v2914 = vpop.f32.mrf.mxu0
        %v2915 = vadd.f32 0.0, %v2914
        %2916 = vmatmul.bf16.gmra.mxu0 %v1240
        %v2917 = vpop.f32.mrf.mxu0
        %v2918 = vadd.f32 0.0, %v2917
        %v2919 = vpop.f32.mrf.mxu0
        %v2920 = vadd.f32 0.0, %v2919
        %2921 = vmatmul.bf16.gmra.mxu0 %v1305
        %v2922 = vpop.f32.mrf.mxu0
        %v2923 = vadd.f32 0.0, %v2922
        %v2924 = vpop.f32.mrf.mxu0
        %v2925 = vadd.f32 0.0, %v2924
        %2926 = vmatmul.bf16.gmra.mxu0 %v1245
        %v2927 = vpop.f32.mrf.mxu0
        %v2928 = vadd.f32 0.0, %v2927
        %v2929 = vpop.f32.mrf.mxu0
        %v2930 = vadd.f32 0.0, %v2929
        %2931 = vmatmul.bf16.gmra.mxu0 %v1306
        %v2932 = vpop.f32.mrf.mxu0
        %v2933 = vadd.f32 0.0, %v2932
        %v2934 = vpop.f32.mrf.mxu0
        %v2935 = vadd.f32 0.0, %v2934
        %2936 = vdwg.mxu0
        %v2937 = vadd.f32 %v2639, %v2778
        %v2938 = vadd.f32 %v2640, %v2780
        %v2939 = vadd.f32 %v2641, %v2783
        %v2940 = vadd.f32 %v2642, %v2785
        %v2941 = vadd.f32 %v2643, %v2788
        %v2942 = vadd.f32 %v2644, %v2790
        %v2943 = vadd.f32 %v2645, %v2793
        %v2944 = vadd.f32 %v2646, %v2795
        %v2945 = vadd.f32 %v2647, %v2798
        %v2946 = vadd.f32 %v2648, %v2800
        %v2947 = vadd.f32 %v2649, %v2803
        %v2948 = vadd.f32 %v2650, %v2805
        %v2949 = vadd.f32 %v2651, %v2808
        %v2950 = vadd.f32 %v2652, %v2810
        %v2951 = vadd.f32 %v2653, %v2813
        %v2952 = vadd.f32 %v2654, %v2815
        %v2953 = vadd.f32 %v2655, %v2818
        %v2954 = vadd.f32 %v2656, %v2820
        %v2955 = vadd.f32 %v2657, %v2823
        %v2956 = vadd.f32 %v2658, %v2825
        %v2957 = vadd.f32 %v2659, %v2828
        %v2958 = vadd.f32 %v2660, %v2830
        %v2959 = vadd.f32 %v2661, %v2833
        %v2960 = vadd.f32 %v2662, %v2835
        %v2961 = vadd.f32 %v2663, %v2838
        %v2962 = vadd.f32 %v2664, %v2840
        %v2963 = vadd.f32 %v2665, %v2843
        %v2964 = vadd.f32 %v2666, %v2845
        %v2965 = vadd.f32 %v2667, %v2848
        %v2966 = vadd.f32 %v2668, %v2850
        %v2967 = vadd.f32 %v2669, %v2853
        %v2968 = vadd.f32 %v2670, %v2855
        %v2969 = vadd.f32 %v2671, %v2858
        %v2970 = vadd.f32 %v2672, %v2860
        %v2971 = vadd.f32 %v2673, %v2863
        %v2972 = vadd.f32 %v2674, %v2865
        %v2973 = vadd.f32 %v2675, %v2868
        %v2974 = vadd.f32 %v2676, %v2870
        %v2975 = vadd.f32 %v2677, %v2873
        %v2976 = vadd.f32 %v2678, %v2875
        %v2977 = vadd.f32 %v2679, %v2878
        %v2978 = vadd.f32 %v2680, %v2880
        %v2979 = vadd.f32 %v2681, %v2883
        %v2980 = vadd.f32 %v2682, %v2885
        %v2981 = vadd.f32 %v2683, %v2888
        %v2982 = vadd.f32 %v2684, %v2890
        %v2983 = vadd.f32 %v2685, %v2893
        %v2984 = vadd.f32 %v2686, %v2895
        %v2985 = vadd.f32 %v2687, %v2898
        %v2986 = vadd.f32 %v2688, %v2900
        %v2987 = vadd.f32 %v2689, %v2903
        %v2988 = vadd.f32 %v2690, %v2905
        %v2989 = vadd.f32 %v2691, %v2908
        %v2990 = vadd.f32 %v2692, %v2910
        %v2991 = vadd.f32 %v2693, %v2913
        %v2992 = vadd.f32 %v2694, %v2915
        %v2993 = vadd.f32 %v2695, %v2918
        %v2994 = vadd.f32 %v2696, %v2920
        %v2995 = vadd.f32 %v2697, %v2923
        %v2996 = vadd.f32 %v2698, %v2925
        %v2997 = vadd.f32 %v2699, %v2928
        %v2998 = vadd.f32 %v2700, %v2930
        %v2999 = vadd.f32 %v2701, %v2933
        %v3000 = vadd.f32 %v2702, %v2935
        %s3001 = scalar_lea.vmem %s3, 384
        %v3002 = vld [vmem:[%s3001] sm:$0xf]
        %v3003 = vld [vmem:[%s3001 + $0x4] sm:$0xf]
        %v3004 = vld [vmem:[%s3001 + $0x8] sm:$0xf]
        %v3005 = vld [vmem:[%s3001 + $0xc] sm:$0xf]
        %v3006 = vld [vmem:[%s3001 + $0x10] sm:$0xf]
        %v3007 = vld [vmem:[%s3001 + $0x14] sm:$0xf]
        %v3008 = vld [vmem:[%s3001 + $0x18] sm:$0xf]
        %v3009 = vld [vmem:[%s3001 + $0x1c] sm:$0xf]
        %v3010 = vld [vmem:[%s3001 + $0x20] sm:$0xf]
        %v3011 = vld [vmem:[%s3001 + $0x24] sm:$0xf]
        %v3012 = vld [vmem:[%s3001 + $0x28] sm:$0xf]
        %v3013 = vld [vmem:[%s3001 + $0x2c] sm:$0xf]
        %v3014 = vld [vmem:[%s3001 + $0x30] sm:$0xf]
        %v3015 = vld [vmem:[%s3001 + $0x34] sm:$0xf]
        %v3016 = vld [vmem:[%s3001 + $0x38] sm:$0xf]
        %v3017 = vld [vmem:[%s3001 + $0x3c] sm:$0xf]
        %v3034 = vunpack.c.l.b16 %v3002
        %v3035 = vunpack.c.l.b16 %v3003
        %v3036 = vunpack.c.l.b16 %v3004
        %v3037 = vunpack.c.l.b16 %v3005
        %v3038 = vunpack.c.l.b16 %v3006
        %v3039 = vunpack.c.l.b16 %v3007
        %v3040 = vunpack.c.l.b16 %v3008
        %v3041 = vunpack.c.l.b16 %v3009
        %v3042 = vunpack.c.l.b16 %v3010
        %v3043 = vunpack.c.l.b16 %v3011
        %v3044 = vunpack.c.l.b16 %v3012
        %v3045 = vunpack.c.l.b16 %v3013
        %v3046 = vunpack.c.l.b16 %v3014
        %v3047 = vunpack.c.l.b16 %v3015
        %v3048 = vunpack.c.l.b16 %v3016
        %v3049 = vunpack.c.l.b16 %v3017
        %v3050 = vpack.c.b16 %v3035, %v3034
        %v3051 = vpack.c.b16 %v3037, %v3036
        %v3052 = vpack.c.b16 %v3039, %v3038
        %v3053 = vpack.c.b16 %v3041, %v3040
        %v3054 = vpack.c.b16 %v3043, %v3042
        %v3055 = vpack.c.b16 %v3045, %v3044
        %v3056 = vpack.c.b16 %v3047, %v3046
        %v3057 = vpack.c.b16 %v3049, %v3048
        %3066 = vmatpush.bf16.msra.mxu0 %v3057
        %3067 = vmatpush.bf16.msra.mxu0 %v3056
        %3068 = vmatpush.bf16.msra.mxu0 %v3055
        %3069 = vmatpush.bf16.msra.mxu0 %v3054
        %3070 = vmatpush.bf16.msra.mxu0 %v3053
        %3071 = vmatpush.bf16.msra.mxu0 %v3052
        %3072 = vmatpush.bf16.msra.mxu0 %v3051
        %3073 = vmatpush.bf16.msra.mxu0 %v3050
        %3074 = vmatmul.bf16.gmra.mxu0 %v1145
        %v3075 = vpop.f32.mrf.mxu0
        %v3076 = vadd.f32 0.0, %v3075
        %v3077 = vpop.f32.mrf.mxu0
        %v3078 = vadd.f32 0.0, %v3077
        %3079 = vmatmul.bf16.gmra.mxu0 %v879
        %v3080 = vpop.f32.mrf.mxu0
        %v3081 = vadd.f32 0.0, %v3080
        %v3082 = vpop.f32.mrf.mxu0
        %v3083 = vadd.f32 0.0, %v3082
        %3084 = vmatmul.bf16.gmra.mxu0 %v1146
        %v3085 = vpop.f32.mrf.mxu0
        %v3086 = vadd.f32 0.0, %v3085
        %v3087 = vpop.f32.mrf.mxu0
        %v3088 = vadd.f32 0.0, %v3087
        %3089 = vmatmul.bf16.gmra.mxu0 %v894
        %v3090 = vpop.f32.mrf.mxu0
        %v3091 = vadd.f32 0.0, %v3090
        %v3092 = vpop.f32.mrf.mxu0
        %v3093 = vadd.f32 0.0, %v3092
        %3094 = vmatmul.bf16.gmra.mxu0 %v1147
        %v3095 = vpop.f32.mrf.mxu0
        %v3096 = vadd.f32 0.0, %v3095
        %v3097 = vpop.f32.mrf.mxu0
        %v3098 = vadd.f32 0.0, %v3097
        %3099 = vmatmul.bf16.gmra.mxu0 %v909
        %v3100 = vpop.f32.mrf.mxu0
        %v3101 = vadd.f32 0.0, %v3100
        %v3102 = vpop.f32.mrf.mxu0
        %v3103 = vadd.f32 0.0, %v3102
        %3104 = vmatmul.bf16.gmra.mxu0 %v1148
        %v3105 = vpop.f32.mrf.mxu0
        %v3106 = vadd.f32 0.0, %v3105
        %v3107 = vpop.f32.mrf.mxu0
        %v3108 = vadd.f32 0.0, %v3107
        %3109 = vmatmul.bf16.gmra.mxu0 %v924
        %v3110 = vpop.f32.mrf.mxu0
        %v3111 = vadd.f32 0.0, %v3110
        %v3112 = vpop.f32.mrf.mxu0
        %v3113 = vadd.f32 0.0, %v3112
        %3114 = vmatmul.bf16.gmra.mxu0 %v1149
        %v3115 = vpop.f32.mrf.mxu0
        %v3116 = vadd.f32 0.0, %v3115
        %v3117 = vpop.f32.mrf.mxu0
        %v3118 = vadd.f32 0.0, %v3117
        %3119 = vmatmul.bf16.gmra.mxu0 %v939
        %v3120 = vpop.f32.mrf.mxu0
        %v3121 = vadd.f32 0.0, %v3120
        %v3122 = vpop.f32.mrf.mxu0
        %v3123 = vadd.f32 0.0, %v3122
        %3124 = vmatmul.bf16.gmra.mxu0 %v1150
        %v3125 = vpop.f32.mrf.mxu0
        %v3126 = vadd.f32 0.0, %v3125
        %v3127 = vpop.f32.mrf.mxu0
        %v3128 = vadd.f32 0.0, %v3127
        %3129 = vmatmul.bf16.gmra.mxu0 %v954
        %v3130 = vpop.f32.mrf.mxu0
        %v3131 = vadd.f32 0.0, %v3130
        %v3132 = vpop.f32.mrf.mxu0
        %v3133 = vadd.f32 0.0, %v3132
        %3134 = vmatmul.bf16.gmra.mxu0 %v1151
        %v3135 = vpop.f32.mrf.mxu0
        %v3136 = vadd.f32 0.0, %v3135
        %v3137 = vpop.f32.mrf.mxu0
        %v3138 = vadd.f32 0.0, %v3137
        %3139 = vmatmul.bf16.gmra.mxu0 %v969
        %v3140 = vpop.f32.mrf.mxu0
        %v3141 = vadd.f32 0.0, %v3140
        %v3142 = vpop.f32.mrf.mxu0
        %v3143 = vadd.f32 0.0, %v3142
        %3144 = vmatmul.bf16.gmra.mxu0 %v1152
        %v3145 = vpop.f32.mrf.mxu0
        %v3146 = vadd.f32 0.0, %v3145
        %v3147 = vpop.f32.mrf.mxu0
        %v3148 = vadd.f32 0.0, %v3147
        %3149 = vmatmul.bf16.gmra.mxu0 %v984
        %v3150 = vpop.f32.mrf.mxu0
        %v3151 = vadd.f32 0.0, %v3150
        %v3152 = vpop.f32.mrf.mxu0
        %v3153 = vadd.f32 0.0, %v3152
        %3154 = vmatmul.bf16.gmra.mxu0 %v1153
        %v3155 = vpop.f32.mrf.mxu0
        %v3156 = vadd.f32 0.0, %v3155
        %v3157 = vpop.f32.mrf.mxu0
        %v3158 = vadd.f32 0.0, %v3157
        %3159 = vmatmul.bf16.gmra.mxu0 %v999
        %v3160 = vpop.f32.mrf.mxu0
        %v3161 = vadd.f32 0.0, %v3160
        %v3162 = vpop.f32.mrf.mxu0
        %v3163 = vadd.f32 0.0, %v3162
        %3164 = vmatmul.bf16.gmra.mxu0 %v1154
        %v3165 = vpop.f32.mrf.mxu0
        %v3166 = vadd.f32 0.0, %v3165
        %v3167 = vpop.f32.mrf.mxu0
        %v3168 = vadd.f32 0.0, %v3167
        %3169 = vmatmul.bf16.gmra.mxu0 %v1014
        %v3170 = vpop.f32.mrf.mxu0
        %v3171 = vadd.f32 0.0, %v3170
        %v3172 = vpop.f32.mrf.mxu0
        %v3173 = vadd.f32 0.0, %v3172
        %3174 = vmatmul.bf16.gmra.mxu0 %v1155
        %v3175 = vpop.f32.mrf.mxu0
        %v3176 = vadd.f32 0.0, %v3175
        %v3177 = vpop.f32.mrf.mxu0
        %v3178 = vadd.f32 0.0, %v3177
        %3179 = vmatmul.bf16.gmra.mxu0 %v1029
        %v3180 = vpop.f32.mrf.mxu0
        %v3181 = vadd.f32 0.0, %v3180
        %v3182 = vpop.f32.mrf.mxu0
        %v3183 = vadd.f32 0.0, %v3182
        %3184 = vmatmul.bf16.gmra.mxu0 %v1156
        %v3185 = vpop.f32.mrf.mxu0
        %v3186 = vadd.f32 0.0, %v3185
        %v3187 = vpop.f32.mrf.mxu0
        %v3188 = vadd.f32 0.0, %v3187
        %3189 = vmatmul.bf16.gmra.mxu0 %v1044
        %v3190 = vpop.f32.mrf.mxu0
        %v3191 = vadd.f32 0.0, %v3190
        %v3192 = vpop.f32.mrf.mxu0
        %v3193 = vadd.f32 0.0, %v3192
        %3194 = vmatmul.bf16.gmra.mxu0 %v1157
        %v3195 = vpop.f32.mrf.mxu0
        %v3196 = vadd.f32 0.0, %v3195
        %v3197 = vpop.f32.mrf.mxu0
        %v3198 = vadd.f32 0.0, %v3197
        %3199 = vmatmul.bf16.gmra.mxu0 %v1059
        %v3200 = vpop.f32.mrf.mxu0
        %v3201 = vadd.f32 0.0, %v3200
        %v3202 = vpop.f32.mrf.mxu0
        %v3203 = vadd.f32 0.0, %v3202
        %3204 = vmatmul.bf16.gmra.mxu0 %v1158
        %v3205 = vpop.f32.mrf.mxu0
        %v3206 = vadd.f32 0.0, %v3205
        %v3207 = vpop.f32.mrf.mxu0
        %v3208 = vadd.f32 0.0, %v3207
        %3209 = vmatmul.bf16.gmra.mxu0 %v1074
        %v3210 = vpop.f32.mrf.mxu0
        %v3211 = vadd.f32 0.0, %v3210
        %v3212 = vpop.f32.mrf.mxu0
        %v3213 = vadd.f32 0.0, %v3212
        %3214 = vmatmul.bf16.gmra.mxu0 %v1159
        %v3215 = vpop.f32.mrf.mxu0
        %v3216 = vadd.f32 0.0, %v3215
        %v3217 = vpop.f32.mrf.mxu0
        %v3218 = vadd.f32 0.0, %v3217
        %3219 = vmatmul.bf16.gmra.mxu0 %v1089
        %v3220 = vpop.f32.mrf.mxu0
        %v3221 = vadd.f32 0.0, %v3220
        %v3222 = vpop.f32.mrf.mxu0
        %v3223 = vadd.f32 0.0, %v3222
        %3224 = vmatmul.bf16.gmra.mxu0 %v1160
        %v3225 = vpop.f32.mrf.mxu0
        %v3226 = vadd.f32 0.0, %v3225
        %v3227 = vpop.f32.mrf.mxu0
        %v3228 = vadd.f32 0.0, %v3227
        %3229 = vmatmul.bf16.gmra.mxu0 %v1104
        %v3230 = vpop.f32.mrf.mxu0
        %v3231 = vadd.f32 0.0, %v3230
        %v3232 = vpop.f32.mrf.mxu0
        %v3233 = vadd.f32 0.0, %v3232
        %3234 = vdwg.mxu0
        %v3235 = vadd.f32 %v2937, %v3076
        %v3236 = vadd.f32 %v2938, %v3078
        %v3237 = vadd.f32 %v2939, %v3081
        %v3238 = vadd.f32 %v2940, %v3083
        %v3239 = vadd.f32 %v2941, %v3086
        %v3240 = vadd.f32 %v2942, %v3088
        %v3241 = vadd.f32 %v2943, %v3091
        %v3242 = vadd.f32 %v2944, %v3093
        %v3243 = vadd.f32 %v2945, %v3096
        %v3244 = vadd.f32 %v2946, %v3098
        %v3245 = vadd.f32 %v2947, %v3101
        %v3246 = vadd.f32 %v2948, %v3103
        %v3247 = vadd.f32 %v2949, %v3106
        %v3248 = vadd.f32 %v2950, %v3108
        %v3249 = vadd.f32 %v2951, %v3111
        %v3250 = vadd.f32 %v2952, %v3113
        %v3251 = vadd.f32 %v2953, %v3116
        %v3252 = vadd.f32 %v2954, %v3118
        %v3253 = vadd.f32 %v2955, %v3121
        %v3254 = vadd.f32 %v2956, %v3123
        %v3255 = vadd.f32 %v2957, %v3126
        %v3256 = vadd.f32 %v2958, %v3128
        %v3257 = vadd.f32 %v2959, %v3131
        %v3258 = vadd.f32 %v2960, %v3133
        %v3259 = vadd.f32 %v2961, %v3136
        %v3260 = vadd.f32 %v2962, %v3138
        %v3261 = vadd.f32 %v2963, %v3141
        %v3262 = vadd.f32 %v2964, %v3143
        %v3263 = vadd.f32 %v2965, %v3146
        %v3264 = vadd.f32 %v2966, %v3148
        %v3265 = vadd.f32 %v2967, %v3151
        %v3266 = vadd.f32 %v2968, %v3153
        %v3267 = vadd.f32 %v2969, %v3156
        %v3268 = vadd.f32 %v2970, %v3158
        %v3269 = vadd.f32 %v2971, %v3161
        %v3270 = vadd.f32 %v2972, %v3163
        %v3271 = vadd.f32 %v2973, %v3166
        %v3272 = vadd.f32 %v2974, %v3168
        %v3273 = vadd.f32 %v2975, %v3171
        %v3274 = vadd.f32 %v2976, %v3173
        %v3275 = vadd.f32 %v2977, %v3176
        %v3276 = vadd.f32 %v2978, %v3178
        %v3277 = vadd.f32 %v2979, %v3181
        %v3278 = vadd.f32 %v2980, %v3183
        %v3279 = vadd.f32 %v2981, %v3186
        %v3280 = vadd.f32 %v2982, %v3188
        %v3281 = vadd.f32 %v2983, %v3191
        %v3282 = vadd.f32 %v2984, %v3193
        %v3283 = vadd.f32 %v2985, %v3196
        %v3284 = vadd.f32 %v2986, %v3198
        %v3285 = vadd.f32 %v2987, %v3201
        %v3286 = vadd.f32 %v2988, %v3203
        %v3287 = vadd.f32 %v2989, %v3206
        %v3288 = vadd.f32 %v2990, %v3208
        %v3289 = vadd.f32 %v2991, %v3211
        %v3290 = vadd.f32 %v2992, %v3213
        %v3291 = vadd.f32 %v2993, %v3216
        %v3292 = vadd.f32 %v2994, %v3218
        %v3293 = vadd.f32 %v2995, %v3221
        %v3294 = vadd.f32 %v2996, %v3223
        %v3295 = vadd.f32 %v2997, %v3226
        %v3296 = vadd.f32 %v2998, %v3228
        %v3297 = vadd.f32 %v2999, %v3231
        %v3298 = vadd.f32 %v3000, %v3233
        %s3299 = scalar_lea.vmem %s3, 448
        %v3300 = vld [vmem:[%s3299] sm:$0xf]
        %v3301 = vld [vmem:[%s3299 + $0x4] sm:$0xf]
        %v3302 = vld [vmem:[%s3299 + $0x8] sm:$0xf]
        %v3303 = vld [vmem:[%s3299 + $0xc] sm:$0xf]
        %v3304 = vld [vmem:[%s3299 + $0x10] sm:$0xf]
        %v3305 = vld [vmem:[%s3299 + $0x14] sm:$0xf]
        %v3306 = vld [vmem:[%s3299 + $0x18] sm:$0xf]
        %v3307 = vld [vmem:[%s3299 + $0x1c] sm:$0xf]
        %v3308 = vld [vmem:[%s3299 + $0x20] sm:$0xf]
        %v3309 = vld [vmem:[%s3299 + $0x24] sm:$0xf]
        %v3310 = vld [vmem:[%s3299 + $0x28] sm:$0xf]
        %v3311 = vld [vmem:[%s3299 + $0x2c] sm:$0xf]
        %v3312 = vld [vmem:[%s3299 + $0x30] sm:$0xf]
        %v3313 = vld [vmem:[%s3299 + $0x34] sm:$0xf]
        %v3314 = vld [vmem:[%s3299 + $0x38] sm:$0xf]
        %v3315 = vld [vmem:[%s3299 + $0x3c] sm:$0xf]
        %v3334 = vunpack.c.l.b16 %v3300
        %v3335 = vunpack.c.l.b16 %v3301
        %v3336 = vunpack.c.l.b16 %v3302
        %v3337 = vunpack.c.l.b16 %v3303
        %v3338 = vunpack.c.l.b16 %v3304
        %v3339 = vunpack.c.l.b16 %v3305
        %v3340 = vunpack.c.l.b16 %v3306
        %v3341 = vunpack.c.l.b16 %v3307
        %v3342 = vunpack.c.l.b16 %v3308
        %v3343 = vunpack.c.l.b16 %v3309
        %v3344 = vunpack.c.l.b16 %v3310
        %v3345 = vunpack.c.l.b16 %v3311
        %v3346 = vunpack.c.l.b16 %v3312
        %v3347 = vunpack.c.l.b16 %v3313
        %v3348 = vunpack.c.l.b16 %v3314
        %v3349 = vunpack.c.l.b16 %v3315
        %v3350 = vpack.c.b16 %v3335, %v3334
        %v3351 = vpack.c.b16 %v3337, %v3336
        %v3352 = vpack.c.b16 %v3339, %v3338
        %v3353 = vpack.c.b16 %v3341, %v3340
        %v3354 = vpack.c.b16 %v3343, %v3342
        %v3355 = vpack.c.b16 %v3345, %v3344
        %v3356 = vpack.c.b16 %v3347, %v3346
        %v3357 = vpack.c.b16 %v3349, %v3348
        %3366 = vmatpush.bf16.msra.mxu0 %v3357
        %3367 = vmatpush.bf16.msra.mxu0 %v3356
        %3368 = vmatpush.bf16.msra.mxu0 %v3355
        %3369 = vmatpush.bf16.msra.mxu0 %v3354
        %3370 = vmatpush.bf16.msra.mxu0 %v3353
        %3371 = vmatpush.bf16.msra.mxu0 %v3352
        %3372 = vmatpush.bf16.msra.mxu0 %v3351
        %3373 = vmatpush.bf16.msra.mxu0 %v3350
        %3374 = vmatmul.bf16.gmra.mxu0 %v802
        %v3375 = vpop.f32.mrf.mxu0
        %v3376 = vadd.f32 0.0, %v3375
        %v3377 = vpop.f32.mrf.mxu0
        %v3378 = vadd.f32 0.0, %v3377
        %3379 = vmatmul.bf16.gmra.mxu0 %v803
        %v3380 = vpop.f32.mrf.mxu0
        %v3381 = vadd.f32 0.0, %v3380
        %v3382 = vpop.f32.mrf.mxu0
        %v3383 = vadd.f32 0.0, %v3382
        %3384 = vmatmul.bf16.gmra.mxu0 %v804
        %v3385 = vpop.f32.mrf.mxu0
        %v3386 = vadd.f32 0.0, %v3385
        %v3387 = vpop.f32.mrf.mxu0
        %v3388 = vadd.f32 0.0, %v3387
        %3389 = vmatmul.bf16.gmra.mxu0 %v805
        %v3390 = vpop.f32.mrf.mxu0
        %v3391 = vadd.f32 0.0, %v3390
        %v3392 = vpop.f32.mrf.mxu0
        %v3393 = vadd.f32 0.0, %v3392
        %3394 = vmatmul.bf16.gmra.mxu0 %v806
        %v3395 = vpop.f32.mrf.mxu0
        %v3396 = vadd.f32 0.0, %v3395
        %v3397 = vpop.f32.mrf.mxu0
        %v3398 = vadd.f32 0.0, %v3397
        %3399 = vmatmul.bf16.gmra.mxu0 %v807
        %v3400 = vpop.f32.mrf.mxu0
        %v3401 = vadd.f32 0.0, %v3400
        %v3402 = vpop.f32.mrf.mxu0
        %v3403 = vadd.f32 0.0, %v3402
        %3404 = vmatmul.bf16.gmra.mxu0 %v808
        %v3405 = vpop.f32.mrf.mxu0
        %v3406 = vadd.f32 0.0, %v3405
        %v3407 = vpop.f32.mrf.mxu0
        %v3408 = vadd.f32 0.0, %v3407
        %3409 = vmatmul.bf16.gmra.mxu0 %v809
        %v3410 = vpop.f32.mrf.mxu0
        %v3411 = vadd.f32 0.0, %v3410
        %v3412 = vpop.f32.mrf.mxu0
        %v3413 = vadd.f32 0.0, %v3412
        %3414 = vmatmul.bf16.gmra.mxu0 %v810
        %v3415 = vpop.f32.mrf.mxu0
        %v3416 = vadd.f32 0.0, %v3415
        %v3417 = vpop.f32.mrf.mxu0
        %v3418 = vadd.f32 0.0, %v3417
        %3419 = vmatmul.bf16.gmra.mxu0 %v811
        %v3420 = vpop.f32.mrf.mxu0
        %v3421 = vadd.f32 0.0, %v3420
        %v3422 = vpop.f32.mrf.mxu0
        %v3423 = vadd.f32 0.0, %v3422
        %3424 = vmatmul.bf16.gmra.mxu0 %v812
        %v3425 = vpop.f32.mrf.mxu0
        %v3426 = vadd.f32 0.0, %v3425
        %v3427 = vpop.f32.mrf.mxu0
        %v3428 = vadd.f32 0.0, %v3427
        %3429 = vmatmul.bf16.gmra.mxu0 %v813
        %v3430 = vpop.f32.mrf.mxu0
        %v3431 = vadd.f32 0.0, %v3430
        %v3432 = vpop.f32.mrf.mxu0
        %v3433 = vadd.f32 0.0, %v3432
        %3434 = vmatmul.bf16.gmra.mxu0 %v814
        %v3435 = vpop.f32.mrf.mxu0
        %v3436 = vadd.f32 0.0, %v3435
        %v3437 = vpop.f32.mrf.mxu0
        %v3438 = vadd.f32 0.0, %v3437
        %3439 = vmatmul.bf16.gmra.mxu0 %v815
        %v3440 = vpop.f32.mrf.mxu0
        %v3441 = vadd.f32 0.0, %v3440
        %v3442 = vpop.f32.mrf.mxu0
        %v3443 = vadd.f32 0.0, %v3442
        %3444 = vmatmul.bf16.gmra.mxu0 %v816
        %v3445 = vpop.f32.mrf.mxu0
        %v3446 = vadd.f32 0.0, %v3445
        %v3447 = vpop.f32.mrf.mxu0
        %v3448 = vadd.f32 0.0, %v3447
        %3449 = vmatmul.bf16.gmra.mxu0 %v817
        %v3450 = vpop.f32.mrf.mxu0
        %v3451 = vadd.f32 0.0, %v3450
        %v3452 = vpop.f32.mrf.mxu0
        %v3453 = vadd.f32 0.0, %v3452
        %3454 = vmatmul.bf16.gmra.mxu0 %v818
        %v3455 = vpop.f32.mrf.mxu0
        %v3456 = vadd.f32 0.0, %v3455
        %v3457 = vpop.f32.mrf.mxu0
        %v3458 = vadd.f32 0.0, %v3457
        %3459 = vmatmul.bf16.gmra.mxu0 %v819
        %v3460 = vpop.f32.mrf.mxu0
        %v3461 = vadd.f32 0.0, %v3460
        %v3462 = vpop.f32.mrf.mxu0
        %v3463 = vadd.f32 0.0, %v3462
        %3464 = vmatmul.bf16.gmra.mxu0 %v820
        %v3465 = vpop.f32.mrf.mxu0
        %v3466 = vadd.f32 0.0, %v3465
        %v3467 = vpop.f32.mrf.mxu0
        %v3468 = vadd.f32 0.0, %v3467
        %3469 = vmatmul.bf16.gmra.mxu0 %v821
        %v3470 = vpop.f32.mrf.mxu0
        %v3471 = vadd.f32 0.0, %v3470
        %v3472 = vpop.f32.mrf.mxu0
        %v3473 = vadd.f32 0.0, %v3472
        %3474 = vmatmul.bf16.gmra.mxu0 %v822
        %v3475 = vpop.f32.mrf.mxu0
        %v3476 = vadd.f32 0.0, %v3475
        %v3477 = vpop.f32.mrf.mxu0
        %v3478 = vadd.f32 0.0, %v3477
        %3479 = vmatmul.bf16.gmra.mxu0 %v823
        %v3480 = vpop.f32.mrf.mxu0
        %v3481 = vadd.f32 0.0, %v3480
        %v3482 = vpop.f32.mrf.mxu0
        %v3483 = vadd.f32 0.0, %v3482
        %3484 = vmatmul.bf16.gmra.mxu0 %v824
        %v3485 = vpop.f32.mrf.mxu0
        %v3486 = vadd.f32 0.0, %v3485
        %v3487 = vpop.f32.mrf.mxu0
        %v3488 = vadd.f32 0.0, %v3487
        %3489 = vmatmul.bf16.gmra.mxu0 %v825
        %v3490 = vpop.f32.mrf.mxu0
        %v3491 = vadd.f32 0.0, %v3490
        %v3492 = vpop.f32.mrf.mxu0
        %v3493 = vadd.f32 0.0, %v3492
        %3494 = vmatmul.bf16.gmra.mxu0 %v826
        %v3495 = vpop.f32.mrf.mxu0
        %v3496 = vadd.f32 0.0, %v3495
        %v3497 = vpop.f32.mrf.mxu0
        %v3498 = vadd.f32 0.0, %v3497
        %3499 = vmatmul.bf16.gmra.mxu0 %v827
        %v3500 = vpop.f32.mrf.mxu0
        %v3501 = vadd.f32 0.0, %v3500
        %v3502 = vpop.f32.mrf.mxu0
        %v3503 = vadd.f32 0.0, %v3502
        %3504 = vmatmul.bf16.gmra.mxu0 %v828
        %v3505 = vpop.f32.mrf.mxu0
        %v3506 = vadd.f32 0.0, %v3505
        %v3507 = vpop.f32.mrf.mxu0
        %v3508 = vadd.f32 0.0, %v3507
        %3509 = vmatmul.bf16.gmra.mxu0 %v829
        %v3510 = vpop.f32.mrf.mxu0
        %v3511 = vadd.f32 0.0, %v3510
        %v3512 = vpop.f32.mrf.mxu0
        %v3513 = vadd.f32 0.0, %v3512
        %3514 = vmatmul.bf16.gmra.mxu0 %v830
        %v3515 = vpop.f32.mrf.mxu0
        %v3516 = vadd.f32 0.0, %v3515
        %v3517 = vpop.f32.mrf.mxu0
        %v3518 = vadd.f32 0.0, %v3517
        %3519 = vmatmul.bf16.gmra.mxu0 %v831
        %v3520 = vpop.f32.mrf.mxu0
        %v3521 = vadd.f32 0.0, %v3520
        %v3522 = vpop.f32.mrf.mxu0
        %v3523 = vadd.f32 0.0, %v3522
        %3524 = vmatmul.bf16.gmra.mxu0 %v832
        %v3525 = vpop.f32.mrf.mxu0
        %v3526 = vadd.f32 0.0, %v3525
        %v3527 = vpop.f32.mrf.mxu0
        %v3528 = vadd.f32 0.0, %v3527
        %3529 = vmatmul.bf16.gmra.mxu0 %v833
        %v3530 = vpop.f32.mrf.mxu0
        %v3531 = vadd.f32 0.0, %v3530
        %v3532 = vpop.f32.mrf.mxu0
        %v3533 = vadd.f32 0.0, %v3532
        %3534 = vdwg.mxu0
        %v3535 = vadd.f32 %v3235, %v3376
        %v3536 = vadd.f32 %v3236, %v3378
        %v3537 = vadd.f32 %v3237, %v3381
        %v3538 = vadd.f32 %v3238, %v3383
        %v3539 = vadd.f32 %v3239, %v3386
        %v3540 = vadd.f32 %v3240, %v3388
        %v3541 = vadd.f32 %v3241, %v3391
        %v3542 = vadd.f32 %v3242, %v3393
        %v3543 = vadd.f32 %v3243, %v3396
        %v3544 = vadd.f32 %v3244, %v3398
        %v3545 = vadd.f32 %v3245, %v3401
        %v3546 = vadd.f32 %v3246, %v3403
        %v3547 = vadd.f32 %v3247, %v3406
        %v3548 = vadd.f32 %v3248, %v3408
        %v3549 = vadd.f32 %v3249, %v3411
        %v3550 = vadd.f32 %v3250, %v3413
        %v3551 = vadd.f32 %v3251, %v3416
        %v3552 = vadd.f32 %v3252, %v3418
        %v3553 = vadd.f32 %v3253, %v3421
        %v3554 = vadd.f32 %v3254, %v3423
        %v3555 = vadd.f32 %v3255, %v3426
        %v3556 = vadd.f32 %v3256, %v3428
        %v3557 = vadd.f32 %v3257, %v3431
        %v3558 = vadd.f32 %v3258, %v3433
        %v3559 = vadd.f32 %v3259, %v3436
        %v3560 = vadd.f32 %v3260, %v3438
        %v3561 = vadd.f32 %v3261, %v3441
        %v3562 = vadd.f32 %v3262, %v3443
        %v3563 = vadd.f32 %v3263, %v3446
        %v3564 = vadd.f32 %v3264, %v3448
        %v3565 = vadd.f32 %v3265, %v3451
        %v3566 = vadd.f32 %v3266, %v3453
        %v3567 = vadd.f32 %v3267, %v3456
        %v3568 = vadd.f32 %v3268, %v3458
        %v3569 = vadd.f32 %v3269, %v3461
        %v3570 = vadd.f32 %v3270, %v3463
        %v3571 = vadd.f32 %v3271, %v3466
        %v3572 = vadd.f32 %v3272, %v3468
        %v3573 = vadd.f32 %v3273, %v3471
        %v3574 = vadd.f32 %v3274, %v3473
        %v3575 = vadd.f32 %v3275, %v3476
        %v3576 = vadd.f32 %v3276, %v3478
        %v3577 = vadd.f32 %v3277, %v3481
        %v3578 = vadd.f32 %v3278, %v3483
        %v3579 = vadd.f32 %v3279, %v3486
        %v3580 = vadd.f32 %v3280, %v3488
        %v3581 = vadd.f32 %v3281, %v3491
        %v3582 = vadd.f32 %v3282, %v3493
        %v3583 = vadd.f32 %v3283, %v3496
        %v3584 = vadd.f32 %v3284, %v3498
        %v3585 = vadd.f32 %v3285, %v3501
        %v3586 = vadd.f32 %v3286, %v3503
        %v3587 = vadd.f32 %v3287, %v3506
        %v3588 = vadd.f32 %v3288, %v3508
        %v3589 = vadd.f32 %v3289, %v3511
        %v3590 = vadd.f32 %v3290, %v3513
        %v3591 = vadd.f32 %v3291, %v3516
        %v3592 = vadd.f32 %v3292, %v3518
        %v3593 = vadd.f32 %v3293, %v3521
        %v3594 = vadd.f32 %v3294, %v3523
        %v3595 = vadd.f32 %v3295, %v3526
        %v3596 = vadd.f32 %v3296, %v3528
        %v3597 = vadd.f32 %v3297, %v3531
        %v3598 = vadd.f32 %v3298, %v3533
        %s3599 = scalar_lea.vmem %s3, 512
        %v3600 = vld [vmem:[%s3599] sm:$0xf]
        %v3601 = vld [vmem:[%s3599 + $0x4] sm:$0xf]
        %v3602 = vld [vmem:[%s3599 + $0x8] sm:$0xf]
        %v3603 = vld [vmem:[%s3599 + $0xc] sm:$0xf]
        %v3604 = vld [vmem:[%s3599 + $0x10] sm:$0xf]
        %v3605 = vld [vmem:[%s3599 + $0x14] sm:$0xf]
        %v3606 = vld [vmem:[%s3599 + $0x18] sm:$0xf]
        %v3607 = vld [vmem:[%s3599 + $0x1c] sm:$0xf]
        %v3608 = vld [vmem:[%s3599 + $0x20] sm:$0xf]
        %v3609 = vld [vmem:[%s3599 + $0x24] sm:$0xf]
        %v3610 = vld [vmem:[%s3599 + $0x28] sm:$0xf]
        %v3611 = vld [vmem:[%s3599 + $0x2c] sm:$0xf]
        %v3612 = vld [vmem:[%s3599 + $0x30] sm:$0xf]
        %v3613 = vld [vmem:[%s3599 + $0x34] sm:$0xf]
        %v3614 = vld [vmem:[%s3599 + $0x38] sm:$0xf]
        %v3615 = vld [vmem:[%s3599 + $0x3c] sm:$0xf]
        %v3632 = vunpack.c.l.b16 %v3600
        %v3633 = vunpack.c.l.b16 %v3601
        %v3634 = vunpack.c.l.b16 %v3602
        %v3635 = vunpack.c.l.b16 %v3603
        %v3636 = vunpack.c.l.b16 %v3604
        %v3637 = vunpack.c.l.b16 %v3605
        %v3638 = vunpack.c.l.b16 %v3606
        %v3639 = vunpack.c.l.b16 %v3607
        %v3640 = vunpack.c.l.b16 %v3608
        %v3641 = vunpack.c.l.b16 %v3609
        %v3642 = vunpack.c.l.b16 %v3610
        %v3643 = vunpack.c.l.b16 %v3611
        %v3644 = vunpack.c.l.b16 %v3612
        %v3645 = vunpack.c.l.b16 %v3613
        %v3646 = vunpack.c.l.b16 %v3614
        %v3647 = vunpack.c.l.b16 %v3615
        %v3648 = vpack.c.b16 %v3633, %v3632
        %v3649 = vpack.c.b16 %v3635, %v3634
        %v3650 = vpack.c.b16 %v3637, %v3636
        %v3651 = vpack.c.b16 %v3639, %v3638
        %v3652 = vpack.c.b16 %v3641, %v3640
        %v3653 = vpack.c.b16 %v3643, %v3642
        %v3654 = vpack.c.b16 %v3645, %v3644
        %v3655 = vpack.c.b16 %v3647, %v3646
        %3664 = vmatpush.bf16.msra.mxu0 %v3655
        %3665 = vmatpush.bf16.msra.mxu0 %v3654
        %3666 = vmatpush.bf16.msra.mxu0 %v3653
        %3667 = vmatpush.bf16.msra.mxu0 %v3652
        %3668 = vmatpush.bf16.msra.mxu0 %v3651
        %3669 = vmatpush.bf16.msra.mxu0 %v3650
        %3670 = vmatpush.bf16.msra.mxu0 %v3649
        %3671 = vmatpush.bf16.msra.mxu0 %v3648
        %3672 = vmatmul.bf16.gmra.mxu0 %v1175
        %v3673 = vpop.f32.mrf.mxu0
        %v3674 = vadd.f32 0.0, %v3673
        %v3675 = vpop.f32.mrf.mxu0
        %v3676 = vadd.f32 0.0, %v3675
        %3677 = vmatmul.bf16.gmra.mxu0 %v1292
        %v3678 = vpop.f32.mrf.mxu0
        %v3679 = vadd.f32 0.0, %v3678
        %v3680 = vpop.f32.mrf.mxu0
        %v3681 = vadd.f32 0.0, %v3680
        %3682 = vmatmul.bf16.gmra.mxu0 %v1180
        %v3683 = vpop.f32.mrf.mxu0
        %v3684 = vadd.f32 0.0, %v3683
        %v3685 = vpop.f32.mrf.mxu0
        %v3686 = vadd.f32 0.0, %v3685
        %3687 = vmatmul.bf16.gmra.mxu0 %v1293
        %v3688 = vpop.f32.mrf.mxu0
        %v3689 = vadd.f32 0.0, %v3688
        %v3690 = vpop.f32.mrf.mxu0
        %v3691 = vadd.f32 0.0, %v3690
        %3692 = vmatmul.bf16.gmra.mxu0 %v1185
        %v3693 = vpop.f32.mrf.mxu0
        %v3694 = vadd.f32 0.0, %v3693
        %v3695 = vpop.f32.mrf.mxu0
        %v3696 = vadd.f32 0.0, %v3695
        %3697 = vmatmul.bf16.gmra.mxu0 %v1294
        %v3698 = vpop.f32.mrf.mxu0
        %v3699 = vadd.f32 0.0, %v3698
        %v3700 = vpop.f32.mrf.mxu0
        %v3701 = vadd.f32 0.0, %v3700
        %3702 = vmatmul.bf16.gmra.mxu0 %v1190
        %v3703 = vpop.f32.mrf.mxu0
        %v3704 = vadd.f32 0.0, %v3703
        %v3705 = vpop.f32.mrf.mxu0
        %v3706 = vadd.f32 0.0, %v3705
        %3707 = vmatmul.bf16.gmra.mxu0 %v1295
        %v3708 = vpop.f32.mrf.mxu0
        %v3709 = vadd.f32 0.0, %v3708
        %v3710 = vpop.f32.mrf.mxu0
        %v3711 = vadd.f32 0.0, %v3710
        %3712 = vmatmul.bf16.gmra.mxu0 %v1195
        %v3713 = vpop.f32.mrf.mxu0
        %v3714 = vadd.f32 0.0, %v3713
        %v3715 = vpop.f32.mrf.mxu0
        %v3716 = vadd.f32 0.0, %v3715
        %3717 = vmatmul.bf16.gmra.mxu0 %v1296
        %v3718 = vpop.f32.mrf.mxu0
        %v3719 = vadd.f32 0.0, %v3718
        %v3720 = vpop.f32.mrf.mxu0
        %v3721 = vadd.f32 0.0, %v3720
        %3722 = vmatmul.bf16.gmra.mxu0 %v1200
        %v3723 = vpop.f32.mrf.mxu0
        %v3724 = vadd.f32 0.0, %v3723
        %v3725 = vpop.f32.mrf.mxu0
        %v3726 = vadd.f32 0.0, %v3725
        %3727 = vmatmul.bf16.gmra.mxu0 %v1297
        %v3728 = vpop.f32.mrf.mxu0
        %v3729 = vadd.f32 0.0, %v3728
        %v3730 = vpop.f32.mrf.mxu0
        %v3731 = vadd.f32 0.0, %v3730
        %3732 = vmatmul.bf16.gmra.mxu0 %v1205
        %v3733 = vpop.f32.mrf.mxu0
        %v3734 = vadd.f32 0.0, %v3733
        %v3735 = vpop.f32.mrf.mxu0
        %v3736 = vadd.f32 0.0, %v3735
        %3737 = vmatmul.bf16.gmra.mxu0 %v1298
        %v3738 = vpop.f32.mrf.mxu0
        %v3739 = vadd.f32 0.0, %v3738
        %v3740 = vpop.f32.mrf.mxu0
        %v3741 = vadd.f32 0.0, %v3740
        %3742 = vmatmul.bf16.gmra.mxu0 %v1210
        %v3743 = vpop.f32.mrf.mxu0
        %v3744 = vadd.f32 0.0, %v3743
        %v3745 = vpop.f32.mrf.mxu0
        %v3746 = vadd.f32 0.0, %v3745
        %3747 = vmatmul.bf16.gmra.mxu0 %v1299
        %v3748 = vpop.f32.mrf.mxu0
        %v3749 = vadd.f32 0.0, %v3748
        %v3750 = vpop.f32.mrf.mxu0
        %v3751 = vadd.f32 0.0, %v3750
        %3752 = vmatmul.bf16.gmra.mxu0 %v1215
        %v3753 = vpop.f32.mrf.mxu0
        %v3754 = vadd.f32 0.0, %v3753
        %v3755 = vpop.f32.mrf.mxu0
        %v3756 = vadd.f32 0.0, %v3755
        %3757 = vmatmul.bf16.gmra.mxu0 %v1300
        %v3758 = vpop.f32.mrf.mxu0
        %v3759 = vadd.f32 0.0, %v3758
        %v3760 = vpop.f32.mrf.mxu0
        %v3761 = vadd.f32 0.0, %v3760
        %3762 = vmatmul.bf16.gmra.mxu0 %v1220
        %v3763 = vpop.f32.mrf.mxu0
        %v3764 = vadd.f32 0.0, %v3763
        %v3765 = vpop.f32.mrf.mxu0
        %v3766 = vadd.f32 0.0, %v3765
        %3767 = vmatmul.bf16.gmra.mxu0 %v1301
        %v3768 = vpop.f32.mrf.mxu0
        %v3769 = vadd.f32 0.0, %v3768
        %v3770 = vpop.f32.mrf.mxu0
        %v3771 = vadd.f32 0.0, %v3770
        %3772 = vmatmul.bf16.gmra.mxu0 %v1225
        %v3773 = vpop.f32.mrf.mxu0
        %v3774 = vadd.f32 0.0, %v3773
        %v3775 = vpop.f32.mrf.mxu0
        %v3776 = vadd.f32 0.0, %v3775
        %3777 = vmatmul.bf16.gmra.mxu0 %v1302
        %v3778 = vpop.f32.mrf.mxu0
        %v3779 = vadd.f32 0.0, %v3778
        %v3780 = vpop.f32.mrf.mxu0
        %v3781 = vadd.f32 0.0, %v3780
        %3782 = vmatmul.bf16.gmra.mxu0 %v1230
        %v3783 = vpop.f32.mrf.mxu0
        %v3784 = vadd.f32 0.0, %v3783
        %v3785 = vpop.f32.mrf.mxu0
        %v3786 = vadd.f32 0.0, %v3785
        %3787 = vmatmul.bf16.gmra.mxu0 %v1303
        %v3788 = vpop.f32.mrf.mxu0
        %v3789 = vadd.f32 0.0, %v3788
        %v3790 = vpop.f32.mrf.mxu0
        %v3791 = vadd.f32 0.0, %v3790
        %3792 = vmatmul.bf16.gmra.mxu0 %v1235
        %v3793 = vpop.f32.mrf.mxu0
        %v3794 = vadd.f32 0.0, %v3793
        %v3795 = vpop.f32.mrf.mxu0
        %v3796 = vadd.f32 0.0, %v3795
        %3797 = vmatmul.bf16.gmra.mxu0 %v1304
        %v3798 = vpop.f32.mrf.mxu0
        %v3799 = vadd.f32 0.0, %v3798
        %v3800 = vpop.f32.mrf.mxu0
        %v3801 = vadd.f32 0.0, %v3800
        %3802 = vmatmul.bf16.gmra.mxu0 %v1240
        %v3803 = vpop.f32.mrf.mxu0
        %v3804 = vadd.f32 0.0, %v3803
        %v3805 = vpop.f32.mrf.mxu0
        %v3806 = vadd.f32 0.0, %v3805
        %3807 = vmatmul.bf16.gmra.mxu0 %v1305
        %v3808 = vpop.f32.mrf.mxu0
        %v3809 = vadd.f32 0.0, %v3808
        %v3810 = vpop.f32.mrf.mxu0
        %v3811 = vadd.f32 0.0, %v3810
        %3812 = vmatmul.bf16.gmra.mxu0 %v1245
        %v3813 = vpop.f32.mrf.mxu0
        %v3814 = vadd.f32 0.0, %v3813
        %v3815 = vpop.f32.mrf.mxu0
        %v3816 = vadd.f32 0.0, %v3815
        %3817 = vmatmul.bf16.gmra.mxu0 %v1306
        %v3818 = vpop.f32.mrf.mxu0
        %v3819 = vadd.f32 0.0, %v3818
        %v3820 = vpop.f32.mrf.mxu0
        %v3821 = vadd.f32 0.0, %v3820
        %3822 = vmatmul.bf16.gmra.mxu0 %v1250
        %v3823 = vpop.f32.mrf.mxu0
        %v3824 = vadd.f32 0.0, %v3823
        %v3825 = vpop.f32.mrf.mxu0
        %v3826 = vadd.f32 0.0, %v3825
        %3827 = vmatmul.bf16.gmra.mxu0 %v1307
        %v3828 = vpop.f32.mrf.mxu0
        %v3829 = vadd.f32 0.0, %v3828
        %v3830 = vpop.f32.mrf.mxu0
        %v3831 = vadd.f32 0.0, %v3830
        %3832 = vdwg.mxu0
        %v3833 = vadd.f32 %v3535, %v3674
        %v3834 = vadd.f32 %v3536, %v3676
        %v3835 = vadd.f32 %v3537, %v3679
        %v3836 = vadd.f32 %v3538, %v3681
        %v3837 = vadd.f32 %v3539, %v3684
        %v3838 = vadd.f32 %v3540, %v3686
        %v3839 = vadd.f32 %v3541, %v3689
        %v3840 = vadd.f32 %v3542, %v3691
        %v3841 = vadd.f32 %v3543, %v3694
        %v3842 = vadd.f32 %v3544, %v3696
        %v3843 = vadd.f32 %v3545, %v3699
        %v3844 = vadd.f32 %v3546, %v3701
        %v3845 = vadd.f32 %v3547, %v3704
        %v3846 = vadd.f32 %v3548, %v3706
        %v3847 = vadd.f32 %v3549, %v3709
        %v3848 = vadd.f32 %v3550, %v3711
        %v3849 = vadd.f32 %v3551, %v3714
        %v3850 = vadd.f32 %v3552, %v3716
        %v3851 = vadd.f32 %v3553, %v3719
        %v3852 = vadd.f32 %v3554, %v3721
        %v3853 = vadd.f32 %v3555, %v3724
        %v3854 = vadd.f32 %v3556, %v3726
        %v3855 = vadd.f32 %v3557, %v3729
        %v3856 = vadd.f32 %v3558, %v3731
        %v3857 = vadd.f32 %v3559, %v3734
        %v3858 = vadd.f32 %v3560, %v3736
        %v3859 = vadd.f32 %v3561, %v3739
        %v3860 = vadd.f32 %v3562, %v3741
        %v3861 = vadd.f32 %v3563, %v3744
        %v3862 = vadd.f32 %v3564, %v3746
        %v3863 = vadd.f32 %v3565, %v3749
        %v3864 = vadd.f32 %v3566, %v3751
        %v3865 = vadd.f32 %v3567, %v3754
        %v3866 = vadd.f32 %v3568, %v3756
        %v3867 = vadd.f32 %v3569, %v3759
        %v3868 = vadd.f32 %v3570, %v3761
        %v3869 = vadd.f32 %v3571, %v3764
        %v3870 = vadd.f32 %v3572, %v3766
        %v3871 = vadd.f32 %v3573, %v3769
        %v3872 = vadd.f32 %v3574, %v3771
        %v3873 = vadd.f32 %v3575, %v3774
        %v3874 = vadd.f32 %v3576, %v3776
        %v3875 = vadd.f32 %v3577, %v3779
        %v3876 = vadd.f32 %v3578, %v3781
        %v3877 = vadd.f32 %v3579, %v3784
        %v3878 = vadd.f32 %v3580, %v3786
        %v3879 = vadd.f32 %v3581, %v3789
        %v3880 = vadd.f32 %v3582, %v3791
        %v3881 = vadd.f32 %v3583, %v3794
        %v3882 = vadd.f32 %v3584, %v3796
        %v3883 = vadd.f32 %v3585, %v3799
        %v3884 = vadd.f32 %v3586, %v3801
        %v3885 = vadd.f32 %v3587, %v3804
        %v3886 = vadd.f32 %v3588, %v3806
        %v3887 = vadd.f32 %v3589, %v3809
        %v3888 = vadd.f32 %v3590, %v3811
        %v3889 = vadd.f32 %v3591, %v3814
        %v3890 = vadd.f32 %v3592, %v3816
        %v3891 = vadd.f32 %v3593, %v3819
        %v3892 = vadd.f32 %v3594, %v3821
        %v3893 = vadd.f32 %v3595, %v3824
        %v3894 = vadd.f32 %v3596, %v3826
        %v3895 = vadd.f32 %v3597, %v3829
        %v3896 = vadd.f32 %v3598, %v3831
        %v3897 = vld [vmem:[%s4] sm:$0x1]
        %v3899 = vperm.slane %v3897, 0
        %v3901 = vadd.f32 %v3833, %v3899
        %v3902 = vadd.f32 %v3834, %v3899
        %v3903 = vadd.f32 %v3835, %v3899
        %v3904 = vadd.f32 %v3836, %v3899
        %v3905 = vadd.f32 %v3837, %v3899
        %v3906 = vadd.f32 %v3838, %v3899
        %v3907 = vadd.f32 %v3839, %v3899
        %v3908 = vadd.f32 %v3840, %v3899
        %v3909 = vadd.f32 %v3841, %v3899
        %v3910 = vadd.f32 %v3842, %v3899
        %v3911 = vadd.f32 %v3843, %v3899
        %v3912 = vadd.f32 %v3844, %v3899
        %v3913 = vadd.f32 %v3845, %v3899
        %v3914 = vadd.f32 %v3846, %v3899
        %v3915 = vadd.f32 %v3847, %v3899
        %v3916 = vadd.f32 %v3848, %v3899
        %v3917 = vadd.f32 %v3849, %v3899
        %v3918 = vadd.f32 %v3850, %v3899
        %v3919 = vadd.f32 %v3851, %v3899
        %v3920 = vadd.f32 %v3852, %v3899
        %v3921 = vadd.f32 %v3853, %v3899
        %v3922 = vadd.f32 %v3854, %v3899
        %v3923 = vadd.f32 %v3855, %v3899
        %v3924 = vadd.f32 %v3856, %v3899
        %v3925 = vadd.f32 %v3857, %v3899
        %v3926 = vadd.f32 %v3858, %v3899
        %v3927 = vadd.f32 %v3859, %v3899
        %v3928 = vadd.f32 %v3860, %v3899
        %v3929 = vadd.f32 %v3861, %v3899
        %v3930 = vadd.f32 %v3862, %v3899
        %v3931 = vadd.f32 %v3863, %v3899
        %v3932 = vadd.f32 %v3864, %v3899
        %v3933 = vadd.f32 %v3865, %v3899
        %v3934 = vadd.f32 %v3866, %v3899
        %v3935 = vadd.f32 %v3867, %v3899
        %v3936 = vadd.f32 %v3868, %v3899
        %v3937 = vadd.f32 %v3869, %v3899
        %v3938 = vadd.f32 %v3870, %v3899
        %v3939 = vadd.f32 %v3871, %v3899
        %v3940 = vadd.f32 %v3872, %v3899
        %v3941 = vadd.f32 %v3873, %v3899
        %v3942 = vadd.f32 %v3874, %v3899
        %v3943 = vadd.f32 %v3875, %v3899
        %v3944 = vadd.f32 %v3876, %v3899
        %v3945 = vadd.f32 %v3877, %v3899
        %v3946 = vadd.f32 %v3878, %v3899
        %v3947 = vadd.f32 %v3879, %v3899
        %v3948 = vadd.f32 %v3880, %v3899
        %v3949 = vadd.f32 %v3881, %v3899
        %v3950 = vadd.f32 %v3882, %v3899
        %v3951 = vadd.f32 %v3883, %v3899
        %v3952 = vadd.f32 %v3884, %v3899
        %v3953 = vadd.f32 %v3885, %v3899
        %v3954 = vadd.f32 %v3886, %v3899
        %v3955 = vadd.f32 %v3887, %v3899
        %v3956 = vadd.f32 %v3888, %v3899
        %v3957 = vadd.f32 %v3889, %v3899
        %v3958 = vadd.f32 %v3890, %v3899
        %v3959 = vadd.f32 %v3891, %v3899
        %v3960 = vadd.f32 %v3892, %v3899
        %v3961 = vadd.f32 %v3893, %v3899
        %v3962 = vadd.f32 %v3894, %v3899
        %v3963 = vadd.f32 %v3895, %v3899
        %v3964 = vadd.f32 %v3896, %v3899
        %v3965 = vmax.f32 %v3901, 0.0
        %v3966 = vmax.f32 %v3902, 0.0
        %v3967 = vmax.f32 %v3903, 0.0
        %v3968 = vmax.f32 %v3904, 0.0
        %v3969 = vmax.f32 %v3905, 0.0
        %v3970 = vmax.f32 %v3906, 0.0
        %v3971 = vmax.f32 %v3907, 0.0
        %v3972 = vmax.f32 %v3908, 0.0
        %v3973 = vmax.f32 %v3909, 0.0
        %v3974 = vmax.f32 %v3910, 0.0
        %v3975 = vmax.f32 %v3911, 0.0
        %v3976 = vmax.f32 %v3912, 0.0
        %v3977 = vmax.f32 %v3913, 0.0
        %v3978 = vmax.f32 %v3914, 0.0
        %v3979 = vmax.f32 %v3915, 0.0
        %v3980 = vmax.f32 %v3916, 0.0
        %v3981 = vmax.f32 %v3917, 0.0
        %v3982 = vmax.f32 %v3918, 0.0
        %v3983 = vmax.f32 %v3919, 0.0
        %v3984 = vmax.f32 %v3920, 0.0
        %v3985 = vmax.f32 %v3921, 0.0
        %v3986 = vmax.f32 %v3922, 0.0
        %v3987 = vmax.f32 %v3923, 0.0
        %v3988 = vmax.f32 %v3924, 0.0
        %v3989 = vmax.f32 %v3925, 0.0
        %v3990 = vmax.f32 %v3926, 0.0
        %v3991 = vmax.f32 %v3927, 0.0
        %v3992 = vmax.f32 %v3928, 0.0
        %v3993 = vmax.f32 %v3929, 0.0
        %v3994 = vmax.f32 %v3930, 0.0
        %v3995 = vmax.f32 %v3931, 0.0
        %v3996 = vmax.f32 %v3932, 0.0
        %v3997 = vmax.f32 %v3933, 0.0
        %v3998 = vmax.f32 %v3934, 0.0
        %v3999 = vmax.f32 %v3935, 0.0
        %v4000 = vmax.f32 %v3936, 0.0
        %v4001 = vmax.f32 %v3937, 0.0
        %v4002 = vmax.f32 %v3938, 0.0
        %v4003 = vmax.f32 %v3939, 0.0
        %v4004 = vmax.f32 %v3940, 0.0
        %v4005 = vmax.f32 %v3941, 0.0
        %v4006 = vmax.f32 %v3942, 0.0
        %v4007 = vmax.f32 %v3943, 0.0
        %v4008 = vmax.f32 %v3944, 0.0
        %v4009 = vmax.f32 %v3945, 0.0
        %v4010 = vmax.f32 %v3946, 0.0
        %v4011 = vmax.f32 %v3947, 0.0
        %v4012 = vmax.f32 %v3948, 0.0
        %v4013 = vmax.f32 %v3949, 0.0
        %v4014 = vmax.f32 %v3950, 0.0
        %v4015 = vmax.f32 %v3951, 0.0
        %v4016 = vmax.f32 %v3952, 0.0
        %v4017 = vmax.f32 %v3953, 0.0
        %v4018 = vmax.f32 %v3954, 0.0
        %v4019 = vmax.f32 %v3955, 0.0
        %v4020 = vmax.f32 %v3956, 0.0
        %v4021 = vmax.f32 %v3957, 0.0
        %v4022 = vmax.f32 %v3958, 0.0
        %v4023 = vmax.f32 %v3959, 0.0
        %v4024 = vmax.f32 %v3960, 0.0
        %v4025 = vmax.f32 %v3961, 0.0
        %v4026 = vmax.f32 %v3962, 0.0
        %v4027 = vmax.f32 %v3963, 0.0
        %v4028 = vmax.f32 %v3964, 0.0
        %v4029 = vpack.c.bf16 %v3965, %v3965
        %v4030 = vpack.c.bf16 %v3966, %v3966
        %v4031 = vpack.c.bf16 %v3967, %v3967
        %v4032 = vpack.c.bf16 %v3968, %v3968
        %v4033 = vpack.c.bf16 %v3969, %v3969
        %v4034 = vpack.c.bf16 %v3970, %v3970
        %v4035 = vpack.c.bf16 %v3971, %v3971
        %v4036 = vpack.c.bf16 %v3972, %v3972
        %v4037 = vpack.c.bf16 %v3973, %v3973
        %v4038 = vpack.c.bf16 %v3974, %v3974
        %v4039 = vpack.c.bf16 %v3975, %v3975
        %v4040 = vpack.c.bf16 %v3976, %v3976
        %v4041 = vpack.c.bf16 %v3977, %v3977
        %v4042 = vpack.c.bf16 %v3978, %v3978
        %v4043 = vpack.c.bf16 %v3979, %v3979
        %v4044 = vpack.c.bf16 %v3980, %v3980
        %v4045 = vpack.c.bf16 %v3981, %v3981
        %v4046 = vpack.c.bf16 %v3982, %v3982
        %v4047 = vpack.c.bf16 %v3983, %v3983
        %v4048 = vpack.c.bf16 %v3984, %v3984
        %v4049 = vpack.c.bf16 %v3985, %v3985
        %v4050 = vpack.c.bf16 %v3986, %v3986
        %v4051 = vpack.c.bf16 %v3987, %v3987
        %v4052 = vpack.c.bf16 %v3988, %v3988
        %v4053 = vpack.c.bf16 %v3989, %v3989
        %v4054 = vpack.c.bf16 %v3990, %v3990
        %v4055 = vpack.c.bf16 %v3991, %v3991
        %v4056 = vpack.c.bf16 %v3992, %v3992
        %v4057 = vpack.c.bf16 %v3993, %v3993
        %v4058 = vpack.c.bf16 %v3994, %v3994
        %v4059 = vpack.c.bf16 %v3995, %v3995
        %v4060 = vpack.c.bf16 %v3996, %v3996
        %v4061 = vpack.c.bf16 %v3997, %v3997
        %v4062 = vpack.c.bf16 %v3998, %v3998
        %v4063 = vpack.c.bf16 %v3999, %v3999
        %v4064 = vpack.c.bf16 %v4000, %v4000
        %v4065 = vpack.c.bf16 %v4001, %v4001
        %v4066 = vpack.c.bf16 %v4002, %v4002
        %v4067 = vpack.c.bf16 %v4003, %v4003
        %v4068 = vpack.c.bf16 %v4004, %v4004
        %v4069 = vpack.c.bf16 %v4005, %v4005
        %v4070 = vpack.c.bf16 %v4006, %v4006
        %v4071 = vpack.c.bf16 %v4007, %v4007
        %v4072 = vpack.c.bf16 %v4008, %v4008
        %v4073 = vpack.c.bf16 %v4009, %v4009
        %v4074 = vpack.c.bf16 %v4010, %v4010
        %v4075 = vpack.c.bf16 %v4011, %v4011
        %v4076 = vpack.c.bf16 %v4012, %v4012
        %v4077 = vpack.c.bf16 %v4013, %v4013
        %v4078 = vpack.c.bf16 %v4014, %v4014
        %v4079 = vpack.c.bf16 %v4015, %v4015
        %v4080 = vpack.c.bf16 %v4016, %v4016
        %v4081 = vpack.c.bf16 %v4017, %v4017
        %v4082 = vpack.c.bf16 %v4018, %v4018
        %v4083 = vpack.c.bf16 %v4019, %v4019
        %v4084 = vpack.c.bf16 %v4020, %v4020
        %v4085 = vpack.c.bf16 %v4021, %v4021
        %v4086 = vpack.c.bf16 %v4022, %v4022
        %v4087 = vpack.c.bf16 %v4023, %v4023
        %v4088 = vpack.c.bf16 %v4024, %v4024
        %v4089 = vpack.c.bf16 %v4025, %v4025
        %v4090 = vpack.c.bf16 %v4026, %v4026
        %v4091 = vpack.c.bf16 %v4027, %v4027
        %v4092 = vpack.c.bf16 %v4028, %v4028
        %v4157 = vunpack.c.l.b16 %v4029
        %v4158 = vunpack.c.l.b16 %v4030
        %v4159 = vunpack.c.l.b16 %v4031
        %v4160 = vunpack.c.l.b16 %v4032
        %v4161 = vunpack.c.l.b16 %v4033
        %v4162 = vunpack.c.l.b16 %v4034
        %v4163 = vunpack.c.l.b16 %v4035
        %v4164 = vunpack.c.l.b16 %v4036
        %v4165 = vunpack.c.l.b16 %v4037
        %v4166 = vunpack.c.l.b16 %v4038
        %v4167 = vunpack.c.l.b16 %v4039
        %v4168 = vunpack.c.l.b16 %v4040
        %v4169 = vunpack.c.l.b16 %v4041
        %v4170 = vunpack.c.l.b16 %v4042
        %v4171 = vunpack.c.l.b16 %v4043
        %v4172 = vunpack.c.l.b16 %v4044
        %v4173 = vunpack.c.l.b16 %v4045
        %v4174 = vunpack.c.l.b16 %v4046
        %v4175 = vunpack.c.l.b16 %v4047
        %v4176 = vunpack.c.l.b16 %v4048
        %v4177 = vunpack.c.l.b16 %v4049
        %v4178 = vunpack.c.l.b16 %v4050
        %v4179 = vunpack.c.l.b16 %v4051
        %v4180 = vunpack.c.l.b16 %v4052
        %v4181 = vunpack.c.l.b16 %v4053
        %v4182 = vunpack.c.l.b16 %v4054
        %v4183 = vunpack.c.l.b16 %v4055
        %v4184 = vunpack.c.l.b16 %v4056
        %v4185 = vunpack.c.l.b16 %v4057
        %v4186 = vunpack.c.l.b16 %v4058
        %v4187 = vunpack.c.l.b16 %v4059
        %v4188 = vunpack.c.l.b16 %v4060
        %v4189 = vunpack.c.l.b16 %v4061
        %v4190 = vunpack.c.l.b16 %v4062
        %v4191 = vunpack.c.l.b16 %v4063
        %v4192 = vunpack.c.l.b16 %v4064
        %v4193 = vunpack.c.l.b16 %v4065
        %v4194 = vunpack.c.l.b16 %v4066
        %v4195 = vunpack.c.l.b16 %v4067
        %v4196 = vunpack.c.l.b16 %v4068
        %v4197 = vunpack.c.l.b16 %v4069
        %v4198 = vunpack.c.l.b16 %v4070
        %v4199 = vunpack.c.l.b16 %v4071
        %v4200 = vunpack.c.l.b16 %v4072
        %v4201 = vunpack.c.l.b16 %v4073
        %v4202 = vunpack.c.l.b16 %v4074
        %v4203 = vunpack.c.l.b16 %v4075
        %v4204 = vunpack.c.l.b16 %v4076
        %v4205 = vunpack.c.l.b16 %v4077
        %v4206 = vunpack.c.l.b16 %v4078
        %v4207 = vunpack.c.l.b16 %v4079
        %v4208 = vunpack.c.l.b16 %v4080
        %v4209 = vunpack.c.l.b16 %v4081
        %v4210 = vunpack.c.l.b16 %v4082
        %v4211 = vunpack.c.l.b16 %v4083
        %v4212 = vunpack.c.l.b16 %v4084
        %v4213 = vunpack.c.l.b16 %v4085
        %v4214 = vunpack.c.l.b16 %v4086
        %v4215 = vunpack.c.l.b16 %v4087
        %v4216 = vunpack.c.l.b16 %v4088
        %v4217 = vunpack.c.l.b16 %v4089
        %v4218 = vunpack.c.l.b16 %v4090
        %v4219 = vunpack.c.l.b16 %v4091
        %v4220 = vunpack.c.l.b16 %v4092
        %v4221 = vpack.c.b16 %v4158, %v4157
        %v4222 = vpack.c.b16 %v4160, %v4159
        %v4223 = vpack.c.b16 %v4162, %v4161
        %v4224 = vpack.c.b16 %v4164, %v4163
        %v4225 = vpack.c.b16 %v4166, %v4165
        %v4226 = vpack.c.b16 %v4168, %v4167
        %v4227 = vpack.c.b16 %v4170, %v4169
        %v4228 = vpack.c.b16 %v4172, %v4171
        %v4229 = vpack.c.b16 %v4174, %v4173
        %v4230 = vpack.c.b16 %v4176, %v4175
        %v4231 = vpack.c.b16 %v4178, %v4177
        %v4232 = vpack.c.b16 %v4180, %v4179
        %v4233 = vpack.c.b16 %v4182, %v4181
        %v4234 = vpack.c.b16 %v4184, %v4183
        %v4235 = vpack.c.b16 %v4186, %v4185
        %v4236 = vpack.c.b16 %v4188, %v4187
        %v4237 = vpack.c.b16 %v4190, %v4189
        %v4238 = vpack.c.b16 %v4192, %v4191
        %v4239 = vpack.c.b16 %v4194, %v4193
        %v4240 = vpack.c.b16 %v4196, %v4195
        %v4241 = vpack.c.b16 %v4198, %v4197
        %v4242 = vpack.c.b16 %v4200, %v4199
        %v4243 = vpack.c.b16 %v4202, %v4201
        %v4244 = vpack.c.b16 %v4204, %v4203
        %v4245 = vpack.c.b16 %v4206, %v4205
        %v4246 = vpack.c.b16 %v4208, %v4207
        %v4247 = vpack.c.b16 %v4210, %v4209
        %v4248 = vpack.c.b16 %v4212, %v4211
        %v4249 = vpack.c.b16 %v4214, %v4213
        %v4250 = vpack.c.b16 %v4216, %v4215
        %v4251 = vpack.c.b16 %v4218, %v4217
        %v4252 = vpack.c.b16 %v4220, %v4219
        %v4286 = vshrl.u32 %v4221, 16
        %v4288 = vrot.slane %v4286, 7
        %v4289 = vshll.u32 %v4221, 16
        %v4291 = vor.u32 %v4288, %v4289
        %v4293 = vshrl.u32 %v4222, 16
        %v4295 = vrot.slane %v4293, 7
        %v4296 = vshll.u32 %v4222, 16
        %v4298 = vor.u32 %v4295, %v4296
        %v4299 = vsel %vm834, %v4288, %v4298
        %v4301 = vshrl.u32 %v4223, 16
        %v4303 = vrot.slane %v4301, 7
        %v4304 = vshll.u32 %v4223, 16
        %v4306 = vor.u32 %v4303, %v4304
        %v4308 = vshrl.u32 %v4224, 16
        %v4310 = vrot.slane %v4308, 7
        %v4311 = vshll.u32 %v4224, 16
        %v4313 = vor.u32 %v4310, %v4311
        %v4314 = vsel %vm834, %v4303, %v4313
        %v4316 = vshrl.u32 %v4225, 16
        %v4318 = vrot.slane %v4316, 7
        %v4319 = vshll.u32 %v4225, 16
        %v4321 = vor.u32 %v4318, %v4319
        %v4323 = vshrl.u32 %v4226, 16
        %v4325 = vrot.slane %v4323, 7
        %v4326 = vshll.u32 %v4226, 16
        %v4328 = vor.u32 %v4325, %v4326
        %v4329 = vsel %vm834, %v4318, %v4328
        %v4331 = vshrl.u32 %v4227, 16
        %v4333 = vrot.slane %v4331, 7
        %v4334 = vshll.u32 %v4227, 16
        %v4336 = vor.u32 %v4333, %v4334
        %v4338 = vshrl.u32 %v4228, 16
        %v4340 = vrot.slane %v4338, 7
        %v4341 = vshll.u32 %v4228, 16
        %v4343 = vor.u32 %v4340, %v4341
        %v4344 = vsel %vm834, %v4333, %v4343
        %v4346 = vshrl.u32 %v4229, 16
        %v4348 = vrot.slane %v4346, 7
        %v4349 = vshll.u32 %v4229, 16
        %v4351 = vor.u32 %v4348, %v4349
        %v4353 = vshrl.u32 %v4230, 16
        %v4355 = vrot.slane %v4353, 7
        %v4356 = vshll.u32 %v4230, 16
        %v4358 = vor.u32 %v4355, %v4356
        %v4359 = vsel %vm834, %v4348, %v4358
        %v4361 = vshrl.u32 %v4231, 16
        %v4363 = vrot.slane %v4361, 7
        %v4364 = vshll.u32 %v4231, 16
        %v4366 = vor.u32 %v4363, %v4364
        %v4368 = vshrl.u32 %v4232, 16
        %v4370 = vrot.slane %v4368, 7
        %v4371 = vshll.u32 %v4232, 16
        %v4373 = vor.u32 %v4370, %v4371
        %v4374 = vsel %vm834, %v4363, %v4373
        %v4376 = vshrl.u32 %v4233, 16
        %v4378 = vrot.slane %v4376, 7
        %v4379 = vshll.u32 %v4233, 16
        %v4381 = vor.u32 %v4378, %v4379
        %v4383 = vshrl.u32 %v4234, 16
        %v4385 = vrot.slane %v4383, 7
        %v4386 = vshll.u32 %v4234, 16
        %v4388 = vor.u32 %v4385, %v4386
        %v4389 = vsel %vm834, %v4378, %v4388
        %v4391 = vshrl.u32 %v4235, 16
        %v4393 = vrot.slane %v4391, 7
        %v4394 = vshll.u32 %v4235, 16
        %v4396 = vor.u32 %v4393, %v4394
        %v4398 = vshrl.u32 %v4236, 16
        %v4400 = vrot.slane %v4398, 7
        %v4401 = vshll.u32 %v4236, 16
        %v4403 = vor.u32 %v4400, %v4401
        %v4404 = vsel %vm834, %v4393, %v4403
        %v4406 = vshrl.u32 %v4237, 16
        %v4408 = vrot.slane %v4406, 7
        %v4409 = vshll.u32 %v4237, 16
        %v4411 = vor.u32 %v4408, %v4409
        %v4413 = vshrl.u32 %v4238, 16
        %v4415 = vrot.slane %v4413, 7
        %v4416 = vshll.u32 %v4238, 16
        %v4418 = vor.u32 %v4415, %v4416
        %v4419 = vsel %vm834, %v4408, %v4418
        %v4421 = vshrl.u32 %v4239, 16
        %v4423 = vrot.slane %v4421, 7
        %v4424 = vshll.u32 %v4239, 16
        %v4426 = vor.u32 %v4423, %v4424
        %v4428 = vshrl.u32 %v4240, 16
        %v4430 = vrot.slane %v4428, 7
        %v4431 = vshll.u32 %v4240, 16
        %v4433 = vor.u32 %v4430, %v4431
        %v4434 = vsel %vm834, %v4423, %v4433
        %v4436 = vshrl.u32 %v4241, 16
        %v4438 = vrot.slane %v4436, 7
        %v4439 = vshll.u32 %v4241, 16
        %v4441 = vor.u32 %v4438, %v4439
        %v4443 = vshrl.u32 %v4242, 16
        %v4445 = vrot.slane %v4443, 7
        %v4446 = vshll.u32 %v4242, 16
        %v4448 = vor.u32 %v4445, %v4446
        %v4449 = vsel %vm834, %v4438, %v4448
        %v4451 = vshrl.u32 %v4243, 16
        %v4453 = vrot.slane %v4451, 7
        %v4454 = vshll.u32 %v4243, 16
        %v4456 = vor.u32 %v4453, %v4454
        %v4458 = vshrl.u32 %v4244, 16
        %v4460 = vrot.slane %v4458, 7
        %v4461 = vshll.u32 %v4244, 16
        %v4463 = vor.u32 %v4460, %v4461
        %v4464 = vsel %vm834, %v4453, %v4463
        %v4466 = vshrl.u32 %v4245, 16
        %v4468 = vrot.slane %v4466, 7
        %v4469 = vshll.u32 %v4245, 16
        %v4471 = vor.u32 %v4468, %v4469
        %v4473 = vshrl.u32 %v4246, 16
        %v4475 = vrot.slane %v4473, 7
        %v4476 = vshll.u32 %v4246, 16
        %v4478 = vor.u32 %v4475, %v4476
        %v4479 = vsel %vm834, %v4468, %v4478
        %v4481 = vshrl.u32 %v4247, 16
        %v4483 = vrot.slane %v4481, 7
        %v4484 = vshll.u32 %v4247, 16
        %v4486 = vor.u32 %v4483, %v4484
        %v4488 = vshrl.u32 %v4248, 16
        %v4490 = vrot.slane %v4488, 7
        %v4491 = vshll.u32 %v4248, 16
        %v4493 = vor.u32 %v4490, %v4491
        %v4494 = vsel %vm834, %v4483, %v4493
        %v4496 = vshrl.u32 %v4249, 16
        %v4498 = vrot.slane %v4496, 7
        %v4499 = vshll.u32 %v4249, 16
        %v4501 = vor.u32 %v4498, %v4499
        %v4503 = vshrl.u32 %v4250, 16
        %v4505 = vrot.slane %v4503, 7
        %v4506 = vshll.u32 %v4250, 16
        %v4508 = vor.u32 %v4505, %v4506
        %v4509 = vsel %vm834, %v4498, %v4508
        %v4511 = vshrl.u32 %v4251, 16
        %v4513 = vrot.slane %v4511, 7
        %v4514 = vshll.u32 %v4251, 16
        %v4516 = vor.u32 %v4513, %v4514
        %v4518 = vshrl.u32 %v4252, 16
        %v4520 = vrot.slane %v4518, 7
        %v4521 = vshll.u32 %v4252, 16
        %v4523 = vor.u32 %v4520, %v4521
        %v4524 = vsel %vm834, %v4513, %v4523
        %v4573 = vsel %vm1142, 0, %v4291
        %v4574 = vsel %vm1142, 0, %v4306
        %v4575 = vsel %vm1142, 0, %v4321
        %v4576 = vsel %vm1142, 0, %v4336
        %v4577 = vsel %vm1142, 0, %v4351
        %v4578 = vsel %vm1142, 0, %v4366
        %v4579 = vsel %vm1142, 0, %v4381
        %v4580 = vsel %vm1142, 0, %v4396
        %v4581 = vsel %vm1142, 0, %v4411
        %v4582 = vsel %vm1142, 0, %v4426
        %v4583 = vsel %vm1142, 0, %v4441
        %v4584 = vsel %vm1142, 0, %v4456
        %v4585 = vsel %vm1142, 0, %v4471
        %v4586 = vsel %vm1142, 0, %v4486
        %v4587 = vsel %vm1142, 0, %v4501
        %v4588 = vsel %vm1142, 0, %v4516
        %v4589 = vunpack.c.l.bf16 %v4221
        %v4590 = vunpack.c.h.bf16 %v4221
        %v4591 = vunpack.c.l.bf16 %v4222
        %v4592 = vunpack.c.h.bf16 %v4222
        %v4593 = vunpack.c.l.bf16 0
        %v4594 = vunpack.c.l.bf16 %v4223
        %v4595 = vunpack.c.h.bf16 %v4223
        %v4596 = vunpack.c.l.bf16 %v4224
        %v4597 = vunpack.c.h.bf16 %v4224
        %v4598 = vunpack.c.l.bf16 %v4225
        %v4599 = vunpack.c.h.bf16 %v4225
        %v4600 = vunpack.c.l.bf16 %v4226
        %v4601 = vunpack.c.h.bf16 %v4226
        %v4602 = vunpack.c.l.bf16 %v4227
        %v4603 = vunpack.c.h.bf16 %v4227
        %v4604 = vunpack.c.l.bf16 %v4228
        %v4605 = vunpack.c.h.bf16 %v4228
        %v4606 = vunpack.c.l.bf16 %v4229
        %v4607 = vunpack.c.h.bf16 %v4229
        %v4608 = vunpack.c.l.bf16 %v4230
        %v4609 = vunpack.c.h.bf16 %v4230
        %v4610 = vunpack.c.l.bf16 %v4231
        %v4611 = vunpack.c.h.bf16 %v4231
        %v4612 = vunpack.c.l.bf16 %v4232
        %v4613 = vunpack.c.h.bf16 %v4232
        %v4614 = vunpack.c.l.bf16 %v4233
        %v4615 = vunpack.c.h.bf16 %v4233
        %v4616 = vunpack.c.l.bf16 %v4234
        %v4617 = vunpack.c.h.bf16 %v4234
        %v4618 = vunpack.c.l.bf16 %v4235
        %v4619 = vunpack.c.h.bf16 %v4235
        %v4620 = vunpack.c.l.bf16 %v4236
        %v4621 = vunpack.c.h.bf16 %v4236
        %v4622 = vunpack.c.l.bf16 %v4237
        %v4623 = vunpack.c.h.bf16 %v4237
        %v4624 = vunpack.c.l.bf16 %v4238
        %v4625 = vunpack.c.h.bf16 %v4238
        %v4626 = vunpack.c.l.bf16 %v4239
        %v4627 = vunpack.c.h.bf16 %v4239
        %v4628 = vunpack.c.l.bf16 %v4240
        %v4629 = vunpack.c.h.bf16 %v4240
        %v4630 = vunpack.c.l.bf16 %v4241
        %v4631 = vunpack.c.h.bf16 %v4241
        %v4632 = vunpack.c.l.bf16 %v4242
        %v4633 = vunpack.c.h.bf16 %v4242
        %v4634 = vunpack.c.l.bf16 %v4243
        %v4635 = vunpack.c.h.bf16 %v4243
        %v4636 = vunpack.c.l.bf16 %v4244
        %v4637 = vunpack.c.h.bf16 %v4244
        %v4638 = vunpack.c.l.bf16 %v4245
        %v4639 = vunpack.c.h.bf16 %v4245
        %v4640 = vunpack.c.l.bf16 %v4246
        %v4641 = vunpack.c.h.bf16 %v4246
        %v4642 = vunpack.c.l.bf16 %v4247
        %v4643 = vunpack.c.h.bf16 %v4247
        %v4644 = vunpack.c.l.bf16 %v4248
        %v4645 = vunpack.c.h.bf16 %v4248
        %v4646 = vunpack.c.l.bf16 %v4249
        %v4647 = vunpack.c.h.bf16 %v4249
        %v4648 = vunpack.c.l.bf16 %v4250
        %v4649 = vunpack.c.h.bf16 %v4250
        %v4650 = vunpack.c.l.bf16 %v4251
        %v4651 = vunpack.c.h.bf16 %v4251
        %v4652 = vunpack.c.l.bf16 %v4252
        %v4653 = vunpack.c.h.bf16 %v4252
        %v4654 = vmul.f32 %v4589, 0.25
        %v4655 = vmul.f32 %v4590, 0.25
        %v4656 = vmul.f32 %v4591, 0.25
        %v4657 = vmul.f32 %v4592, 0.25
        %v4658 = vmul.f32 %v4593, 0.25
        %v4659 = vmul.f32 %v4594, 0.25
        %v4660 = vmul.f32 %v4595, 0.25
        %v4661 = vmul.f32 %v4596, 0.25
        %v4662 = vmul.f32 %v4597, 0.25
        %v4663 = vmul.f32 %v4598, 0.25
        %v4664 = vmul.f32 %v4599, 0.25
        %v4665 = vmul.f32 %v4600, 0.25
        %v4666 = vmul.f32 %v4601, 0.25
        %v4667 = vmul.f32 %v4602, 0.25
        %v4668 = vmul.f32 %v4603, 0.25
        %v4669 = vmul.f32 %v4604, 0.25
        %v4670 = vmul.f32 %v4605, 0.25
        %v4671 = vmul.f32 %v4606, 0.25
        %v4672 = vmul.f32 %v4607, 0.25
        %v4673 = vmul.f32 %v4608, 0.25
        %v4674 = vmul.f32 %v4609, 0.25
        %v4675 = vmul.f32 %v4610, 0.25
        %v4676 = vmul.f32 %v4611, 0.25
        %v4677 = vmul.f32 %v4612, 0.25
        %v4678 = vmul.f32 %v4613, 0.25
        %v4679 = vmul.f32 %v4614, 0.25
        %v4680 = vmul.f32 %v4615, 0.25
        %v4681 = vmul.f32 %v4616, 0.25
        %v4682 = vmul.f32 %v4617, 0.25
        %v4683 = vmul.f32 %v4618, 0.25
        %v4684 = vmul.f32 %v4619, 0.25
        %v4685 = vmul.f32 %v4620, 0.25
        %v4686 = vmul.f32 %v4621, 0.25
        %v4687 = vmul.f32 %v4622, 0.25
        %v4688 = vmul.f32 %v4623, 0.25
        %v4689 = vmul.f32 %v4624, 0.25
        %v4690 = vmul.f32 %v4625, 0.25
        %v4691 = vmul.f32 %v4626, 0.25
        %v4692 = vmul.f32 %v4627, 0.25
        %v4693 = vmul.f32 %v4628, 0.25
        %v4694 = vmul.f32 %v4629, 0.25
        %v4695 = vmul.f32 %v4630, 0.25
        %v4696 = vmul.f32 %v4631, 0.25
        %v4697 = vmul.f32 %v4632, 0.25
        %v4698 = vmul.f32 %v4633, 0.25
        %v4699 = vmul.f32 %v4634, 0.25
        %v4700 = vmul.f32 %v4635, 0.25
        %v4701 = vmul.f32 %v4636, 0.25
        %v4702 = vmul.f32 %v4637, 0.25
        %v4703 = vmul.f32 %v4638, 0.25
        %v4704 = vmul.f32 %v4639, 0.25
        %v4705 = vmul.f32 %v4640, 0.25
        %v4706 = vmul.f32 %v4641, 0.25
        %v4707 = vmul.f32 %v4642, 0.25
        %v4708 = vmul.f32 %v4643, 0.25
        %v4709 = vmul.f32 %v4644, 0.25
        %v4710 = vmul.f32 %v4645, 0.25
        %v4711 = vmul.f32 %v4646, 0.25
        %v4712 = vmul.f32 %v4647, 0.25
        %v4713 = vmul.f32 %v4648, 0.25
        %v4714 = vmul.f32 %v4649, 0.25
        %v4715 = vmul.f32 %v4650, 0.25
        %v4716 = vmul.f32 %v4651, 0.25
        %v4717 = vmul.f32 %v4652, 0.25
        %v4718 = vmul.f32 %v4653, 0.25
        %v4719 = vpack.c.bf16 %v4654, %v4654
        %v4720 = vpack.c.bf16 %v4655, %v4655
        %v4721 = vpack.c.bf16 %v4656, %v4656
        %v4722 = vpack.c.bf16 %v4657, %v4657
        %v4723 = vpack.c.bf16 %v4658, %v4658
        %v4724 = vpack.c.bf16 %v4659, %v4659
        %v4725 = vpack.c.bf16 %v4660, %v4660
        %v4726 = vpack.c.bf16 %v4661, %v4661
        %v4727 = vpack.c.bf16 %v4662, %v4662
        %v4728 = vpack.c.bf16 %v4663, %v4663
        %v4729 = vpack.c.bf16 %v4664, %v4664
        %v4730 = vpack.c.bf16 %v4665, %v4665
        %v4731 = vpack.c.bf16 %v4666, %v4666
        %v4732 = vpack.c.bf16 %v4667, %v4667
        %v4733 = vpack.c.bf16 %v4668, %v4668
        %v4734 = vpack.c.bf16 %v4669, %v4669
        %v4735 = vpack.c.bf16 %v4670, %v4670
        %v4736 = vpack.c.bf16 %v4671, %v4671
        %v4737 = vpack.c.bf16 %v4672, %v4672
        %v4738 = vpack.c.bf16 %v4673, %v4673
        %v4739 = vpack.c.bf16 %v4674, %v4674
        %v4740 = vpack.c.bf16 %v4675, %v4675
        %v4741 = vpack.c.bf16 %v4676, %v4676
        %v4742 = vpack.c.bf16 %v4677, %v4677
        %v4743 = vpack.c.bf16 %v4678, %v4678
        %v4744 = vpack.c.bf16 %v4679, %v4679
        %v4745 = vpack.c.bf16 %v4680, %v4680
        %v4746 = vpack.c.bf16 %v4681, %v4681
        %v4747 = vpack.c.bf16 %v4682, %v4682
        %v4748 = vpack.c.bf16 %v4683, %v4683
        %v4749 = vpack.c.bf16 %v4684, %v4684
        %v4750 = vpack.c.bf16 %v4685, %v4685
        %v4751 = vpack.c.bf16 %v4686, %v4686
        %v4752 = vpack.c.bf16 %v4687, %v4687
        %v4753 = vpack.c.bf16 %v4688, %v4688
        %v4754 = vpack.c.bf16 %v4689, %v4689
        %v4755 = vpack.c.bf16 %v4690, %v4690
        %v4756 = vpack.c.bf16 %v4691, %v4691
        %v4757 = vpack.c.bf16 %v4692, %v4692
        %v4758 = vpack.c.bf16 %v4693, %v4693
        %v4759 = vpack.c.bf16 %v4694, %v4694
        %v4760 = vpack.c.bf16 %v4695, %v4695
        %v4761 = vpack.c.bf16 %v4696, %v4696
        %v4762 = vpack.c.bf16 %v4697, %v4697
        %v4763 = vpack.c.bf16 %v4698, %v4698
        %v4764 = vpack.c.bf16 %v4699, %v4699
        %v4765 = vpack.c.bf16 %v4700, %v4700
        %v4766 = vpack.c.bf16 %v4701, %v4701
        %v4767 = vpack.c.bf16 %v4702, %v4702
        %v4768 = vpack.c.bf16 %v4703, %v4703
        %v4769 = vpack.c.bf16 %v4704, %v4704
        %v4770 = vpack.c.bf16 %v4705, %v4705
        %v4771 = vpack.c.bf16 %v4706, %v4706
        %v4772 = vpack.c.bf16 %v4707, %v4707
        %v4773 = vpack.c.bf16 %v4708, %v4708
        %v4774 = vpack.c.bf16 %v4709, %v4709
        %v4775 = vpack.c.bf16 %v4710, %v4710
        %v4776 = vpack.c.bf16 %v4711, %v4711
        %v4777 = vpack.c.bf16 %v4712, %v4712
        %v4778 = vpack.c.bf16 %v4713, %v4713
        %v4779 = vpack.c.bf16 %v4714, %v4714
        %v4780 = vpack.c.bf16 %v4715, %v4715
        %v4781 = vpack.c.bf16 %v4716, %v4716
        %v4782 = vpack.c.bf16 %v4717, %v4717
        %v4783 = vpack.c.bf16 %v4718, %v4718
        %v4784 = vunpack.c.l.bf16 %v4573
        %v4785 = vunpack.c.h.bf16 %v4573
        %v4786 = vunpack.c.l.bf16 %v4299
        %v4787 = vunpack.c.h.bf16 %v4299
        %v4788 = vunpack.c.l.bf16 %v4295
        %v4789 = vunpack.c.l.bf16 %v4574
        %v4790 = vunpack.c.h.bf16 %v4574
        %v4791 = vunpack.c.l.bf16 %v4314
        %v4792 = vunpack.c.h.bf16 %v4314
        %v4793 = vunpack.c.l.bf16 %v4310
        %v4794 = vunpack.c.l.bf16 %v4575
        %v4795 = vunpack.c.h.bf16 %v4575
        %v4796 = vunpack.c.l.bf16 %v4329
        %v4797 = vunpack.c.h.bf16 %v4329
        %v4798 = vunpack.c.l.bf16 %v4325
        %v4799 = vunpack.c.l.bf16 %v4576
        %v4800 = vunpack.c.h.bf16 %v4576
        %v4801 = vunpack.c.l.bf16 %v4344
        %v4802 = vunpack.c.h.bf16 %v4344
        %v4803 = vunpack.c.l.bf16 %v4340
        %v4804 = vunpack.c.l.bf16 %v4577
        %v4805 = vunpack.c.h.bf16 %v4577
        %v4806 = vunpack.c.l.bf16 %v4359
        %v4807 = vunpack.c.h.bf16 %v4359
        %v4808 = vunpack.c.l.bf16 %v4355
        %v4809 = vunpack.c.l.bf16 %v4578
        %v4810 = vunpack.c.h.bf16 %v4578
        %v4811 = vunpack.c.l.bf16 %v4374
        %v4812 = vunpack.c.h.bf16 %v4374
        %v4813 = vunpack.c.l.bf16 %v4370
        %v4814 = vunpack.c.l.bf16 %v4579
        %v4815 = vunpack.c.h.bf16 %v4579
        %v4816 = vunpack.c.l.bf16 %v4389
        %v4817 = vunpack.c.h.bf16 %v4389
        %v4818 = vunpack.c.l.bf16 %v4385
        %v4819 = vunpack.c.l.bf16 %v4580
        %v4820 = vunpack.c.h.bf16 %v4580
        %v4821 = vunpack.c.l.bf16 %v4404
        %v4822 = vunpack.c.h.bf16 %v4404
        %v4823 = vunpack.c.l.bf16 %v4400
        %v4824 = vunpack.c.l.bf16 %v4581
        %v4825 = vunpack.c.h.bf16 %v4581
        %v4826 = vunpack.c.l.bf16 %v4419
        %v4827 = vunpack.c.h.bf16 %v4419
        %v4828 = vunpack.c.l.bf16 %v4415
        %v4829 = vunpack.c.l.bf16 %v4582
        %v4830 = vunpack.c.h.bf16 %v4582
        %v4831 = vunpack.c.l.bf16 %v4434
        %v4832 = vunpack.c.h.bf16 %v4434
        %v4833 = vunpack.c.l.bf16 %v4430
        %v4834 = vunpack.c.l.bf16 %v4583
        %v4835 = vunpack.c.h.bf16 %v4583
        %v4836 = vunpack.c.l.bf16 %v4449
        %v4837 = vunpack.c.h.bf16 %v4449
        %v4838 = vunpack.c.l.bf16 %v4445
        %v4839 = vunpack.c.l.bf16 %v4584
        %v4840 = vunpack.c.h.bf16 %v4584
        %v4841 = vunpack.c.l.bf16 %v4464
        %v4842 = vunpack.c.h.bf16 %v4464
        %v4843 = vunpack.c.l.bf16 %v4460
        %v4844 = vunpack.c.l.bf16 %v4585
        %v4845 = vunpack.c.h.bf16 %v4585
        %v4846 = vunpack.c.l.bf16 %v4479
        %v4847 = vunpack.c.h.bf16 %v4479
        %v4848 = vunpack.c.l.bf16 %v4475
        %v4849 = vunpack.c.l.bf16 %v4586
        %v4850 = vunpack.c.h.bf16 %v4586
        %v4851 = vunpack.c.l.bf16 %v4494
        %v4852 = vunpack.c.h.bf16 %v4494
        %v4853 = vunpack.c.l.bf16 %v4490
        %v4854 = vunpack.c.l.bf16 %v4587
        %v4855 = vunpack.c.h.bf16 %v4587
        %v4856 = vunpack.c.l.bf16 %v4509
        %v4857 = vunpack.c.h.bf16 %v4509
        %v4858 = vunpack.c.l.bf16 %v4505
        %v4859 = vunpack.c.l.bf16 %v4588
        %v4860 = vunpack.c.h.bf16 %v4588
        %v4861 = vunpack.c.l.bf16 %v4524
        %v4862 = vunpack.c.h.bf16 %v4524
        %v4863 = vunpack.c.l.bf16 %v4520
        %v4864 = vmul.f32 %v4784, 0.75
        %v4865 = vmul.f32 %v4785, 0.75
        %v4866 = vmul.f32 %v4786, 0.75
        %v4867 = vmul.f32 %v4787, 0.75
        %v4868 = vmul.f32 %v4788, 0.75
        %v4869 = vmul.f32 %v4789, 0.75
        %v4870 = vmul.f32 %v4790, 0.75
        %v4871 = vmul.f32 %v4791, 0.75
        %v4872 = vmul.f32 %v4792, 0.75
        %v4873 = vmul.f32 %v4793, 0.75
        %v4874 = vmul.f32 %v4794, 0.75
        %v4875 = vmul.f32 %v4795, 0.75
        %v4876 = vmul.f32 %v4796, 0.75
        %v4877 = vmul.f32 %v4797, 0.75
        %v4878 = vmul.f32 %v4798, 0.75
        %v4879 = vmul.f32 %v4799, 0.75
        %v4880 = vmul.f32 %v4800, 0.75
        %v4881 = vmul.f32 %v4801, 0.75
        %v4882 = vmul.f32 %v4802, 0.75
        %v4883 = vmul.f32 %v4803, 0.75
        %v4884 = vmul.f32 %v4804, 0.75
        %v4885 = vmul.f32 %v4805, 0.75
        %v4886 = vmul.f32 %v4806, 0.75
        %v4887 = vmul.f32 %v4807, 0.75
        %v4888 = vmul.f32 %v4808, 0.75
        %v4889 = vmul.f32 %v4809, 0.75
        %v4890 = vmul.f32 %v4810, 0.75
        %v4891 = vmul.f32 %v4811, 0.75
        %v4892 = vmul.f32 %v4812, 0.75
        %v4893 = vmul.f32 %v4813, 0.75
        %v4894 = vmul.f32 %v4814, 0.75
        %v4895 = vmul.f32 %v4815, 0.75
        %v4896 = vmul.f32 %v4816, 0.75
        %v4897 = vmul.f32 %v4817, 0.75
        %v4898 = vmul.f32 %v4818, 0.75
        %v4899 = vmul.f32 %v4819, 0.75
        %v4900 = vmul.f32 %v4820, 0.75
        %v4901 = vmul.f32 %v4821, 0.75
        %v4902 = vmul.f32 %v4822, 0.75
        %v4903 = vmul.f32 %v4823, 0.75
        %v4904 = vmul.f32 %v4824, 0.75
        %v4905 = vmul.f32 %v4825, 0.75
        %v4906 = vmul.f32 %v4826, 0.75
        %v4907 = vmul.f32 %v4827, 0.75
        %v4908 = vmul.f32 %v4828, 0.75
        %v4909 = vmul.f32 %v4829, 0.75
        %v4910 = vmul.f32 %v4830, 0.75
        %v4911 = vmul.f32 %v4831, 0.75
        %v4912 = vmul.f32 %v4832, 0.75
        %v4913 = vmul.f32 %v4833, 0.75
        %v4914 = vmul.f32 %v4834, 0.75
        %v4915 = vmul.f32 %v4835, 0.75
        %v4916 = vmul.f32 %v4836, 0.75
        %v4917 = vmul.f32 %v4837, 0.75
        %v4918 = vmul.f32 %v4838, 0.75
        %v4919 = vmul.f32 %v4839, 0.75
        %v4920 = vmul.f32 %v4840, 0.75
        %v4921 = vmul.f32 %v4841, 0.75
        %v4922 = vmul.f32 %v4842, 0.75
        %v4923 = vmul.f32 %v4843, 0.75
        %v4924 = vmul.f32 %v4844, 0.75
        %v4925 = vmul.f32 %v4845, 0.75
        %v4926 = vmul.f32 %v4846, 0.75
        %v4927 = vmul.f32 %v4847, 0.75
        %v4928 = vmul.f32 %v4848, 0.75
        %v4929 = vmul.f32 %v4849, 0.75
        %v4930 = vmul.f32 %v4850, 0.75
        %v4931 = vmul.f32 %v4851, 0.75
        %v4932 = vmul.f32 %v4852, 0.75
        %v4933 = vmul.f32 %v4853, 0.75
        %v4934 = vmul.f32 %v4854, 0.75
        %v4935 = vmul.f32 %v4855, 0.75
        %v4936 = vmul.f32 %v4856, 0.75
        %v4937 = vmul.f32 %v4857, 0.75
        %v4938 = vmul.f32 %v4858, 0.75
        %v4939 = vmul.f32 %v4859, 0.75
        %v4940 = vmul.f32 %v4860, 0.75
        %v4941 = vmul.f32 %v4861, 0.75
        %v4942 = vmul.f32 %v4862, 0.75
        %v4943 = vmul.f32 %v4863, 0.75
        %v4944 = vpack.c.bf16 %v4864, %v4864
        %v4945 = vpack.c.bf16 %v4865, %v4865
        %v4946 = vpack.c.bf16 %v4866, %v4866
        %v4947 = vpack.c.bf16 %v4867, %v4867
        %v4948 = vpack.c.bf16 %v4868, %v4868
        %v4949 = vpack.c.bf16 %v4869, %v4869
        %v4950 = vpack.c.bf16 %v4870, %v4870
        %v4951 = vpack.c.bf16 %v4871, %v4871
        %v4952 = vpack.c.bf16 %v4872, %v4872
        %v4953 = vpack.c.bf16 %v4873, %v4873
        %v4954 = vpack.c.bf16 %v4874, %v4874
        %v4955 = vpack.c.bf16 %v4875, %v4875
        %v4956 = vpack.c.bf16 %v4876, %v4876
        %v4957 = vpack.c.bf16 %v4877, %v4877
        %v4958 = vpack.c.bf16 %v4878, %v4878
        %v4959 = vpack.c.bf16 %v4879, %v4879
        %v4960 = vpack.c.bf16 %v4880, %v4880
        %v4961 = vpack.c.bf16 %v4881, %v4881
        %v4962 = vpack.c.bf16 %v4882, %v4882
        %v4963 = vpack.c.bf16 %v4883, %v4883
        %v4964 = vpack.c.bf16 %v4884, %v4884
        %v4965 = vpack.c.bf16 %v4885, %v4885
        %v4966 = vpack.c.bf16 %v4886, %v4886
        %v4967 = vpack.c.bf16 %v4887, %v4887
        %v4968 = vpack.c.bf16 %v4888, %v4888
        %v4969 = vpack.c.bf16 %v4889, %v4889
        %v4970 = vpack.c.bf16 %v4890, %v4890
        %v4971 = vpack.c.bf16 %v4891, %v4891
        %v4972 = vpack.c.bf16 %v4892, %v4892
        %v4973 = vpack.c.bf16 %v4893, %v4893
        %v4974 = vpack.c.bf16 %v4894, %v4894
        %v4975 = vpack.c.bf16 %v4895, %v4895
        %v4976 = vpack.c.bf16 %v4896, %v4896
        %v4977 = vpack.c.bf16 %v4897, %v4897
        %v4978 = vpack.c.bf16 %v4898, %v4898
        %v4979 = vpack.c.bf16 %v4899, %v4899
        %v4980 = vpack.c.bf16 %v4900, %v4900
        %v4981 = vpack.c.bf16 %v4901, %v4901
        %v4982 = vpack.c.bf16 %v4902, %v4902
        %v4983 = vpack.c.bf16 %v4903, %v4903
        %v4984 = vpack.c.bf16 %v4904, %v4904
        %v4985 = vpack.c.bf16 %v4905, %v4905
        %v4986 = vpack.c.bf16 %v4906, %v4906
        %v4987 = vpack.c.bf16 %v4907, %v4907
        %v4988 = vpack.c.bf16 %v4908, %v4908
        %v4989 = vpack.c.bf16 %v4909, %v4909
        %v4990 = vpack.c.bf16 %v4910, %v4910
        %v4991 = vpack.c.bf16 %v4911, %v4911
        %v4992 = vpack.c.bf16 %v4912, %v4912
        %v4993 = vpack.c.bf16 %v4913, %v4913
        %v4994 = vpack.c.bf16 %v4914, %v4914
        %v4995 = vpack.c.bf16 %v4915, %v4915
        %v4996 = vpack.c.bf16 %v4916, %v4916
        %v4997 = vpack.c.bf16 %v4917, %v4917
        %v4998 = vpack.c.bf16 %v4918, %v4918
        %v4999 = vpack.c.bf16 %v4919, %v4919
        %v5000 = vpack.c.bf16 %v4920, %v4920
        %v5001 = vpack.c.bf16 %v4921, %v4921
        %v5002 = vpack.c.bf16 %v4922, %v4922
        %v5003 = vpack.c.bf16 %v4923, %v4923
        %v5004 = vpack.c.bf16 %v4924, %v4924
        %v5005 = vpack.c.bf16 %v4925, %v4925
        %v5006 = vpack.c.bf16 %v4926, %v4926
        %v5007 = vpack.c.bf16 %v4927, %v4927
        %v5008 = vpack.c.bf16 %v4928, %v4928
        %v5009 = vpack.c.bf16 %v4929, %v4929
        %v5010 = vpack.c.bf16 %v4930, %v4930
        %v5011 = vpack.c.bf16 %v4931, %v4931
        %v5012 = vpack.c.bf16 %v4932, %v4932
        %v5013 = vpack.c.bf16 %v4933, %v4933
        %v5014 = vpack.c.bf16 %v4934, %v4934
        %v5015 = vpack.c.bf16 %v4935, %v4935
        %v5016 = vpack.c.bf16 %v4936, %v4936
        %v5017 = vpack.c.bf16 %v4937, %v4937
        %v5018 = vpack.c.bf16 %v4938, %v4938
        %v5019 = vpack.c.bf16 %v4939, %v4939
        %v5020 = vpack.c.bf16 %v4940, %v4940
        %v5021 = vpack.c.bf16 %v4941, %v4941
        %v5022 = vpack.c.bf16 %v4942, %v4942
        %v5023 = vpack.c.bf16 %v4943, %v4943
        %v5024 = vunpack.c.l.bf16 %v4719
        %v5025 = vunpack.c.l.bf16 %v4720
        %v5026 = vunpack.c.l.bf16 %v4721
        %v5027 = vunpack.c.l.bf16 %v4722
        %v5028 = vunpack.c.l.bf16 %v4723
        %v5029 = vunpack.c.l.bf16 %v4724
        %v5030 = vunpack.c.l.bf16 %v4725
        %v5031 = vunpack.c.l.bf16 %v4726
        %v5032 = vunpack.c.l.bf16 %v4727
        %v5033 = vunpack.c.l.bf16 %v4728
        %v5034 = vunpack.c.l.bf16 %v4729
        %v5035 = vunpack.c.l.bf16 %v4730
        %v5036 = vunpack.c.l.bf16 %v4731
        %v5037 = vunpack.c.l.bf16 %v4732
        %v5038 = vunpack.c.l.bf16 %v4733
        %v5039 = vunpack.c.l.bf16 %v4734
        %v5040 = vunpack.c.l.bf16 %v4735
        %v5041 = vunpack.c.l.bf16 %v4736
        %v5042 = vunpack.c.l.bf16 %v4737
        %v5043 = vunpack.c.l.bf16 %v4738
        %v5044 = vunpack.c.l.bf16 %v4739
        %v5045 = vunpack.c.l.bf16 %v4740
        %v5046 = vunpack.c.l.bf16 %v4741
        %v5047 = vunpack.c.l.bf16 %v4742
        %v5048 = vunpack.c.l.bf16 %v4743
        %v5049 = vunpack.c.l.bf16 %v4744
        %v5050 = vunpack.c.l.bf16 %v4745
        %v5051 = vunpack.c.l.bf16 %v4746
        %v5052 = vunpack.c.l.bf16 %v4747
        %v5053 = vunpack.c.l.bf16 %v4748
        %v5054 = vunpack.c.l.bf16 %v4749
        %v5055 = vunpack.c.l.bf16 %v4750
        %v5056 = vunpack.c.l.bf16 %v4751
        %v5057 = vunpack.c.l.bf16 %v4752
        %v5058 = vunpack.c.l.bf16 %v4753
        %v5059 = vunpack.c.l.bf16 %v4754
        %v5060 = vunpack.c.l.bf16 %v4755
        %v5061 = vunpack.c.l.bf16 %v4756
        %v5062 = vunpack.c.l.bf16 %v4757
        %v5063 = vunpack.c.l.bf16 %v4758
        %v5064 = vunpack.c.l.bf16 %v4759
        %v5065 = vunpack.c.l.bf16 %v4760
        %v5066 = vunpack.c.l.bf16 %v4761
        %v5067 = vunpack.c.l.bf16 %v4762
        %v5068 = vunpack.c.l.bf16 %v4763
        %v5069 = vunpack.c.l.bf16 %v4764
        %v5070 = vunpack.c.l.bf16 %v4765
        %v5071 = vunpack.c.l.bf16 %v4766
        %v5072 = vunpack.c.l.bf16 %v4767
        %v5073 = vunpack.c.l.bf16 %v4768
        %v5074 = vunpack.c.l.bf16 %v4769
        %v5075 = vunpack.c.l.bf16 %v4770
        %v5076 = vunpack.c.l.bf16 %v4771
        %v5077 = vunpack.c.l.bf16 %v4772
        %v5078 = vunpack.c.l.bf16 %v4773
        %v5079 = vunpack.c.l.bf16 %v4774
        %v5080 = vunpack.c.l.bf16 %v4775
        %v5081 = vunpack.c.l.bf16 %v4776
        %v5082 = vunpack.c.l.bf16 %v4777
        %v5083 = vunpack.c.l.bf16 %v4778
        %v5084 = vunpack.c.l.bf16 %v4779
        %v5085 = vunpack.c.l.bf16 %v4780
        %v5086 = vunpack.c.l.bf16 %v4781
        %v5087 = vunpack.c.l.bf16 %v4782
        %v5088 = vunpack.c.l.bf16 %v4783
        %v5089 = vunpack.c.l.bf16 %v4944
        %v5090 = vunpack.c.l.bf16 %v4945
        %v5091 = vunpack.c.l.bf16 %v4946
        %v5092 = vunpack.c.l.bf16 %v4947
        %v5093 = vunpack.c.l.bf16 %v4948
        %v5094 = vunpack.c.l.bf16 %v4949
        %v5095 = vunpack.c.l.bf16 %v4950
        %v5096 = vunpack.c.l.bf16 %v4951
        %v5097 = vunpack.c.l.bf16 %v4952
        %v5098 = vunpack.c.l.bf16 %v4953
        %v5099 = vunpack.c.l.bf16 %v4954
        %v5100 = vunpack.c.l.bf16 %v4955
        %v5101 = vunpack.c.l.bf16 %v4956
        %v5102 = vunpack.c.l.bf16 %v4957
        %v5103 = vunpack.c.l.bf16 %v4958
        %v5104 = vunpack.c.l.bf16 %v4959
        %v5105 = vunpack.c.l.bf16 %v4960
        %v5106 = vunpack.c.l.bf16 %v4961
        %v5107 = vunpack.c.l.bf16 %v4962
        %v5108 = vunpack.c.l.bf16 %v4963
        %v5109 = vunpack.c.l.bf16 %v4964
        %v5110 = vunpack.c.l.bf16 %v4965
        %v5111 = vunpack.c.l.bf16 %v4966
        %v5112 = vunpack.c.l.bf16 %v4967
        %v5113 = vunpack.c.l.bf16 %v4968
        %v5114 = vunpack.c.l.bf16 %v4969
        %v5115 = vunpack.c.l.bf16 %v4970
        %v5116 = vunpack.c.l.bf16 %v4971
        %v5117 = vunpack.c.l.bf16 %v4972
        %v5118 = vunpack.c.l.bf16 %v4973
        %v5119 = vunpack.c.l.bf16 %v4974
        %v5120 = vunpack.c.l.bf16 %v4975
        %v5121 = vunpack.c.l.bf16 %v4976
        %v5122 = vunpack.c.l.bf16 %v4977
        %v5123 = vunpack.c.l.bf16 %v4978
        %v5124 = vunpack.c.l.bf16 %v4979
        %v5125 = vunpack.c.l.bf16 %v4980
        %v5126 = vunpack.c.l.bf16 %v4981
        %v5127 = vunpack.c.l.bf16 %v4982
        %v5128 = vunpack.c.l.bf16 %v4983
        %v5129 = vunpack.c.l.bf16 %v4984
        %v5130 = vunpack.c.l.bf16 %v4985
        %v5131 = vunpack.c.l.bf16 %v4986
        %v5132 = vunpack.c.l.bf16 %v4987
        %v5133 = vunpack.c.l.bf16 %v4988
        %v5134 = vunpack.c.l.bf16 %v4989
        %v5135 = vunpack.c.l.bf16 %v4990
        %v5136 = vunpack.c.l.bf16 %v4991
        %v5137 = vunpack.c.l.bf16 %v4992
        %v5138 = vunpack.c.l.bf16 %v4993
        %v5139 = vunpack.c.l.bf16 %v4994
        %v5140 = vunpack.c.l.bf16 %v4995
        %v5141 = vunpack.c.l.bf16 %v4996
        %v5142 = vunpack.c.l.bf16 %v4997
        %v5143 = vunpack.c.l.bf16 %v4998
        %v5144 = vunpack.c.l.bf16 %v4999
        %v5145 = vunpack.c.l.bf16 %v5000
        %v5146 = vunpack.c.l.bf16 %v5001
        %v5147 = vunpack.c.l.bf16 %v5002
        %v5148 = vunpack.c.l.bf16 %v5003
        %v5149 = vunpack.c.l.bf16 %v5004
        %v5150 = vunpack.c.l.bf16 %v5005
        %v5151 = vunpack.c.l.bf16 %v5006
        %v5152 = vunpack.c.l.bf16 %v5007
        %v5153 = vunpack.c.l.bf16 %v5008
        %v5154 = vunpack.c.l.bf16 %v5009
        %v5155 = vunpack.c.l.bf16 %v5010
        %v5156 = vunpack.c.l.bf16 %v5011
        %v5157 = vunpack.c.l.bf16 %v5012
        %v5158 = vunpack.c.l.bf16 %v5013
        %v5159 = vunpack.c.l.bf16 %v5014
        %v5160 = vunpack.c.l.bf16 %v5015
        %v5161 = vunpack.c.l.bf16 %v5016
        %v5162 = vunpack.c.l.bf16 %v5017
        %v5163 = vunpack.c.l.bf16 %v5018
        %v5164 = vunpack.c.l.bf16 %v5019
        %v5165 = vunpack.c.l.bf16 %v5020
        %v5166 = vunpack.c.l.bf16 %v5021
        %v5167 = vunpack.c.l.bf16 %v5022
        %v5168 = vunpack.c.l.bf16 %v5023
        %v5169 = vadd.f32 %v5024, %v5089
        %v5170 = vadd.f32 %v5025, %v5090
        %v5171 = vadd.f32 %v5026, %v5091
        %v5172 = vadd.f32 %v5027, %v5092
        %v5173 = vadd.f32 %v5028, %v5093
        %v5174 = vadd.f32 %v5029, %v5094
        %v5175 = vadd.f32 %v5030, %v5095
        %v5176 = vadd.f32 %v5031, %v5096
        %v5177 = vadd.f32 %v5032, %v5097
        %v5178 = vadd.f32 %v5028, %v5098
        %v5179 = vadd.f32 %v5033, %v5099
        %v5180 = vadd.f32 %v5034, %v5100
        %v5181 = vadd.f32 %v5035, %v5101
        %v5182 = vadd.f32 %v5036, %v5102
        %v5183 = vadd.f32 %v5028, %v5103
        %v5184 = vadd.f32 %v5037, %v5104
        %v5185 = vadd.f32 %v5038, %v5105
        %v5186 = vadd.f32 %v5039, %v5106
        %v5187 = vadd.f32 %v5040, %v5107
        %v5188 = vadd.f32 %v5028, %v5108
        %v5189 = vadd.f32 %v5041, %v5109
        %v5190 = vadd.f32 %v5042, %v5110
        %v5191 = vadd.f32 %v5043, %v5111
        %v5192 = vadd.f32 %v5044, %v5112
        %v5193 = vadd.f32 %v5028, %v5113
        %v5194 = vadd.f32 %v5045, %v5114
        %v5195 = vadd.f32 %v5046, %v5115
        %v5196 = vadd.f32 %v5047, %v5116
        %v5197 = vadd.f32 %v5048, %v5117
        %v5198 = vadd.f32 %v5028, %v5118
        %v5199 = vadd.f32 %v5049, %v5119
        %v5200 = vadd.f32 %v5050, %v5120
        %v5201 = vadd.f32 %v5051, %v5121
        %v5202 = vadd.f32 %v5052, %v5122
        %v5203 = vadd.f32 %v5028, %v5123
        %v5204 = vadd.f32 %v5053, %v5124
        %v5205 = vadd.f32 %v5054, %v5125
        %v5206 = vadd.f32 %v5055, %v5126
        %v5207 = vadd.f32 %v5056, %v5127
        %v5208 = vadd.f32 %v5028, %v5128
        %v5209 = vadd.f32 %v5057, %v5129
        %v5210 = vadd.f32 %v5058, %v5130
        %v5211 = vadd.f32 %v5059, %v5131
        %v5212 = vadd.f32 %v5060, %v5132
        %v5213 = vadd.f32 %v5028, %v5133
        %v5214 = vadd.f32 %v5061, %v5134
        %v5215 = vadd.f32 %v5062, %v5135
        %v5216 = vadd.f32 %v5063, %v5136
        %v5217 = vadd.f32 %v5064, %v5137
        %v5218 = vadd.f32 %v5028, %v5138
        %v5219 = vadd.f32 %v5065, %v5139
        %v5220 = vadd.f32 %v5066, %v5140
        %v5221 = vadd.f32 %v5067, %v5141
        %v5222 = vadd.f32 %v5068, %v5142
        %v5223 = vadd.f32 %v5028, %v5143
        %v5224 = vadd.f32 %v5069, %v5144
        %v5225 = vadd.f32 %v5070, %v5145
        %v5226 = vadd.f32 %v5071, %v5146
        %v5227 = vadd.f32 %v5072, %v5147
        %v5228 = vadd.f32 %v5028, %v5148
        %v5229 = vadd.f32 %v5073, %v5149
        %v5230 = vadd.f32 %v5074, %v5150
        %v5231 = vadd.f32 %v5075, %v5151
        %v5232 = vadd.f32 %v5076, %v5152
        %v5233 = vadd.f32 %v5028, %v5153
        %v5234 = vadd.f32 %v5077, %v5154
        %v5235 = vadd.f32 %v5078, %v5155
        %v5236 = vadd.f32 %v5079, %v5156
        %v5237 = vadd.f32 %v5080, %v5157
        %v5238 = vadd.f32 %v5028, %v5158
        %v5239 = vadd.f32 %v5081, %v5159
        %v5240 = vadd.f32 %v5082, %v5160
        %v5241 = vadd.f32 %v5083, %v5161
        %v5242 = vadd.f32 %v5084, %v5162
        %v5243 = vadd.f32 %v5028, %v5163
        %v5244 = vadd.f32 %v5085, %v5164
        %v5245 = vadd.f32 %v5086, %v5165
        %v5246 = vadd.f32 %v5087, %v5166
        %v5247 = vadd.f32 %v5088, %v5167
        %v5248 = vadd.f32 %v5028, %v5168
        %v5249 = vpack.c.bf16 %v5169, %v5169
        %v5250 = vpack.c.bf16 %v5170, %v5170
        %v5251 = vpack.c.bf16 %v5171, %v5171
        %v5252 = vpack.c.bf16 %v5172, %v5172
        %v5253 = vpack.c.bf16 %v5173, %v5173
        %v5254 = vpack.c.bf16 %v5174, %v5174
        %v5255 = vpack.c.bf16 %v5175, %v5175
        %v5256 = vpack.c.bf16 %v5176, %v5176
        %v5257 = vpack.c.bf16 %v5177, %v5177
        %v5258 = vpack.c.bf16 %v5178, %v5178
        %v5259 = vpack.c.bf16 %v5179, %v5179
        %v5260 = vpack.c.bf16 %v5180, %v5180
        %v5261 = vpack.c.bf16 %v5181, %v5181
        %v5262 = vpack.c.bf16 %v5182, %v5182
        %v5263 = vpack.c.bf16 %v5183, %v5183
        %v5264 = vpack.c.bf16 %v5184, %v5184
        %v5265 = vpack.c.bf16 %v5185, %v5185
        %v5266 = vpack.c.bf16 %v5186, %v5186
        %v5267 = vpack.c.bf16 %v5187, %v5187
        %v5268 = vpack.c.bf16 %v5188, %v5188
        %v5269 = vpack.c.bf16 %v5189, %v5189
        %v5270 = vpack.c.bf16 %v5190, %v5190
        %v5271 = vpack.c.bf16 %v5191, %v5191
        %v5272 = vpack.c.bf16 %v5192, %v5192
        %v5273 = vpack.c.bf16 %v5193, %v5193
        %v5274 = vpack.c.bf16 %v5194, %v5194
        %v5275 = vpack.c.bf16 %v5195, %v5195
        %v5276 = vpack.c.bf16 %v5196, %v5196
        %v5277 = vpack.c.bf16 %v5197, %v5197
        %v5278 = vpack.c.bf16 %v5198, %v5198
        %v5279 = vpack.c.bf16 %v5199, %v5199
        %v5280 = vpack.c.bf16 %v5200, %v5200
        %v5281 = vpack.c.bf16 %v5201, %v5201
        %v5282 = vpack.c.bf16 %v5202, %v5202
        %v5283 = vpack.c.bf16 %v5203, %v5203
        %v5284 = vpack.c.bf16 %v5204, %v5204
        %v5285 = vpack.c.bf16 %v5205, %v5205
        %v5286 = vpack.c.bf16 %v5206, %v5206
        %v5287 = vpack.c.bf16 %v5207, %v5207
        %v5288 = vpack.c.bf16 %v5208, %v5208
        %v5289 = vpack.c.bf16 %v5209, %v5209
        %v5290 = vpack.c.bf16 %v5210, %v5210
        %v5291 = vpack.c.bf16 %v5211, %v5211
        %v5292 = vpack.c.bf16 %v5212, %v5212
        %v5293 = vpack.c.bf16 %v5213, %v5213
        %v5294 = vpack.c.bf16 %v5214, %v5214
        %v5295 = vpack.c.bf16 %v5215, %v5215
        %v5296 = vpack.c.bf16 %v5216, %v5216
        %v5297 = vpack.c.bf16 %v5217, %v5217
        %v5298 = vpack.c.bf16 %v5218, %v5218
        %v5299 = vpack.c.bf16 %v5219, %v5219
        %v5300 = vpack.c.bf16 %v5220, %v5220
        %v5301 = vpack.c.bf16 %v5221, %v5221
        %v5302 = vpack.c.bf16 %v5222, %v5222
        %v5303 = vpack.c.bf16 %v5223, %v5223
        %v5304 = vpack.c.bf16 %v5224, %v5224
        %v5305 = vpack.c.bf16 %v5225, %v5225
        %v5306 = vpack.c.bf16 %v5226, %v5226
        %v5307 = vpack.c.bf16 %v5227, %v5227
        %v5308 = vpack.c.bf16 %v5228, %v5228
        %v5309 = vpack.c.bf16 %v5229, %v5229
        %v5310 = vpack.c.bf16 %v5230, %v5230
        %v5311 = vpack.c.bf16 %v5231, %v5231
        %v5312 = vpack.c.bf16 %v5232, %v5232
        %v5313 = vpack.c.bf16 %v5233, %v5233
        %v5314 = vpack.c.bf16 %v5234, %v5234
        %v5315 = vpack.c.bf16 %v5235, %v5235
        %v5316 = vpack.c.bf16 %v5236, %v5236
        %v5317 = vpack.c.bf16 %v5237, %v5237
        %v5318 = vpack.c.bf16 %v5238, %v5238
        %v5319 = vpack.c.bf16 %v5239, %v5239
        %v5320 = vpack.c.bf16 %v5240, %v5240
        %v5321 = vpack.c.bf16 %v5241, %v5241
        %v5322 = vpack.c.bf16 %v5242, %v5242
        %v5323 = vpack.c.bf16 %v5243, %v5243
        %v5324 = vpack.c.bf16 %v5244, %v5244
        %v5325 = vpack.c.bf16 %v5245, %v5245
        %v5326 = vpack.c.bf16 %v5246, %v5246
        %v5327 = vpack.c.bf16 %v5247, %v5247
        %v5328 = vpack.c.bf16 %v5248, %v5248
        %v5329 = vmul.f32 %v4589, 0.75
        %v5330 = vmul.f32 %v4590, 0.75
        %v5331 = vmul.f32 %v4591, 0.75
        %v5332 = vmul.f32 %v4592, 0.75
        %v5333 = vmul.f32 %v4593, 0.75
        %v5334 = vmul.f32 %v4594, 0.75
        %v5335 = vmul.f32 %v4595, 0.75
        %v5336 = vmul.f32 %v4596, 0.75
        %v5337 = vmul.f32 %v4597, 0.75
        %v5338 = vmul.f32 %v4598, 0.75
        %v5339 = vmul.f32 %v4599, 0.75
        %v5340 = vmul.f32 %v4600, 0.75
        %v5341 = vmul.f32 %v4601, 0.75
        %v5342 = vmul.f32 %v4602, 0.75
        %v5343 = vmul.f32 %v4603, 0.75
        %v5344 = vmul.f32 %v4604, 0.75
        %v5345 = vmul.f32 %v4605, 0.75
        %v5346 = vmul.f32 %v4606, 0.75
        %v5347 = vmul.f32 %v4607, 0.75
        %v5348 = vmul.f32 %v4608, 0.75
        %v5349 = vmul.f32 %v4609, 0.75
        %v5350 = vmul.f32 %v4610, 0.75
        %v5351 = vmul.f32 %v4611, 0.75
        %v5352 = vmul.f32 %v4612, 0.75
        %v5353 = vmul.f32 %v4613, 0.75
        %v5354 = vmul.f32 %v4614, 0.75
        %v5355 = vmul.f32 %v4615, 0.75
        %v5356 = vmul.f32 %v4616, 0.75
        %v5357 = vmul.f32 %v4617, 0.75
        %v5358 = vmul.f32 %v4618, 0.75
        %v5359 = vmul.f32 %v4619, 0.75
        %v5360 = vmul.f32 %v4620, 0.75
        %v5361 = vmul.f32 %v4621, 0.75
        %v5362 = vmul.f32 %v4622, 0.75
        %v5363 = vmul.f32 %v4623, 0.75
        %v5364 = vmul.f32 %v4624, 0.75
        %v5365 = vmul.f32 %v4625, 0.75
        %v5366 = vmul.f32 %v4626, 0.75
        %v5367 = vmul.f32 %v4627, 0.75
        %v5368 = vmul.f32 %v4628, 0.75
        %v5369 = vmul.f32 %v4629, 0.75
        %v5370 = vmul.f32 %v4630, 0.75
        %v5371 = vmul.f32 %v4631, 0.75
        %v5372 = vmul.f32 %v4632, 0.75
        %v5373 = vmul.f32 %v4633, 0.75
        %v5374 = vmul.f32 %v4634, 0.75
        %v5375 = vmul.f32 %v4635, 0.75
        %v5376 = vmul.f32 %v4636, 0.75
        %v5377 = vmul.f32 %v4637, 0.75
        %v5378 = vmul.f32 %v4638, 0.75
        %v5379 = vmul.f32 %v4639, 0.75
        %v5380 = vmul.f32 %v4640, 0.75
        %v5381 = vmul.f32 %v4641, 0.75
        %v5382 = vmul.f32 %v4642, 0.75
        %v5383 = vmul.f32 %v4643, 0.75
        %v5384 = vmul.f32 %v4644, 0.75
        %v5385 = vmul.f32 %v4645, 0.75
        %v5386 = vmul.f32 %v4646, 0.75
        %v5387 = vmul.f32 %v4647, 0.75
        %v5388 = vmul.f32 %v4648, 0.75
        %v5389 = vmul.f32 %v4649, 0.75
        %v5390 = vmul.f32 %v4650, 0.75
        %v5391 = vmul.f32 %v4651, 0.75
        %v5392 = vmul.f32 %v4652, 0.75
        %v5393 = vmul.f32 %v4653, 0.75
        %v5394 = vpack.c.bf16 %v5329, %v5329
        %v5395 = vpack.c.bf16 %v5330, %v5330
        %v5396 = vpack.c.bf16 %v5331, %v5331
        %v5397 = vpack.c.bf16 %v5332, %v5332
        %v5398 = vpack.c.bf16 %v5333, %v5333
        %v5399 = vpack.c.bf16 %v5334, %v5334
        %v5400 = vpack.c.bf16 %v5335, %v5335
        %v5401 = vpack.c.bf16 %v5336, %v5336
        %v5402 = vpack.c.bf16 %v5337, %v5337
        %v5403 = vpack.c.bf16 %v5338, %v5338
        %v5404 = vpack.c.bf16 %v5339, %v5339
        %v5405 = vpack.c.bf16 %v5340, %v5340
        %v5406 = vpack.c.bf16 %v5341, %v5341
        %v5407 = vpack.c.bf16 %v5342, %v5342
        %v5408 = vpack.c.bf16 %v5343, %v5343
        %v5409 = vpack.c.bf16 %v5344, %v5344
        %v5410 = vpack.c.bf16 %v5345, %v5345
        %v5411 = vpack.c.bf16 %v5346, %v5346
        %v5412 = vpack.c.bf16 %v5347, %v5347
        %v5413 = vpack.c.bf16 %v5348, %v5348
        %v5414 = vpack.c.bf16 %v5349, %v5349
        %v5415 = vpack.c.bf16 %v5350, %v5350
        %v5416 = vpack.c.bf16 %v5351, %v5351
        %v5417 = vpack.c.bf16 %v5352, %v5352
        %v5418 = vpack.c.bf16 %v5353, %v5353
        %v5419 = vpack.c.bf16 %v5354, %v5354
        %v5420 = vpack.c.bf16 %v5355, %v5355
        %v5421 = vpack.c.bf16 %v5356, %v5356
        %v5422 = vpack.c.bf16 %v5357, %v5357
        %v5423 = vpack.c.bf16 %v5358, %v5358
        %v5424 = vpack.c.bf16 %v5359, %v5359
        %v5425 = vpack.c.bf16 %v5360, %v5360
        %v5426 = vpack.c.bf16 %v5361, %v5361
        %v5427 = vpack.c.bf16 %v5362, %v5362
        %v5428 = vpack.c.bf16 %v5363, %v5363
        %v5429 = vpack.c.bf16 %v5364, %v5364
        %v5430 = vpack.c.bf16 %v5365, %v5365
        %v5431 = vpack.c.bf16 %v5366, %v5366
        %v5432 = vpack.c.bf16 %v5367, %v5367
        %v5433 = vpack.c.bf16 %v5368, %v5368
        %v5434 = vpack.c.bf16 %v5369, %v5369
        %v5435 = vpack.c.bf16 %v5370, %v5370
        %v5436 = vpack.c.bf16 %v5371, %v5371
        %v5437 = vpack.c.bf16 %v5372, %v5372
        %v5438 = vpack.c.bf16 %v5373, %v5373
        %v5439 = vpack.c.bf16 %v5374, %v5374
        %v5440 = vpack.c.bf16 %v5375, %v5375
        %v5441 = vpack.c.bf16 %v5376, %v5376
        %v5442 = vpack.c.bf16 %v5377, %v5377
        %v5443 = vpack.c.bf16 %v5378, %v5378
        %v5444 = vpack.c.bf16 %v5379, %v5379
        %v5445 = vpack.c.bf16 %v5380, %v5380
        %v5446 = vpack.c.bf16 %v5381, %v5381
        %v5447 = vpack.c.bf16 %v5382, %v5382
        %v5448 = vpack.c.bf16 %v5383, %v5383
        %v5449 = vpack.c.bf16 %v5384, %v5384
        %v5450 = vpack.c.bf16 %v5385, %v5385
        %v5451 = vpack.c.bf16 %v5386, %v5386
        %v5452 = vpack.c.bf16 %v5387, %v5387
        %v5453 = vpack.c.bf16 %v5388, %v5388
        %v5454 = vpack.c.bf16 %v5389, %v5389
        %v5455 = vpack.c.bf16 %v5390, %v5390
        %v5456 = vpack.c.bf16 %v5391, %v5391
        %v5457 = vpack.c.bf16 %v5392, %v5392
        %v5458 = vpack.c.bf16 %v5393, %v5393
        %v5459 = vmul.f32 %v4784, 0.25
        %v5460 = vmul.f32 %v4785, 0.25
        %v5461 = vmul.f32 %v4786, 0.25
        %v5462 = vmul.f32 %v4787, 0.25
        %v5463 = vmul.f32 %v4788, 0.25
        %v5464 = vmul.f32 %v4789, 0.25
        %v5465 = vmul.f32 %v4790, 0.25
        %v5466 = vmul.f32 %v4791, 0.25
        %v5467 = vmul.f32 %v4792, 0.25
        %v5468 = vmul.f32 %v4793, 0.25
        %v5469 = vmul.f32 %v4794, 0.25
        %v5470 = vmul.f32 %v4795, 0.25
        %v5471 = vmul.f32 %v4796, 0.25
        %v5472 = vmul.f32 %v4797, 0.25
        %v5473 = vmul.f32 %v4798, 0.25
        %v5474 = vmul.f32 %v4799, 0.25
        %v5475 = vmul.f32 %v4800, 0.25
        %v5476 = vmul.f32 %v4801, 0.25
        %v5477 = vmul.f32 %v4802, 0.25
        %v5478 = vmul.f32 %v4803, 0.25
        %v5479 = vmul.f32 %v4804, 0.25
        %v5480 = vmul.f32 %v4805, 0.25
        %v5481 = vmul.f32 %v4806, 0.25
        %v5482 = vmul.f32 %v4807, 0.25
        %v5483 = vmul.f32 %v4808, 0.25
        %v5484 = vmul.f32 %v4809, 0.25
        %v5485 = vmul.f32 %v4810, 0.25
        %v5486 = vmul.f32 %v4811, 0.25
        %v5487 = vmul.f32 %v4812, 0.25
        %v5488 = vmul.f32 %v4813, 0.25
        %v5489 = vmul.f32 %v4814, 0.25
        %v5490 = vmul.f32 %v4815, 0.25
        %v5491 = vmul.f32 %v4816, 0.25
        %v5492 = vmul.f32 %v4817, 0.25
        %v5493 = vmul.f32 %v4818, 0.25
        %v5494 = vmul.f32 %v4819, 0.25
        %v5495 = vmul.f32 %v4820, 0.25
        %v5496 = vmul.f32 %v4821, 0.25
        %v5497 = vmul.f32 %v4822, 0.25
        %v5498 = vmul.f32 %v4823, 0.25
        %v5499 = vmul.f32 %v4824, 0.25
        %v5500 = vmul.f32 %v4825, 0.25
        %v5501 = vmul.f32 %v4826, 0.25
        %v5502 = vmul.f32 %v4827, 0.25
        %v5503 = vmul.f32 %v4828, 0.25
        %v5504 = vmul.f32 %v4829, 0.25
        %v5505 = vmul.f32 %v4830, 0.25
        %v5506 = vmul.f32 %v4831, 0.25
        %v5507 = vmul.f32 %v4832, 0.25
        %v5508 = vmul.f32 %v4833, 0.25
        %v5509 = vmul.f32 %v4834, 0.25
        %v5510 = vmul.f32 %v4835, 0.25
        %v5511 = vmul.f32 %v4836, 0.25
        %v5512 = vmul.f32 %v4837, 0.25
        %v5513 = vmul.f32 %v4838, 0.25
        %v5514 = vmul.f32 %v4839, 0.25
        %v5515 = vmul.f32 %v4840, 0.25
        %v5516 = vmul.f32 %v4841, 0.25
        %v5517 = vmul.f32 %v4842, 0.25
        %v5518 = vmul.f32 %v4843, 0.25
        %v5519 = vmul.f32 %v4844, 0.25
        %v5520 = vmul.f32 %v4845, 0.25
        %v5521 = vmul.f32 %v4846, 0.25
        %v5522 = vmul.f32 %v4847, 0.25
        %v5523 = vmul.f32 %v4848, 0.25
        %v5524 = vmul.f32 %v4849, 0.25
        %v5525 = vmul.f32 %v4850, 0.25
        %v5526 = vmul.f32 %v4851, 0.25
        %v5527 = vmul.f32 %v4852, 0.25
        %v5528 = vmul.f32 %v4853, 0.25
        %v5529 = vmul.f32 %v4854, 0.25
        %v5530 = vmul.f32 %v4855, 0.25
        %v5531 = vmul.f32 %v4856, 0.25
        %v5532 = vmul.f32 %v4857, 0.25
        %v5533 = vmul.f32 %v4858, 0.25
        %v5534 = vmul.f32 %v4859, 0.25
        %v5535 = vmul.f32 %v4860, 0.25
        %v5536 = vmul.f32 %v4861, 0.25
        %v5537 = vmul.f32 %v4862, 0.25
        %v5538 = vmul.f32 %v4863, 0.25
        %v5539 = vpack.c.bf16 %v5459, %v5459
        %v5540 = vpack.c.bf16 %v5460, %v5460
        %v5541 = vpack.c.bf16 %v5461, %v5461
        %v5542 = vpack.c.bf16 %v5462, %v5462
        %v5543 = vpack.c.bf16 %v5463, %v5463
        %v5544 = vpack.c.bf16 %v5464, %v5464
        %v5545 = vpack.c.bf16 %v5465, %v5465
        %v5546 = vpack.c.bf16 %v5466, %v5466
        %v5547 = vpack.c.bf16 %v5467, %v5467
        %v5548 = vpack.c.bf16 %v5468, %v5468
        %v5549 = vpack.c.bf16 %v5469, %v5469
        %v5550 = vpack.c.bf16 %v5470, %v5470
        %v5551 = vpack.c.bf16 %v5471, %v5471
        %v5552 = vpack.c.bf16 %v5472, %v5472
        %v5553 = vpack.c.bf16 %v5473, %v5473
        %v5554 = vpack.c.bf16 %v5474, %v5474
        %v5555 = vpack.c.bf16 %v5475, %v5475
        %v5556 = vpack.c.bf16 %v5476, %v5476
        %v5557 = vpack.c.bf16 %v5477, %v5477
        %v5558 = vpack.c.bf16 %v5478, %v5478
        %v5559 = vpack.c.bf16 %v5479, %v5479
        %v5560 = vpack.c.bf16 %v5480, %v5480
        %v5561 = vpack.c.bf16 %v5481, %v5481
        %v5562 = vpack.c.bf16 %v5482, %v5482
        %v5563 = vpack.c.bf16 %v5483, %v5483
        %v5564 = vpack.c.bf16 %v5484, %v5484
        %v5565 = vpack.c.bf16 %v5485, %v5485
        %v5566 = vpack.c.bf16 %v5486, %v5486
        %v5567 = vpack.c.bf16 %v5487, %v5487
        %v5568 = vpack.c.bf16 %v5488, %v5488
        %v5569 = vpack.c.bf16 %v5489, %v5489
        %v5570 = vpack.c.bf16 %v5490, %v5490
        %v5571 = vpack.c.bf16 %v5491, %v5491
        %v5572 = vpack.c.bf16 %v5492, %v5492
        %v5573 = vpack.c.bf16 %v5493, %v5493
        %v5574 = vpack.c.bf16 %v5494, %v5494
        %v5575 = vpack.c.bf16 %v5495, %v5495
        %v5576 = vpack.c.bf16 %v5496, %v5496
        %v5577 = vpack.c.bf16 %v5497, %v5497
        %v5578 = vpack.c.bf16 %v5498, %v5498
        %v5579 = vpack.c.bf16 %v5499, %v5499
        %v5580 = vpack.c.bf16 %v5500, %v5500
        %v5581 = vpack.c.bf16 %v5501, %v5501
        %v5582 = vpack.c.bf16 %v5502, %v5502
        %v5583 = vpack.c.bf16 %v5503, %v5503
        %v5584 = vpack.c.bf16 %v5504, %v5504
        %v5585 = vpack.c.bf16 %v5505, %v5505
        %v5586 = vpack.c.bf16 %v5506, %v5506
        %v5587 = vpack.c.bf16 %v5507, %v5507
        %v5588 = vpack.c.bf16 %v5508, %v5508
        %v5589 = vpack.c.bf16 %v5509, %v5509
        %v5590 = vpack.c.bf16 %v5510, %v5510
        %v5591 = vpack.c.bf16 %v5511, %v5511
        %v5592 = vpack.c.bf16 %v5512, %v5512
        %v5593 = vpack.c.bf16 %v5513, %v5513
        %v5594 = vpack.c.bf16 %v5514, %v5514
        %v5595 = vpack.c.bf16 %v5515, %v5515
        %v5596 = vpack.c.bf16 %v5516, %v5516
        %v5597 = vpack.c.bf16 %v5517, %v5517
        %v5598 = vpack.c.bf16 %v5518, %v5518
        %v5599 = vpack.c.bf16 %v5519, %v5519
        %v5600 = vpack.c.bf16 %v5520, %v5520
        %v5601 = vpack.c.bf16 %v5521, %v5521
        %v5602 = vpack.c.bf16 %v5522, %v5522
        %v5603 = vpack.c.bf16 %v5523, %v5523
        %v5604 = vpack.c.bf16 %v5524, %v5524
        %v5605 = vpack.c.bf16 %v5525, %v5525
        %v5606 = vpack.c.bf16 %v5526, %v5526
        %v5607 = vpack.c.bf16 %v5527, %v5527
        %v5608 = vpack.c.bf16 %v5528, %v5528
        %v5609 = vpack.c.bf16 %v5529, %v5529
        %v5610 = vpack.c.bf16 %v5530, %v5530
        %v5611 = vpack.c.bf16 %v5531, %v5531
        %v5612 = vpack.c.bf16 %v5532, %v5532
        %v5613 = vpack.c.bf16 %v5533, %v5533
        %v5614 = vpack.c.bf16 %v5534, %v5534
        %v5615 = vpack.c.bf16 %v5535, %v5535
        %v5616 = vpack.c.bf16 %v5536, %v5536
        %v5617 = vpack.c.bf16 %v5537, %v5537
        %v5618 = vpack.c.bf16 %v5538, %v5538
        %v5619 = vunpack.c.l.bf16 %v5394
        %v5620 = vunpack.c.l.bf16 %v5395
        %v5621 = vunpack.c.l.bf16 %v5396
        %v5622 = vunpack.c.l.bf16 %v5397
        %v5623 = vunpack.c.l.bf16 %v5398
        %v5624 = vunpack.c.l.bf16 %v5399
        %v5625 = vunpack.c.l.bf16 %v5400
        %v5626 = vunpack.c.l.bf16 %v5401
        %v5627 = vunpack.c.l.bf16 %v5402
        %v5628 = vunpack.c.l.bf16 %v5403
        %v5629 = vunpack.c.l.bf16 %v5404
        %v5630 = vunpack.c.l.bf16 %v5405
        %v5631 = vunpack.c.l.bf16 %v5406
        %v5632 = vunpack.c.l.bf16 %v5407
        %v5633 = vunpack.c.l.bf16 %v5408
        %v5634 = vunpack.c.l.bf16 %v5409
        %v5635 = vunpack.c.l.bf16 %v5410
        %v5636 = vunpack.c.l.bf16 %v5411
        %v5637 = vunpack.c.l.bf16 %v5412
        %v5638 = vunpack.c.l.bf16 %v5413
        %v5639 = vunpack.c.l.bf16 %v5414
        %v5640 = vunpack.c.l.bf16 %v5415
        %v5641 = vunpack.c.l.bf16 %v5416
        %v5642 = vunpack.c.l.bf16 %v5417
        %v5643 = vunpack.c.l.bf16 %v5418
        %v5644 = vunpack.c.l.bf16 %v5419
        %v5645 = vunpack.c.l.bf16 %v5420
        %v5646 = vunpack.c.l.bf16 %v5421
        %v5647 = vunpack.c.l.bf16 %v5422
        %v5648 = vunpack.c.l.bf16 %v5423
        %v5649 = vunpack.c.l.bf16 %v5424
        %v5650 = vunpack.c.l.bf16 %v5425
        %v5651 = vunpack.c.l.bf16 %v5426
        %v5652 = vunpack.c.l.bf16 %v5427
        %v5653 = vunpack.c.l.bf16 %v5428
        %v5654 = vunpack.c.l.bf16 %v5429
        %v5655 = vunpack.c.l.bf16 %v5430
        %v5656 = vunpack.c.l.bf16 %v5431
        %v5657 = vunpack.c.l.bf16 %v5432
        %v5658 = vunpack.c.l.bf16 %v5433
        %v5659 = vunpack.c.l.bf16 %v5434
        %v5660 = vunpack.c.l.bf16 %v5435
        %v5661 = vunpack.c.l.bf16 %v5436
        %v5662 = vunpack.c.l.bf16 %v5437
        %v5663 = vunpack.c.l.bf16 %v5438
        %v5664 = vunpack.c.l.bf16 %v5439
        %v5665 = vunpack.c.l.bf16 %v5440
        %v5666 = vunpack.c.l.bf16 %v5441
        %v5667 = vunpack.c.l.bf16 %v5442
        %v5668 = vunpack.c.l.bf16 %v5443
        %v5669 = vunpack.c.l.bf16 %v5444
        %v5670 = vunpack.c.l.bf16 %v5445
        %v5671 = vunpack.c.l.bf16 %v5446
        %v5672 = vunpack.c.l.bf16 %v5447
        %v5673 = vunpack.c.l.bf16 %v5448
        %v5674 = vunpack.c.l.bf16 %v5449
        %v5675 = vunpack.c.l.bf16 %v5450
        %v5676 = vunpack.c.l.bf16 %v5451
        %v5677 = vunpack.c.l.bf16 %v5452
        %v5678 = vunpack.c.l.bf16 %v5453
        %v5679 = vunpack.c.l.bf16 %v5454
        %v5680 = vunpack.c.l.bf16 %v5455
        %v5681 = vunpack.c.l.bf16 %v5456
        %v5682 = vunpack.c.l.bf16 %v5457
        %v5683 = vunpack.c.l.bf16 %v5458
        %v5684 = vunpack.c.l.bf16 %v5539
        %v5685 = vunpack.c.l.bf16 %v5540
        %v5686 = vunpack.c.l.bf16 %v5541
        %v5687 = vunpack.c.l.bf16 %v5542
        %v5688 = vunpack.c.l.bf16 %v5543
        %v5689 = vunpack.c.l.bf16 %v5544
        %v5690 = vunpack.c.l.bf16 %v5545
        %v5691 = vunpack.c.l.bf16 %v5546
        %v5692 = vunpack.c.l.bf16 %v5547
        %v5693 = vunpack.c.l.bf16 %v5548
        %v5694 = vunpack.c.l.bf16 %v5549
        %v5695 = vunpack.c.l.bf16 %v5550
        %v5696 = vunpack.c.l.bf16 %v5551
        %v5697 = vunpack.c.l.bf16 %v5552
        %v5698 = vunpack.c.l.bf16 %v5553
        %v5699 = vunpack.c.l.bf16 %v5554
        %v5700 = vunpack.c.l.bf16 %v5555
        %v5701 = vunpack.c.l.bf16 %v5556
        %v5702 = vunpack.c.l.bf16 %v5557
        %v5703 = vunpack.c.l.bf16 %v5558
        %v5704 = vunpack.c.l.bf16 %v5559
        %v5705 = vunpack.c.l.bf16 %v5560
        %v5706 = vunpack.c.l.bf16 %v5561
        %v5707 = vunpack.c.l.bf16 %v5562
        %v5708 = vunpack.c.l.bf16 %v5563
        %v5709 = vunpack.c.l.bf16 %v5564
        %v5710 = vunpack.c.l.bf16 %v5565
        %v5711 = vunpack.c.l.bf16 %v5566
        %v5712 = vunpack.c.l.bf16 %v5567
        %v5713 = vunpack.c.l.bf16 %v5568
        %v5714 = vunpack.c.l.bf16 %v5569
        %v5715 = vunpack.c.l.bf16 %v5570
        %v5716 = vunpack.c.l.bf16 %v5571
        %v5717 = vunpack.c.l.bf16 %v5572
        %v5718 = vunpack.c.l.bf16 %v5573
        %v5719 = vunpack.c.l.bf16 %v5574
        %v5720 = vunpack.c.l.bf16 %v5575
        %v5721 = vunpack.c.l.bf16 %v5576
        %v5722 = vunpack.c.l.bf16 %v5577
        %v5723 = vunpack.c.l.bf16 %v5578
        %v5724 = vunpack.c.l.bf16 %v5579
        %v5725 = vunpack.c.l.bf16 %v5580
        %v5726 = vunpack.c.l.bf16 %v5581
        %v5727 = vunpack.c.l.bf16 %v5582
        %v5728 = vunpack.c.l.bf16 %v5583
        %v5729 = vunpack.c.l.bf16 %v5584
        %v5730 = vunpack.c.l.bf16 %v5585
        %v5731 = vunpack.c.l.bf16 %v5586
        %v5732 = vunpack.c.l.bf16 %v5587
        %v5733 = vunpack.c.l.bf16 %v5588
        %v5734 = vunpack.c.l.bf16 %v5589
        %v5735 = vunpack.c.l.bf16 %v5590
        %v5736 = vunpack.c.l.bf16 %v5591
        %v5737 = vunpack.c.l.bf16 %v5592
        %v5738 = vunpack.c.l.bf16 %v5593
        %v5739 = vunpack.c.l.bf16 %v5594
        %v5740 = vunpack.c.l.bf16 %v5595
        %v5741 = vunpack.c.l.bf16 %v5596
        %v5742 = vunpack.c.l.bf16 %v5597
        %v5743 = vunpack.c.l.bf16 %v5598
        %v5744 = vunpack.c.l.bf16 %v5599
        %v5745 = vunpack.c.l.bf16 %v5600
        %v5746 = vunpack.c.l.bf16 %v5601
        %v5747 = vunpack.c.l.bf16 %v5602
        %v5748 = vunpack.c.l.bf16 %v5603
        %v5749 = vunpack.c.l.bf16 %v5604
        %v5750 = vunpack.c.l.bf16 %v5605
        %v5751 = vunpack.c.l.bf16 %v5606
        %v5752 = vunpack.c.l.bf16 %v5607
        %v5753 = vunpack.c.l.bf16 %v5608
        %v5754 = vunpack.c.l.bf16 %v5609
        %v5755 = vunpack.c.l.bf16 %v5610
        %v5756 = vunpack.c.l.bf16 %v5611
        %v5757 = vunpack.c.l.bf16 %v5612
        %v5758 = vunpack.c.l.bf16 %v5613
        %v5759 = vunpack.c.l.bf16 %v5614
        %v5760 = vunpack.c.l.bf16 %v5615
        %v5761 = vunpack.c.l.bf16 %v5616
        %v5762 = vunpack.c.l.bf16 %v5617
        %v5763 = vunpack.c.l.bf16 %v5618
        %v5764 = vadd.f32 %v5619, %v5684
        %v5765 = vadd.f32 %v5620, %v5685
        %v5766 = vadd.f32 %v5621, %v5686
        %v5767 = vadd.f32 %v5622, %v5687
        %v5768 = vadd.f32 %v5623, %v5688
        %v5769 = vadd.f32 %v5624, %v5689
        %v5770 = vadd.f32 %v5625, %v5690
        %v5771 = vadd.f32 %v5626, %v5691
        %v5772 = vadd.f32 %v5627, %v5692
        %v5773 = vadd.f32 %v5623, %v5693
        %v5774 = vadd.f32 %v5628, %v5694
        %v5775 = vadd.f32 %v5629, %v5695
        %v5776 = vadd.f32 %v5630, %v5696
        %v5777 = vadd.f32 %v5631, %v5697
        %v5778 = vadd.f32 %v5623, %v5698
        %v5779 = vadd.f32 %v5632, %v5699
        %v5780 = vadd.f32 %v5633, %v5700
        %v5781 = vadd.f32 %v5634, %v5701
        %v5782 = vadd.f32 %v5635, %v5702
        %v5783 = vadd.f32 %v5623, %v5703
        %v5784 = vadd.f32 %v5636, %v5704
        %v5785 = vadd.f32 %v5637, %v5705
        %v5786 = vadd.f32 %v5638, %v5706
        %v5787 = vadd.f32 %v5639, %v5707
        %v5788 = vadd.f32 %v5623, %v5708
        %v5789 = vadd.f32 %v5640, %v5709
        %v5790 = vadd.f32 %v5641, %v5710
        %v5791 = vadd.f32 %v5642, %v5711
        %v5792 = vadd.f32 %v5643, %v5712
        %v5793 = vadd.f32 %v5623, %v5713
        %v5794 = vadd.f32 %v5644, %v5714
        %v5795 = vadd.f32 %v5645, %v5715
        %v5796 = vadd.f32 %v5646, %v5716
        %v5797 = vadd.f32 %v5647, %v5717
        %v5798 = vadd.f32 %v5623, %v5718
        %v5799 = vadd.f32 %v5648, %v5719
        %v5800 = vadd.f32 %v5649, %v5720
        %v5801 = vadd.f32 %v5650, %v5721
        %v5802 = vadd.f32 %v5651, %v5722
        %v5803 = vadd.f32 %v5623, %v5723
        %v5804 = vadd.f32 %v5652, %v5724
        %v5805 = vadd.f32 %v5653, %v5725
        %v5806 = vadd.f32 %v5654, %v5726
        %v5807 = vadd.f32 %v5655, %v5727
        %v5808 = vadd.f32 %v5623, %v5728
        %v5809 = vadd.f32 %v5656, %v5729
        %v5810 = vadd.f32 %v5657, %v5730
        %v5811 = vadd.f32 %v5658, %v5731
        %v5812 = vadd.f32 %v5659, %v5732
        %v5813 = vadd.f32 %v5623, %v5733
        %v5814 = vadd.f32 %v5660, %v5734
        %v5815 = vadd.f32 %v5661, %v5735
        %v5816 = vadd.f32 %v5662, %v5736
        %v5817 = vadd.f32 %v5663, %v5737
        %v5818 = vadd.f32 %v5623, %v5738
        %v5819 = vadd.f32 %v5664, %v5739
        %v5820 = vadd.f32 %v5665, %v5740
        %v5821 = vadd.f32 %v5666, %v5741
        %v5822 = vadd.f32 %v5667, %v5742
        %v5823 = vadd.f32 %v5623, %v5743
        %v5824 = vadd.f32 %v5668, %v5744
        %v5825 = vadd.f32 %v5669, %v5745
        %v5826 = vadd.f32 %v5670, %v5746
        %v5827 = vadd.f32 %v5671, %v5747
        %v5828 = vadd.f32 %v5623, %v5748
        %v5829 = vadd.f32 %v5672, %v5749
        %v5830 = vadd.f32 %v5673, %v5750
        %v5831 = vadd.f32 %v5674, %v5751
        %v5832 = vadd.f32 %v5675, %v5752
        %v5833 = vadd.f32 %v5623, %v5753
        %v5834 = vadd.f32 %v5676, %v5754
        %v5835 = vadd.f32 %v5677, %v5755
        %v5836 = vadd.f32 %v5678, %v5756
        %v5837 = vadd.f32 %v5679, %v5757
        %v5838 = vadd.f32 %v5623, %v5758
        %v5839 = vadd.f32 %v5680, %v5759
        %v5840 = vadd.f32 %v5681, %v5760
        %v5841 = vadd.f32 %v5682, %v5761
        %v5842 = vadd.f32 %v5683, %v5762
        %v5843 = vadd.f32 %v5623, %v5763
        %v5844 = vpack.c.bf16 %v5764, %v5764
        %v5845 = vpack.c.bf16 %v5765, %v5765
        %v5846 = vpack.c.bf16 %v5766, %v5766
        %v5847 = vpack.c.bf16 %v5767, %v5767
        %v5848 = vpack.c.bf16 %v5768, %v5768
        %v5849 = vpack.c.bf16 %v5769, %v5769
        %v5850 = vpack.c.bf16 %v5770, %v5770
        %v5851 = vpack.c.bf16 %v5771, %v5771
        %v5852 = vpack.c.bf16 %v5772, %v5772
        %v5853 = vpack.c.bf16 %v5773, %v5773
        %v5854 = vpack.c.bf16 %v5774, %v5774
        %v5855 = vpack.c.bf16 %v5775, %v5775
        %v5856 = vpack.c.bf16 %v5776, %v5776
        %v5857 = vpack.c.bf16 %v5777, %v5777
        %v5858 = vpack.c.bf16 %v5778, %v5778
        %v5859 = vpack.c.bf16 %v5779, %v5779
        %v5860 = vpack.c.bf16 %v5780, %v5780
        %v5861 = vpack.c.bf16 %v5781, %v5781
        %v5862 = vpack.c.bf16 %v5782, %v5782
        %v5863 = vpack.c.bf16 %v5783, %v5783
        %v5864 = vpack.c.bf16 %v5784, %v5784
        %v5865 = vpack.c.bf16 %v5785, %v5785
        %v5866 = vpack.c.bf16 %v5786, %v5786
        %v5867 = vpack.c.bf16 %v5787, %v5787
        %v5868 = vpack.c.bf16 %v5788, %v5788
        %v5869 = vpack.c.bf16 %v5789, %v5789
        %v5870 = vpack.c.bf16 %v5790, %v5790
        %v5871 = vpack.c.bf16 %v5791, %v5791
        %v5872 = vpack.c.bf16 %v5792, %v5792
        %v5873 = vpack.c.bf16 %v5793, %v5793
        %v5874 = vpack.c.bf16 %v5794, %v5794
        %v5875 = vpack.c.bf16 %v5795, %v5795
        %v5876 = vpack.c.bf16 %v5796, %v5796
        %v5877 = vpack.c.bf16 %v5797, %v5797
        %v5878 = vpack.c.bf16 %v5798, %v5798
        %v5879 = vpack.c.bf16 %v5799, %v5799
        %v5880 = vpack.c.bf16 %v5800, %v5800
        %v5881 = vpack.c.bf16 %v5801, %v5801
        %v5882 = vpack.c.bf16 %v5802, %v5802
        %v5883 = vpack.c.bf16 %v5803, %v5803
        %v5884 = vpack.c.bf16 %v5804, %v5804
        %v5885 = vpack.c.bf16 %v5805, %v5805
        %v5886 = vpack.c.bf16 %v5806, %v5806
        %v5887 = vpack.c.bf16 %v5807, %v5807
        %v5888 = vpack.c.bf16 %v5808, %v5808
        %v5889 = vpack.c.bf16 %v5809, %v5809
        %v5890 = vpack.c.bf16 %v5810, %v5810
        %v5891 = vpack.c.bf16 %v5811, %v5811
        %v5892 = vpack.c.bf16 %v5812, %v5812
        %v5893 = vpack.c.bf16 %v5813, %v5813
        %v5894 = vpack.c.bf16 %v5814, %v5814
        %v5895 = vpack.c.bf16 %v5815, %v5815
        %v5896 = vpack.c.bf16 %v5816, %v5816
        %v5897 = vpack.c.bf16 %v5817, %v5817
        %v5898 = vpack.c.bf16 %v5818, %v5818
        %v5899 = vpack.c.bf16 %v5819, %v5819
        %v5900 = vpack.c.bf16 %v5820, %v5820
        %v5901 = vpack.c.bf16 %v5821, %v5821
        %v5902 = vpack.c.bf16 %v5822, %v5822
        %v5903 = vpack.c.bf16 %v5823, %v5823
        %v5904 = vpack.c.bf16 %v5824, %v5824
        %v5905 = vpack.c.bf16 %v5825, %v5825
        %v5906 = vpack.c.bf16 %v5826, %v5826
        %v5907 = vpack.c.bf16 %v5827, %v5827
        %v5908 = vpack.c.bf16 %v5828, %v5828
        %v5909 = vpack.c.bf16 %v5829, %v5829
        %v5910 = vpack.c.bf16 %v5830, %v5830
        %v5911 = vpack.c.bf16 %v5831, %v5831
        %v5912 = vpack.c.bf16 %v5832, %v5832
        %v5913 = vpack.c.bf16 %v5833, %v5833
        %v5914 = vpack.c.bf16 %v5834, %v5834
        %v5915 = vpack.c.bf16 %v5835, %v5835
        %v5916 = vpack.c.bf16 %v5836, %v5836
        %v5917 = vpack.c.bf16 %v5837, %v5837
        %v5918 = vpack.c.bf16 %v5838, %v5838
        %v5919 = vpack.c.bf16 %v5839, %v5839
        %v5920 = vpack.c.bf16 %v5840, %v5840
        %v5921 = vpack.c.bf16 %v5841, %v5841
        %v5922 = vpack.c.bf16 %v5842, %v5842
        %v5923 = vpack.c.bf16 %v5843, %v5843
        %v6004 = vunpack.c.l.b16 %v5249
        %v6005 = vunpack.c.l.b16 %v5250
        %v6006 = vunpack.c.l.b16 %v5251
        %v6007 = vunpack.c.l.b16 %v5252
        %v6008 = vunpack.c.l.b16 %v5253
        %v6009 = vunpack.c.l.b16 %v5254
        %v6010 = vunpack.c.l.b16 %v5255
        %v6011 = vunpack.c.l.b16 %v5256
        %v6012 = vunpack.c.l.b16 %v5257
        %v6013 = vunpack.c.l.b16 %v5258
        %v6014 = vunpack.c.l.b16 %v5259
        %v6015 = vunpack.c.l.b16 %v5260
        %v6016 = vunpack.c.l.b16 %v5261
        %v6017 = vunpack.c.l.b16 %v5262
        %v6018 = vunpack.c.l.b16 %v5263
        %v6019 = vunpack.c.l.b16 %v5264
        %v6020 = vunpack.c.l.b16 %v5265
        %v6021 = vunpack.c.l.b16 %v5266
        %v6022 = vunpack.c.l.b16 %v5267
        %v6023 = vunpack.c.l.b16 %v5268
        %v6024 = vunpack.c.l.b16 %v5269
        %v6025 = vunpack.c.l.b16 %v5270
        %v6026 = vunpack.c.l.b16 %v5271
        %v6027 = vunpack.c.l.b16 %v5272
        %v6028 = vunpack.c.l.b16 %v5273
        %v6029 = vunpack.c.l.b16 %v5274
        %v6030 = vunpack.c.l.b16 %v5275
        %v6031 = vunpack.c.l.b16 %v5276
        %v6032 = vunpack.c.l.b16 %v5277
        %v6033 = vunpack.c.l.b16 %v5278
        %v6034 = vunpack.c.l.b16 %v5279
        %v6035 = vunpack.c.l.b16 %v5280
        %v6036 = vunpack.c.l.b16 %v5281
        %v6037 = vunpack.c.l.b16 %v5282
        %v6038 = vunpack.c.l.b16 %v5283
        %v6039 = vunpack.c.l.b16 %v5284
        %v6040 = vunpack.c.l.b16 %v5285
        %v6041 = vunpack.c.l.b16 %v5286
        %v6042 = vunpack.c.l.b16 %v5287
        %v6043 = vunpack.c.l.b16 %v5288
        %v6044 = vunpack.c.l.b16 %v5289
        %v6045 = vunpack.c.l.b16 %v5290
        %v6046 = vunpack.c.l.b16 %v5291
        %v6047 = vunpack.c.l.b16 %v5292
        %v6048 = vunpack.c.l.b16 %v5293
        %v6049 = vunpack.c.l.b16 %v5294
        %v6050 = vunpack.c.l.b16 %v5295
        %v6051 = vunpack.c.l.b16 %v5296
        %v6052 = vunpack.c.l.b16 %v5297
        %v6053 = vunpack.c.l.b16 %v5298
        %v6054 = vunpack.c.l.b16 %v5299
        %v6055 = vunpack.c.l.b16 %v5300
        %v6056 = vunpack.c.l.b16 %v5301
        %v6057 = vunpack.c.l.b16 %v5302
        %v6058 = vunpack.c.l.b16 %v5303
        %v6059 = vunpack.c.l.b16 %v5304
        %v6060 = vunpack.c.l.b16 %v5305
        %v6061 = vunpack.c.l.b16 %v5306
        %v6062 = vunpack.c.l.b16 %v5307
        %v6063 = vunpack.c.l.b16 %v5308
        %v6064 = vunpack.c.l.b16 %v5309
        %v6065 = vunpack.c.l.b16 %v5310
        %v6066 = vunpack.c.l.b16 %v5311
        %v6067 = vunpack.c.l.b16 %v5312
        %v6068 = vunpack.c.l.b16 %v5313
        %v6069 = vunpack.c.l.b16 %v5314
        %v6070 = vunpack.c.l.b16 %v5315
        %v6071 = vunpack.c.l.b16 %v5316
        %v6072 = vunpack.c.l.b16 %v5317
        %v6073 = vunpack.c.l.b16 %v5318
        %v6074 = vunpack.c.l.b16 %v5319
        %v6075 = vunpack.c.l.b16 %v5320
        %v6076 = vunpack.c.l.b16 %v5321
        %v6077 = vunpack.c.l.b16 %v5322
        %v6078 = vunpack.c.l.b16 %v5323
        %v6079 = vunpack.c.l.b16 %v5324
        %v6080 = vunpack.c.l.b16 %v5325
        %v6081 = vunpack.c.l.b16 %v5326
        %v6082 = vunpack.c.l.b16 %v5327
        %v6083 = vunpack.c.l.b16 %v5328
        %v6084 = vpack.c.b16 %v6005, %v6004
        %v6085 = vpack.c.b16 %v6007, %v6006
        %v6086 = vpack.c.b16 %v6008, %v6008
        %v6087 = vpack.c.b16 %v6010, %v6009
        %v6088 = vpack.c.b16 %v6012, %v6011
        %v6089 = vpack.c.b16 %v6013, %v6013
        %v6090 = vpack.c.b16 %v6015, %v6014
        %v6091 = vpack.c.b16 %v6017, %v6016
        %v6092 = vpack.c.b16 %v6018, %v6018
        %v6093 = vpack.c.b16 %v6020, %v6019
        %v6094 = vpack.c.b16 %v6022, %v6021
        %v6095 = vpack.c.b16 %v6023, %v6023
        %v6096 = vpack.c.b16 %v6025, %v6024
        %v6097 = vpack.c.b16 %v6027, %v6026
        %v6098 = vpack.c.b16 %v6028, %v6028
        %v6099 = vpack.c.b16 %v6030, %v6029
        %v6100 = vpack.c.b16 %v6032, %v6031
        %v6101 = vpack.c.b16 %v6033, %v6033
        %v6102 = vpack.c.b16 %v6035, %v6034
        %v6103 = vpack.c.b16 %v6037, %v6036
        %v6104 = vpack.c.b16 %v6038, %v6038
        %v6105 = vpack.c.b16 %v6040, %v6039
        %v6106 = vpack.c.b16 %v6042, %v6041
        %v6107 = vpack.c.b16 %v6043, %v6043
        %v6108 = vpack.c.b16 %v6045, %v6044
        %v6109 = vpack.c.b16 %v6047, %v6046
        %v6110 = vpack.c.b16 %v6048, %v6048
        %v6111 = vpack.c.b16 %v6050, %v6049
        %v6112 = vpack.c.b16 %v6052, %v6051
        %v6113 = vpack.c.b16 %v6053, %v6053
        %v6114 = vpack.c.b16 %v6055, %v6054
        %v6115 = vpack.c.b16 %v6057, %v6056
        %v6116 = vpack.c.b16 %v6058, %v6058
        %v6117 = vpack.c.b16 %v6060, %v6059
        %v6118 = vpack.c.b16 %v6062, %v6061
        %v6119 = vpack.c.b16 %v6063, %v6063
        %v6120 = vpack.c.b16 %v6065, %v6064
        %v6121 = vpack.c.b16 %v6067, %v6066
        %v6122 = vpack.c.b16 %v6068, %v6068
        %v6123 = vpack.c.b16 %v6070, %v6069
        %v6124 = vpack.c.b16 %v6072, %v6071
        %v6125 = vpack.c.b16 %v6073, %v6073
        %v6126 = vpack.c.b16 %v6075, %v6074
        %v6127 = vpack.c.b16 %v6077, %v6076
        %v6128 = vpack.c.b16 %v6078, %v6078
        %v6129 = vpack.c.b16 %v6080, %v6079
        %v6130 = vpack.c.b16 %v6082, %v6081
        %v6131 = vpack.c.b16 %v6083, %v6083
        %v6212 = vunpack.c.l.b16 %v5844
        %v6213 = vunpack.c.l.b16 %v5845
        %v6214 = vunpack.c.l.b16 %v5846
        %v6215 = vunpack.c.l.b16 %v5847
        %v6216 = vunpack.c.l.b16 %v5848
        %v6217 = vunpack.c.l.b16 %v5849
        %v6218 = vunpack.c.l.b16 %v5850
        %v6219 = vunpack.c.l.b16 %v5851
        %v6220 = vunpack.c.l.b16 %v5852
        %v6221 = vunpack.c.l.b16 %v5853
        %v6222 = vunpack.c.l.b16 %v5854
        %v6223 = vunpack.c.l.b16 %v5855
        %v6224 = vunpack.c.l.b16 %v5856
        %v6225 = vunpack.c.l.b16 %v5857
        %v6226 = vunpack.c.l.b16 %v5858
        %v6227 = vunpack.c.l.b16 %v5859
        %v6228 = vunpack.c.l.b16 %v5860
        %v6229 = vunpack.c.l.b16 %v5861
        %v6230 = vunpack.c.l.b16 %v5862
        %v6231 = vunpack.c.l.b16 %v5863
        %v6232 = vunpack.c.l.b16 %v5864
        %v6233 = vunpack.c.l.b16 %v5865
        %v6234 = vunpack.c.l.b16 %v5866
        %v6235 = vunpack.c.l.b16 %v5867
        %v6236 = vunpack.c.l.b16 %v5868
        %v6237 = vunpack.c.l.b16 %v5869
        %v6238 = vunpack.c.l.b16 %v5870
        %v6239 = vunpack.c.l.b16 %v5871
        %v6240 = vunpack.c.l.b16 %v5872
        %v6241 = vunpack.c.l.b16 %v5873
        %v6242 = vunpack.c.l.b16 %v5874
        %v6243 = vunpack.c.l.b16 %v5875
        %v6244 = vunpack.c.l.b16 %v5876
        %v6245 = vunpack.c.l.b16 %v5877
        %v6246 = vunpack.c.l.b16 %v5878
        %v6247 = vunpack.c.l.b16 %v5879
        %v6248 = vunpack.c.l.b16 %v5880
        %v6249 = vunpack.c.l.b16 %v5881
        %v6250 = vunpack.c.l.b16 %v5882
        %v6251 = vunpack.c.l.b16 %v5883
        %v6252 = vunpack.c.l.b16 %v5884
        %v6253 = vunpack.c.l.b16 %v5885
        %v6254 = vunpack.c.l.b16 %v5886
        %v6255 = vunpack.c.l.b16 %v5887
        %v6256 = vunpack.c.l.b16 %v5888
        %v6257 = vunpack.c.l.b16 %v5889
        %v6258 = vunpack.c.l.b16 %v5890
        %v6259 = vunpack.c.l.b16 %v5891
        %v6260 = vunpack.c.l.b16 %v5892
        %v6261 = vunpack.c.l.b16 %v5893
        %v6262 = vunpack.c.l.b16 %v5894
        %v6263 = vunpack.c.l.b16 %v5895
        %v6264 = vunpack.c.l.b16 %v5896
        %v6265 = vunpack.c.l.b16 %v5897
        %v6266 = vunpack.c.l.b16 %v5898
        %v6267 = vunpack.c.l.b16 %v5899
        %v6268 = vunpack.c.l.b16 %v5900
        %v6269 = vunpack.c.l.b16 %v5901
        %v6270 = vunpack.c.l.b16 %v5902
        %v6271 = vunpack.c.l.b16 %v5903
        %v6272 = vunpack.c.l.b16 %v5904
        %v6273 = vunpack.c.l.b16 %v5905
        %v6274 = vunpack.c.l.b16 %v5906
        %v6275 = vunpack.c.l.b16 %v5907
        %v6276 = vunpack.c.l.b16 %v5908
        %v6277 = vunpack.c.l.b16 %v5909
        %v6278 = vunpack.c.l.b16 %v5910
        %v6279 = vunpack.c.l.b16 %v5911
        %v6280 = vunpack.c.l.b16 %v5912
        %v6281 = vunpack.c.l.b16 %v5913
        %v6282 = vunpack.c.l.b16 %v5914
        %v6283 = vunpack.c.l.b16 %v5915
        %v6284 = vunpack.c.l.b16 %v5916
        %v6285 = vunpack.c.l.b16 %v5917
        %v6286 = vunpack.c.l.b16 %v5918
        %v6287 = vunpack.c.l.b16 %v5919
        %v6288 = vunpack.c.l.b16 %v5920
        %v6289 = vunpack.c.l.b16 %v5921
        %v6290 = vunpack.c.l.b16 %v5922
        %v6291 = vunpack.c.l.b16 %v5923
        %v6292 = vpack.c.b16 %v6213, %v6212
        %v6293 = vpack.c.b16 %v6215, %v6214
        %v6294 = vpack.c.b16 %v6216, %v6216
        %v6295 = vpack.c.b16 %v6218, %v6217
        %v6296 = vpack.c.b16 %v6220, %v6219
        %v6297 = vpack.c.b16 %v6221, %v6221
        %v6298 = vpack.c.b16 %v6223, %v6222
        %v6299 = vpack.c.b16 %v6225, %v6224
        %v6300 = vpack.c.b16 %v6226, %v6226
        %v6301 = vpack.c.b16 %v6228, %v6227
        %v6302 = vpack.c.b16 %v6230, %v6229
        %v6303 = vpack.c.b16 %v6231, %v6231
        %v6304 = vpack.c.b16 %v6233, %v6232
        %v6305 = vpack.c.b16 %v6235, %v6234
        %v6306 = vpack.c.b16 %v6236, %v6236
        %v6307 = vpack.c.b16 %v6238, %v6237
        %v6308 = vpack.c.b16 %v6240, %v6239
        %v6309 = vpack.c.b16 %v6241, %v6241
        %v6310 = vpack.c.b16 %v6243, %v6242
        %v6311 = vpack.c.b16 %v6245, %v6244
        %v6312 = vpack.c.b16 %v6246, %v6246
        %v6313 = vpack.c.b16 %v6248, %v6247
        %v6314 = vpack.c.b16 %v6250, %v6249
        %v6315 = vpack.c.b16 %v6251, %v6251
        %v6316 = vpack.c.b16 %v6253, %v6252
        %v6317 = vpack.c.b16 %v6255, %v6254
        %v6318 = vpack.c.b16 %v6256, %v6256
        %v6319 = vpack.c.b16 %v6258, %v6257
        %v6320 = vpack.c.b16 %v6260, %v6259
        %v6321 = vpack.c.b16 %v6261, %v6261
        %v6322 = vpack.c.b16 %v6263, %v6262
        %v6323 = vpack.c.b16 %v6265, %v6264
        %v6324 = vpack.c.b16 %v6266, %v6266
        %v6325 = vpack.c.b16 %v6268, %v6267
        %v6326 = vpack.c.b16 %v6270, %v6269
        %v6327 = vpack.c.b16 %v6271, %v6271
        %v6328 = vpack.c.b16 %v6273, %v6272
        %v6329 = vpack.c.b16 %v6275, %v6274
        %v6330 = vpack.c.b16 %v6276, %v6276
        %v6331 = vpack.c.b16 %v6278, %v6277
        %v6332 = vpack.c.b16 %v6280, %v6279
        %v6333 = vpack.c.b16 %v6281, %v6281
        %v6334 = vpack.c.b16 %v6283, %v6282
        %v6335 = vpack.c.b16 %v6285, %v6284
        %v6336 = vpack.c.b16 %v6286, %v6286
        %v6337 = vpack.c.b16 %v6288, %v6287
        %v6338 = vpack.c.b16 %v6290, %v6289
        %v6339 = vpack.c.b16 %v6291, %v6291
        %6340 = vrot.lane.b32.xlu0 %v6292, 64
        %v6341 = vpop.permute.xlu0 %6340
        %6342 = vrot.lane.b32.xlu0 %v6293, 64
        %v6343 = vpop.permute.xlu0 %6342
        %6344 = vrot.lane.b32.xlu0 %v6294, 64
        %v6345 = vpop.permute.xlu0 %6344
        %6346 = vrot.lane.b32.xlu0 %v6295, 64
        %v6347 = vpop.permute.xlu0 %6346
        %6348 = vrot.lane.b32.xlu0 %v6296, 64
        %v6349 = vpop.permute.xlu0 %6348
        %6350 = vrot.lane.b32.xlu0 %v6297, 64
        %v6351 = vpop.permute.xlu0 %6350
        %6352 = vrot.lane.b32.xlu0 %v6298, 64
        %v6353 = vpop.permute.xlu0 %6352
        %6354 = vrot.lane.b32.xlu0 %v6299, 64
        %v6355 = vpop.permute.xlu0 %6354
        %6356 = vrot.lane.b32.xlu0 %v6300, 64
        %v6357 = vpop.permute.xlu0 %6356
        %6358 = vrot.lane.b32.xlu0 %v6301, 64
        %v6359 = vpop.permute.xlu0 %6358
        %6360 = vrot.lane.b32.xlu0 %v6302, 64
        %v6361 = vpop.permute.xlu0 %6360
        %6362 = vrot.lane.b32.xlu0 %v6303, 64
        %v6363 = vpop.permute.xlu0 %6362
        %6364 = vrot.lane.b32.xlu0 %v6304, 64
        %v6365 = vpop.permute.xlu0 %6364
        %6366 = vrot.lane.b32.xlu0 %v6305, 64
        %v6367 = vpop.permute.xlu0 %6366
        %6368 = vrot.lane.b32.xlu0 %v6306, 64
        %v6369 = vpop.permute.xlu0 %6368
        %6370 = vrot.lane.b32.xlu0 %v6307, 64
        %v6371 = vpop.permute.xlu0 %6370
        %6372 = vrot.lane.b32.xlu0 %v6308, 64
        %v6373 = vpop.permute.xlu0 %6372
        %6374 = vrot.lane.b32.xlu0 %v6309, 64
        %v6375 = vpop.permute.xlu0 %6374
        %6376 = vrot.lane.b32.xlu0 %v6310, 64
        %v6377 = vpop.permute.xlu0 %6376
        %6378 = vrot.lane.b32.xlu0 %v6311, 64
        %v6379 = vpop.permute.xlu0 %6378
        %6380 = vrot.lane.b32.xlu0 %v6312, 64
        %v6381 = vpop.permute.xlu0 %6380
        %6382 = vrot.lane.b32.xlu0 %v6313, 64
        %v6383 = vpop.permute.xlu0 %6382
        %6384 = vrot.lane.b32.xlu0 %v6314, 64
        %v6385 = vpop.permute.xlu0 %6384
        %6386 = vrot.lane.b32.xlu0 %v6315, 64
        %v6387 = vpop.permute.xlu0 %6386
        %6388 = vrot.lane.b32.xlu0 %v6316, 64
        %v6389 = vpop.permute.xlu0 %6388
        %6390 = vrot.lane.b32.xlu0 %v6317, 64
        %v6391 = vpop.permute.xlu0 %6390
        %6392 = vrot.lane.b32.xlu0 %v6318, 64
        %v6393 = vpop.permute.xlu0 %6392
        %6394 = vrot.lane.b32.xlu0 %v6319, 64
        %v6395 = vpop.permute.xlu0 %6394
        %6396 = vrot.lane.b32.xlu0 %v6320, 64
        %v6397 = vpop.permute.xlu0 %6396
        %6398 = vrot.lane.b32.xlu0 %v6321, 64
        %v6399 = vpop.permute.xlu0 %6398
        %6400 = vrot.lane.b32.xlu0 %v6322, 64
        %v6401 = vpop.permute.xlu0 %6400
        %6402 = vrot.lane.b32.xlu0 %v6323, 64
        %v6403 = vpop.permute.xlu0 %6402
        %6404 = vrot.lane.b32.xlu0 %v6324, 64
        %v6405 = vpop.permute.xlu0 %6404
        %6406 = vrot.lane.b32.xlu0 %v6325, 64
        %v6407 = vpop.permute.xlu0 %6406
        %6408 = vrot.lane.b32.xlu0 %v6326, 64
        %v6409 = vpop.permute.xlu0 %6408
        %6410 = vrot.lane.b32.xlu0 %v6327, 64
        %v6411 = vpop.permute.xlu0 %6410
        %6412 = vrot.lane.b32.xlu0 %v6328, 64
        %v6413 = vpop.permute.xlu0 %6412
        %6414 = vrot.lane.b32.xlu0 %v6329, 64
        %v6415 = vpop.permute.xlu0 %6414
        %6416 = vrot.lane.b32.xlu0 %v6330, 64
        %v6417 = vpop.permute.xlu0 %6416
        %6418 = vrot.lane.b32.xlu0 %v6331, 64
        %v6419 = vpop.permute.xlu0 %6418
        %6420 = vrot.lane.b32.xlu0 %v6332, 64
        %v6421 = vpop.permute.xlu0 %6420
        %6422 = vrot.lane.b32.xlu0 %v6333, 64
        %v6423 = vpop.permute.xlu0 %6422
        %6424 = vrot.lane.b32.xlu0 %v6334, 64
        %v6425 = vpop.permute.xlu0 %6424
        %6426 = vrot.lane.b32.xlu0 %v6335, 64
        %v6427 = vpop.permute.xlu0 %6426
        %6428 = vrot.lane.b32.xlu0 %v6336, 64
        %v6429 = vpop.permute.xlu0 %6428
        %6430 = vrot.lane.b32.xlu0 %v6337, 64
        %v6431 = vpop.permute.xlu0 %6430
        %6432 = vrot.lane.b32.xlu0 %v6338, 64
        %v6433 = vpop.permute.xlu0 %6432
        %6434 = vrot.lane.b32.xlu0 %v6339, 64
        %v6435 = vpop.permute.xlu0 %6434
        %vm6436 = vcmask 523264
        %v6439 = vsel %vm6436, %v6084, %v6341
        %v6442 = vsel %vm6436, %v6085, %v6343
        %v6445 = vsel %vm6436, %v6086, %v6345
        %v6448 = vsel %vm6436, %v6087, %v6347
        %v6451 = vsel %vm6436, %v6088, %v6349
        %v6454 = vsel %vm6436, %v6089, %v6351
        %v6457 = vsel %vm6436, %v6090, %v6353
        %v6460 = vsel %vm6436, %v6091, %v6355
        %v6463 = vsel %vm6436, %v6092, %v6357
        %v6466 = vsel %vm6436, %v6093, %v6359
        %v6469 = vsel %vm6436, %v6094, %v6361
        %v6472 = vsel %vm6436, %v6095, %v6363
        %v6475 = vsel %vm6436, %v6096, %v6365
        %v6478 = vsel %vm6436, %v6097, %v6367
        %v6481 = vsel %vm6436, %v6098, %v6369
        %v6484 = vsel %vm6436, %v6099, %v6371
        %v6487 = vsel %vm6436, %v6100, %v6373
        %v6490 = vsel %vm6436, %v6101, %v6375
        %v6493 = vsel %vm6436, %v6102, %v6377
        %v6496 = vsel %vm6436, %v6103, %v6379
        %v6499 = vsel %vm6436, %v6104, %v6381
        %v6502 = vsel %vm6436, %v6105, %v6383
        %v6505 = vsel %vm6436, %v6106, %v6385
        %v6508 = vsel %vm6436, %v6107, %v6387
        %v6511 = vsel %vm6436, %v6108, %v6389
        %v6514 = vsel %vm6436, %v6109, %v6391
        %v6517 = vsel %vm6436, %v6110, %v6393
        %v6520 = vsel %vm6436, %v6111, %v6395
        %v6523 = vsel %vm6436, %v6112, %v6397
        %v6526 = vsel %vm6436, %v6113, %v6399
        %v6529 = vsel %vm6436, %v6114, %v6401
        %v6532 = vsel %vm6436, %v6115, %v6403
        %v6535 = vsel %vm6436, %v6116, %v6405
        %v6538 = vsel %vm6436, %v6117, %v6407
        %v6541 = vsel %vm6436, %v6118, %v6409
        %v6544 = vsel %vm6436, %v6119, %v6411
        %v6547 = vsel %vm6436, %v6120, %v6413
        %v6550 = vsel %vm6436, %v6121, %v6415
        %v6553 = vsel %vm6436, %v6122, %v6417
        %v6556 = vsel %vm6436, %v6123, %v6419
        %v6559 = vsel %vm6436, %v6124, %v6421
        %v6562 = vsel %vm6436, %v6125, %v6423
        %v6565 = vsel %vm6436, %v6126, %v6425
        %v6568 = vsel %vm6436, %v6127, %v6427
        %v6571 = vsel %vm6436, %v6128, %v6429
        %v6574 = vsel %vm6436, %v6129, %v6431
        %v6577 = vsel %vm6436, %v6130, %v6433
        %v6580 = vsel %vm6436, %v6131, %v6435
        %v6629 = vunpack.c.l.b16 %v6439
        %v6630 = vunpack.c.h.b16 %v6439
        %v6631 = vunpack.c.l.b16 %v6442
        %v6632 = vunpack.c.h.b16 %v6442
        %v6633 = vunpack.c.l.b16 %v6445
        %v6634 = vunpack.c.l.b16 %v6448
        %v6635 = vunpack.c.h.b16 %v6448
        %v6636 = vunpack.c.l.b16 %v6451
        %v6637 = vunpack.c.h.b16 %v6451
        %v6638 = vunpack.c.l.b16 %v6454
        %v6639 = vunpack.c.l.b16 %v6457
        %v6640 = vunpack.c.h.b16 %v6457
        %v6641 = vunpack.c.l.b16 %v6460
        %v6642 = vunpack.c.h.b16 %v6460
        %v6643 = vunpack.c.l.b16 %v6463
        %v6644 = vunpack.c.l.b16 %v6466
        %v6645 = vunpack.c.h.b16 %v6466
        %v6646 = vunpack.c.l.b16 %v6469
        %v6647 = vunpack.c.h.b16 %v6469
        %v6648 = vunpack.c.l.b16 %v6472
        %v6649 = vunpack.c.l.b16 %v6475
        %v6650 = vunpack.c.h.b16 %v6475
        %v6651 = vunpack.c.l.b16 %v6478
        %v6652 = vunpack.c.h.b16 %v6478
        %v6653 = vunpack.c.l.b16 %v6481
        %v6654 = vunpack.c.l.b16 %v6484
        %v6655 = vunpack.c.h.b16 %v6484
        %v6656 = vunpack.c.l.b16 %v6487
        %v6657 = vunpack.c.h.b16 %v6487
        %v6658 = vunpack.c.l.b16 %v6490
        %v6659 = vunpack.c.l.b16 %v6493
        %v6660 = vunpack.c.h.b16 %v6493
        %v6661 = vunpack.c.l.b16 %v6496
        %v6662 = vunpack.c.h.b16 %v6496
        %v6663 = vunpack.c.l.b16 %v6499
        %v6664 = vunpack.c.l.b16 %v6502
        %v6665 = vunpack.c.h.b16 %v6502
        %v6666 = vunpack.c.l.b16 %v6505
        %v6667 = vunpack.c.h.b16 %v6505
        %v6668 = vunpack.c.l.b16 %v6508
        %v6669 = vunpack.c.l.b16 %v6511
        %v6670 = vunpack.c.h.b16 %v6511
        %v6671 = vunpack.c.l.b16 %v6514
        %v6672 = vunpack.c.h.b16 %v6514
        %v6673 = vunpack.c.l.b16 %v6517
        %v6674 = vunpack.c.l.b16 %v6520
        %v6675 = vunpack.c.h.b16 %v6520
        %v6676 = vunpack.c.l.b16 %v6523
        %v6677 = vunpack.c.h.b16 %v6523
        %v6678 = vunpack.c.l.b16 %v6526
        %v6679 = vunpack.c.l.b16 %v6529
        %v6680 = vunpack.c.h.b16 %v6529
        %v6681 = vunpack.c.l.b16 %v6532
        %v6682 = vunpack.c.h.b16 %v6532
        %v6683 = vunpack.c.l.b16 %v6535
        %v6684 = vunpack.c.l.b16 %v6538
        %v6685 = vunpack.c.h.b16 %v6538
        %v6686 = vunpack.c.l.b16 %v6541
        %v6687 = vunpack.c.h.b16 %v6541
        %v6688 = vunpack.c.l.b16 %v6544
        %v6689 = vunpack.c.l.b16 %v6547
        %v6690 = vunpack.c.h.b16 %v6547
        %v6691 = vunpack.c.l.b16 %v6550
        %v6692 = vunpack.c.h.b16 %v6550
        %v6693 = vunpack.c.l.b16 %v6553
        %v6694 = vunpack.c.l.b16 %v6556
        %v6695 = vunpack.c.h.b16 %v6556
        %v6696 = vunpack.c.l.b16 %v6559
        %v6697 = vunpack.c.h.b16 %v6559
        %v6698 = vunpack.c.l.b16 %v6562
        %v6699 = vunpack.c.l.b16 %v6565
        %v6700 = vunpack.c.h.b16 %v6565
        %v6701 = vunpack.c.l.b16 %v6568
        %v6702 = vunpack.c.h.b16 %v6568
        %v6703 = vunpack.c.l.b16 %v6571
        %v6704 = vunpack.c.l.b16 %v6574
        %v6705 = vunpack.c.h.b16 %v6574
        %v6706 = vunpack.c.l.b16 %v6577
        %v6707 = vunpack.c.h.b16 %v6577
        %v6708 = vunpack.c.l.b16 %v6580
        %v6709 = vpack.c.b16 %v6629, %v6629
        %v6710 = vpack.c.b16 %v6630, %v6630
        %v6711 = vpack.c.b16 %v6631, %v6631
        %v6712 = vpack.c.b16 %v6632, %v6632
        %v6713 = vpack.c.b16 %v6633, %v6633
        %v6714 = vpack.c.b16 %v6634, %v6634
        %v6715 = vpack.c.b16 %v6635, %v6635
        %v6716 = vpack.c.b16 %v6636, %v6636
        %v6717 = vpack.c.b16 %v6637, %v6637
        %v6718 = vpack.c.b16 %v6638, %v6638
        %v6719 = vpack.c.b16 %v6639, %v6639
        %v6720 = vpack.c.b16 %v6640, %v6640
        %v6721 = vpack.c.b16 %v6641, %v6641
        %v6722 = vpack.c.b16 %v6642, %v6642
        %v6723 = vpack.c.b16 %v6643, %v6643
        %v6724 = vpack.c.b16 %v6644, %v6644
        %v6725 = vpack.c.b16 %v6645, %v6645
        %v6726 = vpack.c.b16 %v6646, %v6646
        %v6727 = vpack.c.b16 %v6647, %v6647
        %v6728 = vpack.c.b16 %v6648, %v6648
        %v6729 = vpack.c.b16 %v6649, %v6649
        %v6730 = vpack.c.b16 %v6650, %v6650
        %v6731 = vpack.c.b16 %v6651, %v6651
        %v6732 = vpack.c.b16 %v6652, %v6652
        %v6733 = vpack.c.b16 %v6653, %v6653
        %v6734 = vpack.c.b16 %v6654, %v6654
        %v6735 = vpack.c.b16 %v6655, %v6655
        %v6736 = vpack.c.b16 %v6656, %v6656
        %v6737 = vpack.c.b16 %v6657, %v6657
        %v6738 = vpack.c.b16 %v6658, %v6658
        %v6739 = vpack.c.b16 %v6659, %v6659
        %v6740 = vpack.c.b16 %v6660, %v6660
        %v6741 = vpack.c.b16 %v6661, %v6661
        %v6742 = vpack.c.b16 %v6662, %v6662
        %v6743 = vpack.c.b16 %v6663, %v6663
        %v6744 = vpack.c.b16 %v6664, %v6664
        %v6745 = vpack.c.b16 %v6665, %v6665
        %v6746 = vpack.c.b16 %v6666, %v6666
        %v6747 = vpack.c.b16 %v6667, %v6667
        %v6748 = vpack.c.b16 %v6668, %v6668
        %v6749 = vpack.c.b16 %v6669, %v6669
        %v6750 = vpack.c.b16 %v6670, %v6670
        %v6751 = vpack.c.b16 %v6671, %v6671
        %v6752 = vpack.c.b16 %v6672, %v6672
        %v6753 = vpack.c.b16 %v6673, %v6673
        %v6754 = vpack.c.b16 %v6674, %v6674
        %v6755 = vpack.c.b16 %v6675, %v6675
        %v6756 = vpack.c.b16 %v6676, %v6676
        %v6757 = vpack.c.b16 %v6677, %v6677
        %v6758 = vpack.c.b16 %v6678, %v6678
        %v6759 = vpack.c.b16 %v6679, %v6679
        %v6760 = vpack.c.b16 %v6680, %v6680
        %v6761 = vpack.c.b16 %v6681, %v6681
        %v6762 = vpack.c.b16 %v6682, %v6682
        %v6763 = vpack.c.b16 %v6683, %v6683
        %v6764 = vpack.c.b16 %v6684, %v6684
        %v6765 = vpack.c.b16 %v6685, %v6685
        %v6766 = vpack.c.b16 %v6686, %v6686
        %v6767 = vpack.c.b16 %v6687, %v6687
        %v6768 = vpack.c.b16 %v6688, %v6688
        %v6769 = vpack.c.b16 %v6689, %v6689
        %v6770 = vpack.c.b16 %v6690, %v6690
        %v6771 = vpack.c.b16 %v6691, %v6691
        %v6772 = vpack.c.b16 %v6692, %v6692
        %v6773 = vpack.c.b16 %v6693, %v6693
        %v6774 = vpack.c.b16 %v6694, %v6694
        %v6775 = vpack.c.b16 %v6695, %v6695
        %v6776 = vpack.c.b16 %v6696, %v6696
        %v6777 = vpack.c.b16 %v6697, %v6697
        %v6778 = vpack.c.b16 %v6698, %v6698
        %v6779 = vpack.c.b16 %v6699, %v6699
        %v6780 = vpack.c.b16 %v6700, %v6700
        %v6781 = vpack.c.b16 %v6701, %v6701
        %v6782 = vpack.c.b16 %v6702, %v6702
        %v6783 = vpack.c.b16 %v6703, %v6703
        %v6784 = vpack.c.b16 %v6704, %v6704
        %v6785 = vpack.c.b16 %v6705, %v6705
        %v6786 = vpack.c.b16 %v6706, %v6706
        %v6787 = vpack.c.b16 %v6707, %v6707
        %v6788 = vpack.c.b16 %v6708, %v6708
        %6869 = vst [vmem:[%s397] sm:$0xf] %v6709
        %6870 = vst [vmem:[%s397 + $0x4] sm:$0xf] %v6710
        %6871 = vst [vmem:[%s397 + $0x8] sm:$0xf] %v6711
        %6872 = vst [vmem:[%s397 + $0xc] sm:$0xf] %v6712
        %v6873 = vld [vmem:[%s397 + $0x10] sm:$0x1]
        %v6874 = vsel %vm1142, %v6713, %v6873
        %6875 = vst [vmem:[%s397 + $0x10] sm:$0x1] %v6874
        %6876 = vst [vmem:[%s397 + $0x14] sm:$0xf] %v6714
        %6877 = vst [vmem:[%s397 + $0x18] sm:$0xf] %v6715
        %6878 = vst [vmem:[%s397 + $0x1c] sm:$0xf] %v6716
        %6879 = vst [vmem:[%s397 + $0x20] sm:$0xf] %v6717
        %v6880 = vld [vmem:[%s397 + $0x24] sm:$0x1]
        %v6881 = vsel %vm1142, %v6718, %v6880
        %6882 = vst [vmem:[%s397 + $0x24] sm:$0x1] %v6881
        %6883 = vst [vmem:[%s397 + $0x28] sm:$0xf] %v6719
        %6884 = vst [vmem:[%s397 + $0x2c] sm:$0xf] %v6720
        %6885 = vst [vmem:[%s397 + $0x30] sm:$0xf] %v6721
        %6886 = vst [vmem:[%s397 + $0x34] sm:$0xf] %v6722
        %v6887 = vld [vmem:[%s397 + $0x38] sm:$0x1]
        %v6888 = vsel %vm1142, %v6723, %v6887
        %6889 = vst [vmem:[%s397 + $0x38] sm:$0x1] %v6888
        %6890 = vst [vmem:[%s397 + $0x3c] sm:$0xf] %v6724
        %6891 = vst [vmem:[%s397 + $0x40] sm:$0xf] %v6725
        %6892 = vst [vmem:[%s397 + $0x44] sm:$0xf] %v6726
        %6893 = vst [vmem:[%s397 + $0x48] sm:$0xf] %v6727
        %v6894 = vld [vmem:[%s397 + $0x4c] sm:$0x1]
        %v6895 = vsel %vm1142, %v6728, %v6894
        %6896 = vst [vmem:[%s397 + $0x4c] sm:$0x1] %v6895
        %6897 = vst [vmem:[%s397 + $0x50] sm:$0xf] %v6729
        %6898 = vst [vmem:[%s397 + $0x54] sm:$0xf] %v6730
        %6899 = vst [vmem:[%s397 + $0x58] sm:$0xf] %v6731
        %6900 = vst [vmem:[%s397 + $0x5c] sm:$0xf] %v6732
        %v6901 = vld [vmem:[%s397 + $0x60] sm:$0x1]
        %v6902 = vsel %vm1142, %v6733, %v6901
        %6903 = vst [vmem:[%s397 + $0x60] sm:$0x1] %v6902
        %6904 = vst [vmem:[%s397 + $0x64] sm:$0xf] %v6734
        %6905 = vst [vmem:[%s397 + $0x68] sm:$0xf] %v6735
        %6906 = vst [vmem:[%s397 + $0x6c] sm:$0xf] %v6736
        %6907 = vst [vmem:[%s397 + $0x70] sm:$0xf] %v6737
        %v6908 = vld [vmem:[%s397 + $0x74] sm:$0x1]
        %v6909 = vsel %vm1142, %v6738, %v6908
        %6910 = vst [vmem:[%s397 + $0x74] sm:$0x1] %v6909
        %6911 = vst [vmem:[%s397 + $0x78] sm:$0xf] %v6739
        %6912 = vst [vmem:[%s397 + $0x7c] sm:$0xf] %v6740
        %6913 = vst [vmem:[%s397 + $0x80] sm:$0xf] %v6741
        %6914 = vst [vmem:[%s397 + $0x84] sm:$0xf] %v6742
        %v6915 = vld [vmem:[%s397 + $0x88] sm:$0x1]
        %v6916 = vsel %vm1142, %v6743, %v6915
        %6917 = vst [vmem:[%s397 + $0x88] sm:$0x1] %v6916
        %6918 = vst [vmem:[%s397 + $0x8c] sm:$0xf] %v6744
        %6919 = vst [vmem:[%s397 + $0x90] sm:$0xf] %v6745
        %6920 = vst [vmem:[%s397 + $0x94] sm:$0xf] %v6746
        %6921 = vst [vmem:[%s397 + $0x98] sm:$0xf] %v6747
        %v6922 = vld [vmem:[%s397 + $0x9c] sm:$0x1]
        %v6923 = vsel %vm1142, %v6748, %v6922
        %6924 = vst [vmem:[%s397 + $0x9c] sm:$0x1] %v6923
        %6925 = vst [vmem:[%s397 + $0xa0] sm:$0xf] %v6749
        %6926 = vst [vmem:[%s397 + $0xa4] sm:$0xf] %v6750
        %6927 = vst [vmem:[%s397 + $0xa8] sm:$0xf] %v6751
        %6928 = vst [vmem:[%s397 + $0xac] sm:$0xf] %v6752
        %v6929 = vld [vmem:[%s397 + $0xb0] sm:$0x1]
        %v6930 = vsel %vm1142, %v6753, %v6929
        %6931 = vst [vmem:[%s397 + $0xb0] sm:$0x1] %v6930
        %6932 = vst [vmem:[%s397 + $0xb4] sm:$0xf] %v6754
        %6933 = vst [vmem:[%s397 + $0xb8] sm:$0xf] %v6755
        %6934 = vst [vmem:[%s397 + $0xbc] sm:$0xf] %v6756
        %6935 = vst [vmem:[%s397 + $0xc0] sm:$0xf] %v6757
        %v6936 = vld [vmem:[%s397 + $0xc4] sm:$0x1]
        %v6937 = vsel %vm1142, %v6758, %v6936
        %6938 = vst [vmem:[%s397 + $0xc4] sm:$0x1] %v6937
        %6939 = vst [vmem:[%s397 + $0xc8] sm:$0xf] %v6759
        %6940 = vst [vmem:[%s397 + $0xcc] sm:$0xf] %v6760
        %6941 = vst [vmem:[%s397 + $0xd0] sm:$0xf] %v6761
        %6942 = vst [vmem:[%s397 + $0xd4] sm:$0xf] %v6762
        %v6943 = vld [vmem:[%s397 + $0xd8] sm:$0x1]
        %v6944 = vsel %vm1142, %v6763, %v6943
        %6945 = vst [vmem:[%s397 + $0xd8] sm:$0x1] %v6944
        %6946 = vst [vmem:[%s397 + $0xdc] sm:$0xf] %v6764
        %6947 = vst [vmem:[%s397 + $0xe0] sm:$0xf] %v6765
        %6948 = vst [vmem:[%s397 + $0xe4] sm:$0xf] %v6766
        %6949 = vst [vmem:[%s397 + $0xe8] sm:$0xf] %v6767
        %v6950 = vld [vmem:[%s397 + $0xec] sm:$0x1]
        %v6951 = vsel %vm1142, %v6768, %v6950
        %6952 = vst [vmem:[%s397 + $0xec] sm:$0x1] %v6951
        %6953 = vst [vmem:[%s397 + $0xf0] sm:$0xf] %v6769
        %6954 = vst [vmem:[%s397 + $0xf4] sm:$0xf] %v6770
        %6955 = vst [vmem:[%s397 + $0xf8] sm:$0xf] %v6771
        %6956 = vst [vmem:[%s397 + $0xfc] sm:$0xf] %v6772
        %v6957 = vld [vmem:[%s397 + $0x100] sm:$0x1]
        %v6958 = vsel %vm1142, %v6773, %v6957
        %6959 = vst [vmem:[%s397 + $0x100] sm:$0x1] %v6958
        %6960 = vst [vmem:[%s397 + $0x104] sm:$0xf] %v6774
        %6961 = vst [vmem:[%s397 + $0x108] sm:$0xf] %v6775
        %6962 = vst [vmem:[%s397 + $0x10c] sm:$0xf] %v6776
        %6963 = vst [vmem:[%s397 + $0x110] sm:$0xf] %v6777
        %v6964 = vld [vmem:[%s397 + $0x114] sm:$0x1]
        %v6965 = vsel %vm1142, %v6778, %v6964
        %6966 = vst [vmem:[%s397 + $0x114] sm:$0x1] %v6965
        %6967 = vst [vmem:[%s397 + $0x118] sm:$0xf] %v6779
        %6968 = vst [vmem:[%s397 + $0x11c] sm:$0xf] %v6780
        %6969 = vst [vmem:[%s397 + $0x120] sm:$0xf] %v6781
        %6970 = vst [vmem:[%s397 + $0x124] sm:$0xf] %v6782
        %v6971 = vld [vmem:[%s397 + $0x128] sm:$0x1]
        %v6972 = vsel %vm1142, %v6783, %v6971
        %6973 = vst [vmem:[%s397 + $0x128] sm:$0x1] %v6972
        %6974 = vst [vmem:[%s397 + $0x12c] sm:$0xf] %v6784
        %6975 = vst [vmem:[%s397 + $0x130] sm:$0xf] %v6785
        %6976 = vst [vmem:[%s397 + $0x134] sm:$0xf] %v6786
        %6977 = vst [vmem:[%s397 + $0x138] sm:$0xf] %v6787
        %v6978 = vld [vmem:[%s397 + $0x13c] sm:$0x1]
        %v6979 = vsel %vm1142, %v6788, %v6978
        %6980 = vst [vmem:[%s397 + $0x13c] sm:$0x1] %v6979
        %s6981 = smul.u32 16, %s27
        %p6982 = scmp.lt.s32.totalorder %s26, 1
        %s6983 = scalar_select %p6982, %s26, 1
        %p6984 = scmp.lt.s32.totalorder %s6981, 31
        %s6985 = scalar_select %p6984, %s6981, 31
        %s6986 = smul.addr %s6985, 5
        %s6987 = smul.addr %s6983, 160
        %s6988 = sadd.s32 %s6986, %s6987
        %s6989 = smul.addr %s6988, 4
        %s6990 = scalar_lea.vmem %s5, %s6989
        // Predicated region
        $region53: #{tpu_custom_call.1} parent=39 // pred_check
          %p6991 = pneg %p196
        $region54: #{tpu_custom_call.1} parent=39 // pred_check_branch
          %6993 = sbr.rel (%p6991) target = $region56
        $region55: #{tpu_custom_call.1} parent=39 // pred_region
          %s6994 = smul.u32 16, %s27
        $region56: #{tpu_custom_call.1} parent=39 // pred_fallthru
          _
      $region40: #{tpu_custom_call.1} parent=5 // pred_fallthru
        _
      %p6995 = scmp.le.s32.totalorder 2, %s17
      // Predicated region
      $region57: #{tpu_custom_call.1} parent=5 // pred_check
        %p6996 = pneg %p6995
      $region58: #{tpu_custom_call.1} parent=5 // pred_check_branch
        %6998 = sbr.rel (%p6996) target = $region60
      $region59: #{tpu_custom_call.1} parent=5 // pred_region
        %s6999 = ssub.s32 %s17, 2
        // Predicated region
        $region61: #{tpu_custom_call.1} parent=59 // pred_check
          %p7000 = pneg %p202
        $region62: #{tpu_custom_call.1} parent=59 // pred_check_branch
          %7002 = sbr.rel (%p7000) target = $region64
        $region63: #{tpu_custom_call.1} parent=59 // pred_region
          %s7003 = smul.u32 16, %s29
          %p7004 = scmp.lt.s32.totalorder %s28, 1
          %s7005 = scalar_select %p7004, %s28, 1
          %p7006 = scmp.lt.s32.totalorder %s7003, 31
          %s7007 = scalar_select %p7006, %s7003, 31
          %s7008 = smul.addr %s7007, 5
          %s7009 = smul.addr %s7005, 160
          %s7010 = sadd.s32 %s7008, %s7009
          %s7011 = smul.addr %s7010, 4
          %s7012 = scalar_lea.vmem %s5, %s7011
        $region64: #{tpu_custom_call.1} parent=59 // pred_fallthru
          _
      $region60: #{tpu_custom_call.1} parent=5 // pred_fallthru
        _
    $region6: #{tpu_custom_call.1} parent=1 // loop_footer
      %s21 = sadd.s32 1, %s17
    $region7: #{tpu_custom_call.1} parent=1 // loop_footer_branch
      %16 = sbr.rel target = $region3
    $region8: #{tpu_custom_call.1} parent=1 // loop_exit
      _
    %7013 = vsyncpa [#allocation3], 1
    %s7014 = scalar_lea.sflag [#allocation3], 1
    %7015 = vsyncpa %s7014, 1
    %7016 = vsyncpa [#allocation5], 1
    %s7017 = scalar_lea.sflag [#allocation5], 1
    %7018 = vsyncpa %s7017, 1

</llo_original>
